<compile_context>
chip_gen: v7x
topology: tpu7x:2x2x1
jax: 0.10.0
libtpu: 0.0.40
codegen_flags: <defaults>
</compile_context>

<pallas_src>
import jax
import jax.numpy as jnp
from jax.experimental import pallas as pl
from jax.experimental.pallas import tpu as pltpu


def decoder_kernel(x_ref, w1_ref, b1_ref, w2t_ref, b2_ref, w3_ref, b3_ref, o_ref):
    # x_ref:   (1, TB)    batch on lanes
    # w1_ref:  (128, 1)   layer-1 weight as a column (features on sublanes)
    # b1_ref:  (128, 1)
    # w2t_ref: (32, 128)  layer-2 weight transposed (out_features x in_features)
    # b2_ref:  (32, 1)
    # w3_ref:  (32, 1)
    # b3_ref:  (1, 1)
    # o_ref:   (1, TB)
    x = x_ref[...]                                       # (1, TB)

    # Layer 1: Linear(1, 128) + ReLU  -> pure VPU broadcast multiply (no K=1 matmul)
    h1 = x * w1_ref[...] + b1_ref[...]                   # (128, TB)
    h1 = jnp.maximum(h1, 0.0)

    # Layer 2: Linear(128, 32) + ReLU -> single MXU matmul, batch on output lanes
    h2 = jnp.dot(w2t_ref[...], h1,
                 preferred_element_type=jnp.float32) + b2_ref[...]   # (32, TB)
    h2 = jnp.maximum(h2, 0.0)

    # Layer 3: Linear(32, 1) -> VPU multiply + sublane reduce (no N=1 matmul)
    out = jnp.sum(h2 * w3_ref[...], axis=0, keepdims=True) + b3_ref[...]  # (1, TB)
    o_ref[...] = out.astype(o_ref.dtype)


def decoder_forward(x, params, *, tb=4096):
    """x: (N, 1) float32. Returns (N, 1) float32.

    tb = batch-lane tile (multiple of 128). 4096 keeps the per-step h1
    intermediate at 2 MiB (safe on v5e/v6e/v7x) while amortizing per-step cost.
    """
    w1, b1, w2, b2, w3, b3 = params  # (1,128),(1,128),(128,32),(1,32),(32,1),(1,1)
    N = x.shape[0]

    # lane-dense batch layout: flatten batch onto the lane axis, pad to tile
    N_pad = ((N + tb - 1) // tb) * tb
    xr = jnp.pad(x.reshape(-1), (0, N_pad - N)).reshape(1, N_pad)

    # kernel weight layout: features on sublanes, batch on lanes
    w1c = w1.reshape(128, 1)
    b1c = b1.reshape(128, 1)
    w2t = w2.T                      # (32, 128)
    b2c = b2.reshape(32, 1)
    w3c = w3.reshape(32, 1)
    b3c = b3.reshape(1, 1)

    grid = (N_pad // tb,)

    out = pl.pallas_call(
        decoder_kernel,
        out_shape=jax.ShapeDtypeStruct((1, N_pad), jnp.float32),
        grid_spec=pltpu.PrefetchScalarGridSpec(
            num_scalar_prefetch=0,
            grid=grid,
            in_specs=[
                pl.BlockSpec((1, tb), lambda i: (0, i)),     # x batch tile (lanes)
                pl.BlockSpec((128, 1), lambda i: (0, 0)),    # w1 column
                pl.BlockSpec((128, 1), lambda i: (0, 0)),    # b1 column
                pl.BlockSpec((32, 128), lambda i: (0, 0)),   # w2^T
                pl.BlockSpec((32, 1), lambda i: (0, 0)),     # b2 column
                pl.BlockSpec((32, 1), lambda i: (0, 0)),     # w3 column
                pl.BlockSpec((1, 1), lambda i: (0, 0)),      # b3
            ],
            out_specs=pl.BlockSpec((1, tb), lambda i: (0, i)),
        ),
        compiler_params=pltpu.CompilerParams(
            dimension_semantics=("parallel",)),
    )(xr, w1c, b1c, w2t, b2c, w3c, b3c)

    return out.reshape(-1)[:N].reshape(N, 1)


def init_params(key):
    """Deterministic init mirroring PyTorch nn.Linear default
    (U(-1/sqrt(fan_in), +1/sqrt(fan_in))). Weights stored as (in, out)."""
    dims = [(1, 128), (128, 32), (32, 1)]
    params = []
    for (fan_in, fan_out) in dims:
        key, kw, kb = jax.random.split(key, 3)
        bound = 1.0 / jnp.sqrt(jnp.float32(fan_in))
        w = jax.random.uniform(kw, (fan_in, fan_out), jnp.float32, -bound, bound)
        b = jax.random.uniform(kb, (1, fan_out), jnp.float32, -bound, bound)
        params.extend([w, b])
    return tuple(params)


def decoder_ref(x, params):
    w1, b1, w2, b2, w3, b3 = params
    h1 = jnp.maximum(x @ w1 + b1, 0.0)
    h2 = jnp.maximum(h1 @ w2 + b2, 0.0)
    return h2 @ w3 + b3


if __name__ == "__main__":
    key = jax.random.PRNGKey(0)
    kp, kx1, kx2 = jax.random.split(key, 3)
    params = init_params(kp)

    # small example input consistent with Linear(1, ...): batch of 8 scalars
    x = jax.random.normal(kx1, (8, 1), jnp.float32)
    out = jax.block_until_ready(decoder_forward(x, params))
    ref = decoder_ref(x, params)
    assert out.shape == (8, 1)
    assert jnp.allclose(out, ref, atol=1e-5, rtol=1e-5), "mismatch vs pure-JAX reference"

    # a second, non-aligned batch size to exercise the pad/slice path
    x2 = jax.random.normal(kx2, (300, 1), jnp.float32)
    out2 = jax.block_until_ready(decoder_forward(x2, params))
    ref2 = decoder_ref(x2, params)
    assert out2.shape == (300, 1)
    assert jnp.allclose(out2, ref2, atol=1e-5, rtol=1e-5), "mismatch vs pure-JAX reference"

    print("KERNEL_OK")
</pallas_src>

<mosaic_0001>
module attributes {stable_mosaic.version = 11 : i64} {
  func.func @decoder_kernel(%arg0: i32, %arg1: memref<1x4096xf32, #tpu.memory_space<vmem>>, %arg2: memref<128x1xf32, #tpu.memory_space<vmem>>, %arg3: memref<128x1xf32, #tpu.memory_space<vmem>>, %arg4: memref<32x128xf32, #tpu.memory_space<vmem>>, %arg5: memref<32x1xf32, #tpu.memory_space<vmem>>, %arg6: memref<32x1xf32, #tpu.memory_space<vmem>>, %arg7: memref<1x1xf32, #tpu.memory_space<vmem>>, %arg8: memref<1x4096xf32, #tpu.memory_space<vmem>>) attributes {dimension_semantics = [#tpu.dimension_semantics<parallel>], iteration_bounds = array<i64: 1>, scalar_prefetch = 0 : i64, scratch_operands = 0 : i64, tpu.core_type = #tpu.core_type<tc>, window_params = [{transform_indices = @transform_0, window_bounds = array<i64: 1, 4096>}, {pipeline_mode = #tpu.pipeline_mode<synchronous>, transform_indices = @transform_1, window_bounds = array<i64: 128, 1>}, {pipeline_mode = #tpu.pipeline_mode<synchronous>, transform_indices = @transform_2, window_bounds = array<i64: 128, 1>}, {pipeline_mode = #tpu.pipeline_mode<synchronous>, transform_indices = @transform_3, window_bounds = array<i64: 32, 128>}, {pipeline_mode = #tpu.pipeline_mode<synchronous>, transform_indices = @transform_4, window_bounds = array<i64: 32, 1>}, {pipeline_mode = #tpu.pipeline_mode<synchronous>, transform_indices = @transform_5, window_bounds = array<i64: 32, 1>}, {pipeline_mode = #tpu.pipeline_mode<synchronous>, transform_indices = @transform_6, window_bounds = array<i64: 1, 1>}, {transform_indices = @transform_7, window_bounds = array<i64: 1, 4096>}]} {
    %c0 = arith.constant 0 : index
    %c0_0 = arith.constant 0 : index
    %0 = vector.load %arg1[%c0, %c0_0] : memref<1x4096xf32, #tpu.memory_space<vmem>>, vector<1x4096xf32>
    %c0_1 = arith.constant 0 : index
    %c0_2 = arith.constant 0 : index
    %1 = vector.load %arg2[%c0_1, %c0_2] : memref<128x1xf32, #tpu.memory_space<vmem>>, vector<128x1xf32>
    %2 = vector.broadcast %0 : vector<1x4096xf32> to vector<128x4096xf32>
    %3 = vector.broadcast %1 : vector<128x1xf32> to vector<128x4096xf32>
    %4 = arith.mulf %2, %3 : vector<128x4096xf32>
    %c0_3 = arith.constant 0 : index
    %c0_4 = arith.constant 0 : index
    %5 = vector.load %arg3[%c0_3, %c0_4] : memref<128x1xf32, #tpu.memory_space<vmem>>, vector<128x1xf32>
    %6 = vector.broadcast %5 : vector<128x1xf32> to vector<128x4096xf32>
    %7 = arith.addf %4, %6 : vector<128x4096xf32>
    %cst = arith.constant 0.000000e+00 : f32
    %8 = vector.broadcast %cst : f32 to vector<128x4096xf32>
    %9 = arith.maximumf %7, %8 : vector<128x4096xf32>
    %c0_5 = arith.constant 0 : index
    %c0_6 = arith.constant 0 : index
    %10 = vector.load %arg4[%c0_5, %c0_6] : memref<32x128xf32, #tpu.memory_space<vmem>>, vector<32x128xf32>
    %cst_7 = arith.constant dense<0.000000e+00> : vector<32x4096xf32>
    %11 = tpu.matmul %10, %9, %cst_7 {dimension_numbers = #tpu.dot_dimension_numbers<[1], [0], [0], [1], [0, 0, 1, 1], [], []>} : vector<32x128xf32>, vector<128x4096xf32>, vector<32x4096xf32> -> vector<32x4096xf32>
    %c0_8 = arith.constant 0 : index
    %c0_9 = arith.constant 0 : index
    %12 = vector.load %arg5[%c0_8, %c0_9] : memref<32x1xf32, #tpu.memory_space<vmem>>, vector<32x1xf32>
    %13 = vector.broadcast %12 : vector<32x1xf32> to vector<32x4096xf32>
    %14 = arith.addf %11, %13 : vector<32x4096xf32>
    %cst_10 = arith.constant 0.000000e+00 : f32
    %15 = vector.broadcast %cst_10 : f32 to vector<32x4096xf32>
    %16 = arith.maximumf %14, %15 : vector<32x4096xf32>
    %c0_11 = arith.constant 0 : index
    %c0_12 = arith.constant 0 : index
    %17 = vector.load %arg6[%c0_11, %c0_12] : memref<32x1xf32, #tpu.memory_space<vmem>>, vector<32x1xf32>
    %18 = vector.broadcast %17 : vector<32x1xf32> to vector<32x4096xf32>
    %19 = arith.mulf %16, %18 : vector<32x4096xf32>
    %cst_13 = arith.constant dense<0.000000e+00> : vector<4096xf32>
    %20 = vector.multi_reduction <add>, %19, %cst_13 [0] : vector<32x4096xf32> to vector<4096xf32>
    %21 = vector.shape_cast %20 : vector<4096xf32> to vector<1x4096xf32>
    %c0_14 = arith.constant 0 : index
    %c0_15 = arith.constant 0 : index
    %22 = vector.load %arg7[%c0_14, %c0_15] : memref<1x1xf32, #tpu.memory_space<vmem>>, vector<1x1xf32>
    %23 = vector.broadcast %22 : vector<1x1xf32> to vector<1x4096xf32>
    %24 = arith.addf %21, %23 : vector<1x4096xf32>
    %c0_16 = arith.constant 0 : index
    %c0_17 = arith.constant 0 : index
    %25 = vector.load %arg8[%c0_16, %c0_17] : memref<1x4096xf32, #tpu.memory_space<vmem>>, vector<1x4096xf32>
    tpu.vector_store %arg8[%c0_16, %c0_17], %24 {strides = array<i32>} : memref<1x4096xf32, #tpu.memory_space<vmem>>, vector<1x4096xf32>,
    return
  }
  func.func @transform_0(%arg0: i32) -> (i32, i32) {
    %c0_i32 = arith.constant 0 : i32
    %c0_i32_0 = arith.constant 0 : i32
    return %c0_i32, %arg0 : i32, i32
  }
  func.func @transform_1(%arg0: i32) -> (i32, i32) {
    %c0_i32 = arith.constant 0 : i32
    %c0_i32_0 = arith.constant 0 : i32
    %c0_i32_1 = arith.constant 0 : i32
    return %c0_i32, %c0_i32_0 : i32, i32
  }
  func.func @transform_2(%arg0: i32) -> (i32, i32) {
    %c0_i32 = arith.constant 0 : i32
    %c0_i32_0 = arith.constant 0 : i32
    %c0_i32_1 = arith.constant 0 : i32
    return %c0_i32, %c0_i32_0 : i32, i32
  }
  func.func @transform_3(%arg0: i32) -> (i32, i32) {
    %c0_i32 = arith.constant 0 : i32
    %c0_i32_0 = arith.constant 0 : i32
    %c0_i32_1 = arith.constant 0 : i32
    return %c0_i32, %c0_i32_0 : i32, i32
  }
  func.func @transform_4(%arg0: i32) -> (i32, i32) {
    %c0_i32 = arith.constant 0 : i32
    %c0_i32_0 = arith.constant 0 : i32
    %c0_i32_1 = arith.constant 0 : i32
    return %c0_i32, %c0_i32_0 : i32, i32
  }
  func.func @transform_5(%arg0: i32) -> (i32, i32) {
    %c0_i32 = arith.constant 0 : i32
    %c0_i32_0 = arith.constant 0 : i32
    %c0_i32_1 = arith.constant 0 : i32
    return %c0_i32, %c0_i32_0 : i32, i32
  }
  func.func @transform_6(%arg0: i32) -> (i32, i32) {
    %c0_i32 = arith.constant 0 : i32
    %c0_i32_0 = arith.constant 0 : i32
    %c0_i32_1 = arith.constant 0 : i32
    return %c0_i32, %c0_i32_0 : i32, i32
  }
  func.func @transform_7(%arg0: i32) -> (i32, i32) {
    %c0_i32 = arith.constant 0 : i32
    %c0_i32_0 = arith.constant 0 : i32
    return %c0_i32, %arg0 : i32, i32
  }
}

</mosaic_0001>

<llo_original>
// kernel: tpu_custom_call.1
$region0: #{tpu_custom_call.1}
  #allocation0 [shape = 'u32[]', space=smem, size = 0x4, offset = 0x4, fixed_abs, tag = 'smem constant byte address 0x4 - core index']
  #allocation1 [shape = 'u32[144,128]{1,0:T(1,128)}', space=vmem, size = 0x12000, scoped, tag = 'internal scratch']
  #allocation2 [shape = 'f32[1,1]{1,0:T(1,128)S(1)}', space=vmem, size = 0x200, scoped, tag = 'scoped memory for tpu_custom_call.1']
  %s0 = inlined_call_operand.vmem [shape: f32[1,4096], index: 0, kind: input, shape index: {}]
  %s1 = inlined_call_operand.vmem [shape: f32[128,1], index: 1, kind: input, shape index: {}]
  %s2 = inlined_call_operand.vmem [shape: f32[128,1], index: 2, kind: input, shape index: {}]
  %s3 = inlined_call_operand.vmem [shape: f32[32,128], index: 3, kind: input, shape index: {}]
  %s4 = inlined_call_operand.vmem [shape: f32[32,1], index: 4, kind: input, shape index: {}]
  %s5 = inlined_call_operand.vmem [shape: f32[32,1], index: 5, kind: input, shape index: {}]
  %s6 = inlined_call_operand.<no memory space> [shape: f32[1,1], index: 6, kind: input, shape index: {}]
  %s7 = inlined_call_operand.hbm [shape: f32[1,4096], index: 7, kind: output, shape index: {}]
  %s8 = sld [smem:[#allocation0]]
  $region38: #{tpu_custom_call.1} parent=0
    _
  %s10 = ssub.s32 1, %s8
  %s11 = scalar_select 0, %s10, %s8
  %v12 = vstv %s6
  %13 = vst [vmem:[#allocation2] sm:$0x1] %v12
  $region1: #{tpu_custom_call.1} parent=0
    #allocation3 [shape = 'u8[16384]{0}', space=vmem, size = 0x4000, scoped, tag = 'output window, operand 0, single buffered']
    #allocation4 [shape = 's32[1]{0}', space=sflag, size = 0x4, scoped, tag = 'scoped memory for tpu_custom_call.1']
    %14 = vsyncpa [#allocation4], 0
    // Predicated region
    $region2: #{tpu_custom_call.1} parent=1 // pred_check
      _
    $region3: #{tpu_custom_call.1} parent=1 // pred_check_branch
      %16 = sbr.rel (0) target = $region5
    $region4: #{tpu_custom_call.1} parent=1 // pred_region
      _
    $region5: #{tpu_custom_call.1} parent=1 // pred_fallthru
      _
    // Predicated region
    $region6: #{tpu_custom_call.1} parent=1 // pred_check
      _
    $region7: #{tpu_custom_call.1} parent=1 // pred_check_branch
      %18 = sbr.rel (0) target = $region9
    $region8: #{tpu_custom_call.1} parent=1 // pred_region
      _
    $region9: #{tpu_custom_call.1} parent=1 // pred_fallthru
      _
    // Predicated region
    $region10: #{tpu_custom_call.1} parent=1 // pred_check
      _
    $region11: #{tpu_custom_call.1} parent=1 // pred_check_branch
      %20 = sbr.rel (0) target = $region13
    $region12: #{tpu_custom_call.1} parent=1 // pred_region
      _
    $region13: #{tpu_custom_call.1} parent=1 // pred_fallthru
      _
    // Predicated region
    $region14: #{tpu_custom_call.1} parent=1 // pred_check
      _
    $region15: #{tpu_custom_call.1} parent=1 // pred_check_branch
      %22 = sbr.rel (0) target = $region17
    $region16: #{tpu_custom_call.1} parent=1 // pred_region
      _
    $region17: #{tpu_custom_call.1} parent=1 // pred_fallthru
      _
    // Predicated region
    $region18: #{tpu_custom_call.1} parent=1 // pred_check
      _
    $region19: #{tpu_custom_call.1} parent=1 // pred_check_branch
      %24 = sbr.rel (0) target = $region21
    $region20: #{tpu_custom_call.1} parent=1 // pred_region
      _
    $region21: #{tpu_custom_call.1} parent=1 // pred_fallthru
      _
    // Predicated region
    $region22: #{tpu_custom_call.1} parent=1 // pred_check
      _
    $region23: #{tpu_custom_call.1} parent=1 // pred_check_branch
      %26 = sbr.rel (0) target = $region25
    $region24: #{tpu_custom_call.1} parent=1 // pred_region
      _
    $region25: #{tpu_custom_call.1} parent=1 // pred_fallthru
      _
    // Predicated region
    $region26: #{tpu_custom_call.1} parent=1 // pred_check
      _
    $region27: #{tpu_custom_call.1} parent=1 // pred_check_branch
      %28 = sbr.rel (0) target = $region29
    $region28: #{tpu_custom_call.1} parent=1 // pred_region
      _
    $region29: #{tpu_custom_call.1} parent=1 // pred_fallthru
      _
    %v29 = vld [vmem:[%s0] sm:$0xff]
    %v30 = vld [vmem:[%s0 + $0x8] sm:$0xff]
    %v31 = vld [vmem:[%s0 + $0x10] sm:$0xff]
    %v32 = vld [vmem:[%s0 + $0x18] sm:$0xff]
    %v33 = vld [vmem:[%s1] sm:$0xff]
    %v34 = vld [vmem:[%s1 + $0x8] sm:$0xff]
    %v35 = vld [vmem:[%s1 + $0x10] sm:$0xff]
    %v36 = vld [vmem:[%s1 + $0x18] sm:$0xff]
    %v37 = vld [vmem:[%s1 + $0x20] sm:$0xff]
    %v38 = vld [vmem:[%s1 + $0x28] sm:$0xff]
    %v39 = vld [vmem:[%s1 + $0x30] sm:$0xff]
    %v40 = vld [vmem:[%s1 + $0x38] sm:$0xff]
    %v41 = vld [vmem:[%s1 + $0x40] sm:$0xff]
    %v42 = vld [vmem:[%s1 + $0x48] sm:$0xff]
    %v43 = vld [vmem:[%s1 + $0x50] sm:$0xff]
    %v44 = vld [vmem:[%s1 + $0x58] sm:$0xff]
    %v45 = vld [vmem:[%s1 + $0x60] sm:$0xff]
    %v46 = vld [vmem:[%s1 + $0x68] sm:$0xff]
    %v47 = vld [vmem:[%s1 + $0x70] sm:$0xff]
    %v48 = vld [vmem:[%s1 + $0x78] sm:$0xff]
    %v53 = vlaneseq
    %v54 = vshrl.u32 %v53, 7
    %v55 = vsub.s32 0, %v54
    %v56 = vrot.slane %v29, %v55
    %v57 = vlaneseq
    %v58 = vshrl.u32 %v57, 7
    %v59 = vsub.s32 1, %v58
    %v60 = vrot.slane %v29, %v59
    %v61 = vlaneseq
    %v62 = vshrl.u32 %v61, 7
    %v63 = vsub.s32 2, %v62
    %v64 = vrot.slane %v29, %v63
    %v65 = vlaneseq
    %v66 = vshrl.u32 %v65, 7
    %v67 = vsub.s32 3, %v66
    %v68 = vrot.slane %v29, %v67
    %v69 = vlaneseq
    %v70 = vshrl.u32 %v69, 7
    %v71 = vsub.s32 4, %v70
    %v72 = vrot.slane %v29, %v71
    %v73 = vlaneseq
    %v74 = vshrl.u32 %v73, 7
    %v75 = vsub.s32 5, %v74
    %v76 = vrot.slane %v29, %v75
    %v77 = vlaneseq
    %v78 = vshrl.u32 %v77, 7
    %v79 = vsub.s32 6, %v78
    %v80 = vrot.slane %v29, %v79
    %v81 = vlaneseq
    %v82 = vshrl.u32 %v81, 7
    %v83 = vsub.s32 7, %v82
    %v84 = vrot.slane %v29, %v83
    %v85 = vlaneseq
    %v86 = vshrl.u32 %v85, 7
    %v87 = vsub.s32 0, %v86
    %v88 = vrot.slane %v30, %v87
    %v89 = vlaneseq
    %v90 = vshrl.u32 %v89, 7
    %v91 = vsub.s32 1, %v90
    %v92 = vrot.slane %v30, %v91
    %v93 = vlaneseq
    %v94 = vshrl.u32 %v93, 7
    %v95 = vsub.s32 2, %v94
    %v96 = vrot.slane %v30, %v95
    %v97 = vlaneseq
    %v98 = vshrl.u32 %v97, 7
    %v99 = vsub.s32 3, %v98
    %v100 = vrot.slane %v30, %v99
    %v101 = vlaneseq
    %v102 = vshrl.u32 %v101, 7
    %v103 = vsub.s32 4, %v102
    %v104 = vrot.slane %v30, %v103
    %v105 = vlaneseq
    %v106 = vshrl.u32 %v105, 7
    %v107 = vsub.s32 5, %v106
    %v108 = vrot.slane %v30, %v107
    %v109 = vlaneseq
    %v110 = vshrl.u32 %v109, 7
    %v111 = vsub.s32 6, %v110
    %v112 = vrot.slane %v30, %v111
    %v113 = vlaneseq
    %v114 = vshrl.u32 %v113, 7
    %v115 = vsub.s32 7, %v114
    %v116 = vrot.slane %v30, %v115
    %v117 = vlaneseq
    %v118 = vshrl.u32 %v117, 7
    %v119 = vsub.s32 0, %v118
    %v120 = vrot.slane %v31, %v119
    %v121 = vlaneseq
    %v122 = vshrl.u32 %v121, 7
    %v123 = vsub.s32 1, %v122
    %v124 = vrot.slane %v31, %v123
    %v125 = vlaneseq
    %v126 = vshrl.u32 %v125, 7
    %v127 = vsub.s32 2, %v126
    %v128 = vrot.slane %v31, %v127
    %v129 = vlaneseq
    %v130 = vshrl.u32 %v129, 7
    %v131 = vsub.s32 3, %v130
    %v132 = vrot.slane %v31, %v131
    %v133 = vlaneseq
    %v134 = vshrl.u32 %v133, 7
    %v135 = vsub.s32 4, %v134
    %v136 = vrot.slane %v31, %v135
    %v137 = vlaneseq
    %v138 = vshrl.u32 %v137, 7
    %v139 = vsub.s32 5, %v138
    %v140 = vrot.slane %v31, %v139
    %v141 = vlaneseq
    %v142 = vshrl.u32 %v141, 7
    %v143 = vsub.s32 6, %v142
    %v144 = vrot.slane %v31, %v143
    %v145 = vlaneseq
    %v146 = vshrl.u32 %v145, 7
    %v147 = vsub.s32 7, %v146
    %v148 = vrot.slane %v31, %v147
    %v149 = vlaneseq
    %v150 = vshrl.u32 %v149, 7
    %v151 = vsub.s32 0, %v150
    %v152 = vrot.slane %v32, %v151
    %v153 = vlaneseq
    %v154 = vshrl.u32 %v153, 7
    %v155 = vsub.s32 1, %v154
    %v156 = vrot.slane %v32, %v155
    %v157 = vlaneseq
    %v158 = vshrl.u32 %v157, 7
    %v159 = vsub.s32 2, %v158
    %v160 = vrot.slane %v32, %v159
    %v161 = vlaneseq
    %v162 = vshrl.u32 %v161, 7
    %v163 = vsub.s32 3, %v162
    %v164 = vrot.slane %v32, %v163
    %v165 = vlaneseq
    %v166 = vshrl.u32 %v165, 7
    %v167 = vsub.s32 4, %v166
    %v168 = vrot.slane %v32, %v167
    %v169 = vlaneseq
    %v170 = vshrl.u32 %v169, 7
    %v171 = vsub.s32 5, %v170
    %v172 = vrot.slane %v32, %v171
    %v173 = vlaneseq
    %v174 = vshrl.u32 %v173, 7
    %v175 = vsub.s32 6, %v174
    %v176 = vrot.slane %v32, %v175
    %v177 = vlaneseq
    %v178 = vshrl.u32 %v177, 7
    %v179 = vsub.s32 7, %v178
    %v180 = vrot.slane %v32, %v179
    %214 = vset.pattern.permute.xlu0 0
    %215 = vperm.xlu0 %214, %v33
    %v216 = vpop.permute.xlu0 %215
    %219 = vset.pattern.permute.xlu0 0
    %220 = vperm.xlu0 %219, %v34
    %v221 = vpop.permute.xlu0 %220
    %224 = vset.pattern.permute.xlu0 0
    %225 = vperm.xlu0 %224, %v35
    %v226 = vpop.permute.xlu0 %225
    %229 = vset.pattern.permute.xlu0 0
    %230 = vperm.xlu0 %229, %v36
    %v231 = vpop.permute.xlu0 %230
    %234 = vset.pattern.permute.xlu0 0
    %235 = vperm.xlu0 %234, %v37
    %v236 = vpop.permute.xlu0 %235
    %239 = vset.pattern.permute.xlu0 0
    %240 = vperm.xlu0 %239, %v38
    %v241 = vpop.permute.xlu0 %240
    %244 = vset.pattern.permute.xlu0 0
    %245 = vperm.xlu0 %244, %v39
    %v246 = vpop.permute.xlu0 %245
    %249 = vset.pattern.permute.xlu0 0
    %250 = vperm.xlu0 %249, %v40
    %v251 = vpop.permute.xlu0 %250
    %254 = vset.pattern.permute.xlu0 0
    %255 = vperm.xlu0 %254, %v41
    %v256 = vpop.permute.xlu0 %255
    %259 = vset.pattern.permute.xlu0 0
    %260 = vperm.xlu0 %259, %v42
    %v261 = vpop.permute.xlu0 %260
    %264 = vset.pattern.permute.xlu0 0
    %265 = vperm.xlu0 %264, %v43
    %v266 = vpop.permute.xlu0 %265
    %269 = vset.pattern.permute.xlu0 0
    %270 = vperm.xlu0 %269, %v44
    %v271 = vpop.permute.xlu0 %270
    %274 = vset.pattern.permute.xlu0 0
    %275 = vperm.xlu0 %274, %v45
    %v276 = vpop.permute.xlu0 %275
    %279 = vset.pattern.permute.xlu0 0
    %280 = vperm.xlu0 %279, %v46
    %v281 = vpop.permute.xlu0 %280
    %284 = vset.pattern.permute.xlu0 0
    %285 = vperm.xlu0 %284, %v47
    %v286 = vpop.permute.xlu0 %285
    %289 = vset.pattern.permute.xlu0 0
    %290 = vperm.xlu0 %289, %v48
    %v291 = vpop.permute.xlu0 %290
    %v293 = vmul.f32 %v56, %v216
    %v294 = vmul.f32 %v60, %v216
    %v295 = vmul.f32 %v64, %v216
    %v296 = vmul.f32 %v68, %v216
    %v297 = vmul.f32 %v72, %v216
    %v298 = vmul.f32 %v76, %v216
    %v299 = vmul.f32 %v80, %v216
    %v300 = vmul.f32 %v84, %v216
    %v301 = vmul.f32 %v88, %v216
    %v302 = vmul.f32 %v92, %v216
    %v303 = vmul.f32 %v96, %v216
    %v304 = vmul.f32 %v100, %v216
    %v305 = vmul.f32 %v104, %v216
    %v306 = vmul.f32 %v108, %v216
    %v307 = vmul.f32 %v112, %v216
    %v308 = vmul.f32 %v116, %v216
    %v309 = vmul.f32 %v120, %v216
    %v310 = vmul.f32 %v124, %v216
    %v311 = vmul.f32 %v128, %v216
    %v312 = vmul.f32 %v132, %v216
    %v313 = vmul.f32 %v136, %v216
    %v314 = vmul.f32 %v140, %v216
    %v315 = vmul.f32 %v144, %v216
    %v316 = vmul.f32 %v148, %v216
    %v317 = vmul.f32 %v152, %v216
    %v318 = vmul.f32 %v156, %v216
    %v319 = vmul.f32 %v160, %v216
    %v320 = vmul.f32 %v164, %v216
    %v321 = vmul.f32 %v168, %v216
    %v322 = vmul.f32 %v172, %v216
    %v323 = vmul.f32 %v176, %v216
    %v324 = vmul.f32 %v180, %v216
    %v325 = vmul.f32 %v56, %v221
    %v326 = vmul.f32 %v60, %v221
    %v327 = vmul.f32 %v64, %v221
    %v328 = vmul.f32 %v68, %v221
    %v329 = vmul.f32 %v72, %v221
    %v330 = vmul.f32 %v76, %v221
    %v331 = vmul.f32 %v80, %v221
    %v332 = vmul.f32 %v84, %v221
    %v333 = vmul.f32 %v88, %v221
    %v334 = vmul.f32 %v92, %v221
    %v335 = vmul.f32 %v96, %v221
    %v336 = vmul.f32 %v100, %v221
    %v337 = vmul.f32 %v104, %v221
    %v338 = vmul.f32 %v108, %v221
    %v339 = vmul.f32 %v112, %v221
    %v340 = vmul.f32 %v116, %v221
    %v341 = vmul.f32 %v120, %v221
    %v342 = vmul.f32 %v124, %v221
    %v343 = vmul.f32 %v128, %v221
    %v344 = vmul.f32 %v132, %v221
    %v345 = vmul.f32 %v136, %v221
    %v346 = vmul.f32 %v140, %v221
    %v347 = vmul.f32 %v144, %v221
    %v348 = vmul.f32 %v148, %v221
    %v349 = vmul.f32 %v152, %v221
    %v350 = vmul.f32 %v156, %v221
    %v351 = vmul.f32 %v160, %v221
    %v352 = vmul.f32 %v164, %v221
    %v353 = vmul.f32 %v168, %v221
    %v354 = vmul.f32 %v172, %v221
    %v355 = vmul.f32 %v176, %v221
    %v356 = vmul.f32 %v180, %v221
    %v357 = vmul.f32 %v56, %v226
    %v358 = vmul.f32 %v60, %v226
    %v359 = vmul.f32 %v64, %v226
    %v360 = vmul.f32 %v68, %v226
    %v361 = vmul.f32 %v72, %v226
    %v362 = vmul.f32 %v76, %v226
    %v363 = vmul.f32 %v80, %v226
    %v364 = vmul.f32 %v84, %v226
    %v365 = vmul.f32 %v88, %v226
    %v366 = vmul.f32 %v92, %v226
    %v367 = vmul.f32 %v96, %v226
    %v368 = vmul.f32 %v100, %v226
    %v369 = vmul.f32 %v104, %v226
    %v370 = vmul.f32 %v108, %v226
    %v371 = vmul.f32 %v112, %v226
    %v372 = vmul.f32 %v116, %v226
    %v373 = vmul.f32 %v120, %v226
    %v374 = vmul.f32 %v124, %v226
    %v375 = vmul.f32 %v128, %v226
    %v376 = vmul.f32 %v132, %v226
    %v377 = vmul.f32 %v136, %v226
    %v378 = vmul.f32 %v140, %v226
    %v379 = vmul.f32 %v144, %v226
    %v380 = vmul.f32 %v148, %v226
    %v381 = vmul.f32 %v152, %v226
    %v382 = vmul.f32 %v156, %v226
    %v383 = vmul.f32 %v160, %v226
    %v384 = vmul.f32 %v164, %v226
    %v385 = vmul.f32 %v168, %v226
    %v386 = vmul.f32 %v172, %v226
    %v387 = vmul.f32 %v176, %v226
    %v388 = vmul.f32 %v180, %v226
    %v389 = vmul.f32 %v56, %v231
    %v390 = vmul.f32 %v60, %v231
    %v391 = vmul.f32 %v64, %v231
    %v392 = vmul.f32 %v68, %v231
    %v393 = vmul.f32 %v72, %v231
    %v394 = vmul.f32 %v76, %v231
    %v395 = vmul.f32 %v80, %v231
    %v396 = vmul.f32 %v84, %v231
    %v397 = vmul.f32 %v88, %v231
    %v398 = vmul.f32 %v92, %v231
    %v399 = vmul.f32 %v96, %v231
    %v400 = vmul.f32 %v100, %v231
    %v401 = vmul.f32 %v104, %v231
    %v402 = vmul.f32 %v108, %v231
    %v403 = vmul.f32 %v112, %v231
    %v404 = vmul.f32 %v116, %v231
    %v405 = vmul.f32 %v120, %v231
    %v406 = vmul.f32 %v124, %v231
    %v407 = vmul.f32 %v128, %v231
    %v408 = vmul.f32 %v132, %v231
    %v409 = vmul.f32 %v136, %v231
    %v410 = vmul.f32 %v140, %v231
    %v411 = vmul.f32 %v144, %v231
    %v412 = vmul.f32 %v148, %v231
    %v413 = vmul.f32 %v152, %v231
    %v414 = vmul.f32 %v156, %v231
    %v415 = vmul.f32 %v160, %v231
    %v416 = vmul.f32 %v164, %v231
    %v417 = vmul.f32 %v168, %v231
    %v418 = vmul.f32 %v172, %v231
    %v419 = vmul.f32 %v176, %v231
    %v420 = vmul.f32 %v180, %v231
    %v421 = vmul.f32 %v56, %v236
    %v422 = vmul.f32 %v60, %v236
    %v423 = vmul.f32 %v64, %v236
    %v424 = vmul.f32 %v68, %v236
    %v425 = vmul.f32 %v72, %v236
    %v426 = vmul.f32 %v76, %v236
    %v427 = vmul.f32 %v80, %v236
    %v428 = vmul.f32 %v84, %v236
    %v429 = vmul.f32 %v88, %v236
    %v430 = vmul.f32 %v92, %v236
    %v431 = vmul.f32 %v96, %v236
    %v432 = vmul.f32 %v100, %v236
    %v433 = vmul.f32 %v104, %v236
    %v434 = vmul.f32 %v108, %v236
    %v435 = vmul.f32 %v112, %v236
    %v436 = vmul.f32 %v116, %v236
    %v437 = vmul.f32 %v120, %v236
    %v438 = vmul.f32 %v124, %v236
    %v439 = vmul.f32 %v128, %v236
    %v440 = vmul.f32 %v132, %v236
    %v441 = vmul.f32 %v136, %v236
    %v442 = vmul.f32 %v140, %v236
    %v443 = vmul.f32 %v144, %v236
    %v444 = vmul.f32 %v148, %v236
    %v445 = vmul.f32 %v152, %v236
    %v446 = vmul.f32 %v156, %v236
    %v447 = vmul.f32 %v160, %v236
    %v448 = vmul.f32 %v164, %v236
    %v449 = vmul.f32 %v168, %v236
    %v450 = vmul.f32 %v172, %v236
    %v451 = vmul.f32 %v176, %v236
    %v452 = vmul.f32 %v180, %v236
    %v453 = vmul.f32 %v56, %v241
    %v454 = vmul.f32 %v60, %v241
    %v455 = vmul.f32 %v64, %v241
    %v456 = vmul.f32 %v68, %v241
    %v457 = vmul.f32 %v72, %v241
    %v458 = vmul.f32 %v76, %v241
    %v459 = vmul.f32 %v80, %v241
    %v460 = vmul.f32 %v84, %v241
    %v461 = vmul.f32 %v88, %v241
    %v462 = vmul.f32 %v92, %v241
    %v463 = vmul.f32 %v96, %v241
    %v464 = vmul.f32 %v100, %v241
    %v465 = vmul.f32 %v104, %v241
    %v466 = vmul.f32 %v108, %v241
    %v467 = vmul.f32 %v112, %v241
    %v468 = vmul.f32 %v116, %v241
    %v469 = vmul.f32 %v120, %v241
    %v470 = vmul.f32 %v124, %v241
    %v471 = vmul.f32 %v128, %v241
    %v472 = vmul.f32 %v132, %v241
    %v473 = vmul.f32 %v136, %v241
    %v474 = vmul.f32 %v140, %v241
    %v475 = vmul.f32 %v144, %v241
    %v476 = vmul.f32 %v148, %v241
    %v477 = vmul.f32 %v152, %v241
    %v478 = vmul.f32 %v156, %v241
    %v479 = vmul.f32 %v160, %v241
    %v480 = vmul.f32 %v164, %v241
    %v481 = vmul.f32 %v168, %v241
    %v482 = vmul.f32 %v172, %v241
    %v483 = vmul.f32 %v176, %v241
    %v484 = vmul.f32 %v180, %v241
    %v485 = vmul.f32 %v56, %v246
    %v486 = vmul.f32 %v60, %v246
    %v487 = vmul.f32 %v64, %v246
    %v488 = vmul.f32 %v68, %v246
    %v489 = vmul.f32 %v72, %v246
    %v490 = vmul.f32 %v76, %v246
    %v491 = vmul.f32 %v80, %v246
    %v492 = vmul.f32 %v84, %v246
    %v493 = vmul.f32 %v88, %v246
    %v494 = vmul.f32 %v92, %v246
    %v495 = vmul.f32 %v96, %v246
    %v496 = vmul.f32 %v100, %v246
    %v497 = vmul.f32 %v104, %v246
    %v498 = vmul.f32 %v108, %v246
    %v499 = vmul.f32 %v112, %v246
    %v500 = vmul.f32 %v116, %v246
    %v501 = vmul.f32 %v120, %v246
    %v502 = vmul.f32 %v124, %v246
    %v503 = vmul.f32 %v128, %v246
    %v504 = vmul.f32 %v132, %v246
    %v505 = vmul.f32 %v136, %v246
    %v506 = vmul.f32 %v140, %v246
    %v507 = vmul.f32 %v144, %v246
    %v508 = vmul.f32 %v148, %v246
    %v509 = vmul.f32 %v152, %v246
    %v510 = vmul.f32 %v156, %v246
    %v511 = vmul.f32 %v160, %v246
    %v512 = vmul.f32 %v164, %v246
    %v513 = vmul.f32 %v168, %v246
    %v514 = vmul.f32 %v172, %v246
    %v515 = vmul.f32 %v176, %v246
    %v516 = vmul.f32 %v180, %v246
    %v517 = vmul.f32 %v56, %v251
    %v518 = vmul.f32 %v60, %v251
    %v519 = vmul.f32 %v64, %v251
    %v520 = vmul.f32 %v68, %v251
    %v521 = vmul.f32 %v72, %v251
    %v522 = vmul.f32 %v76, %v251
    %v523 = vmul.f32 %v80, %v251
    %v524 = vmul.f32 %v84, %v251
    %v525 = vmul.f32 %v88, %v251
    %v526 = vmul.f32 %v92, %v251
    %v527 = vmul.f32 %v96, %v251
    %v528 = vmul.f32 %v100, %v251
    %v529 = vmul.f32 %v104, %v251
    %v530 = vmul.f32 %v108, %v251
    %v531 = vmul.f32 %v112, %v251
    %v532 = vmul.f32 %v116, %v251
    %v533 = vmul.f32 %v120, %v251
    %v534 = vmul.f32 %v124, %v251
    %v535 = vmul.f32 %v128, %v251
    %v536 = vmul.f32 %v132, %v251
    %v537 = vmul.f32 %v136, %v251
    %v538 = vmul.f32 %v140, %v251
    %v539 = vmul.f32 %v144, %v251
    %v540 = vmul.f32 %v148, %v251
    %v541 = vmul.f32 %v152, %v251
    %v542 = vmul.f32 %v156, %v251
    %v543 = vmul.f32 %v160, %v251
    %v544 = vmul.f32 %v164, %v251
    %v545 = vmul.f32 %v168, %v251
    %v546 = vmul.f32 %v172, %v251
    %v547 = vmul.f32 %v176, %v251
    %v548 = vmul.f32 %v180, %v251
    %v549 = vmul.f32 %v56, %v256
    %v550 = vmul.f32 %v60, %v256
    %v551 = vmul.f32 %v64, %v256
    %v552 = vmul.f32 %v68, %v256
    %v553 = vmul.f32 %v72, %v256
    %v554 = vmul.f32 %v76, %v256
    %v555 = vmul.f32 %v80, %v256
    %v556 = vmul.f32 %v84, %v256
    %v557 = vmul.f32 %v88, %v256
    %v558 = vmul.f32 %v92, %v256
    %v559 = vmul.f32 %v96, %v256
    %v560 = vmul.f32 %v100, %v256
    %v561 = vmul.f32 %v104, %v256
    %v562 = vmul.f32 %v108, %v256
    %v563 = vmul.f32 %v112, %v256
    %v564 = vmul.f32 %v116, %v256
    %v565 = vmul.f32 %v120, %v256
    %v566 = vmul.f32 %v124, %v256
    %v567 = vmul.f32 %v128, %v256
    %v568 = vmul.f32 %v132, %v256
    %v569 = vmul.f32 %v136, %v256
    %v570 = vmul.f32 %v140, %v256
    %v571 = vmul.f32 %v144, %v256
    %v572 = vmul.f32 %v148, %v256
    %v573 = vmul.f32 %v152, %v256
    %v574 = vmul.f32 %v156, %v256
    %v575 = vmul.f32 %v160, %v256
    %v576 = vmul.f32 %v164, %v256
    %v577 = vmul.f32 %v168, %v256
    %v578 = vmul.f32 %v172, %v256
    %v579 = vmul.f32 %v176, %v256
    %v580 = vmul.f32 %v180, %v256
    %v581 = vmul.f32 %v56, %v261
    %v582 = vmul.f32 %v60, %v261
    %v583 = vmul.f32 %v64, %v261
    %v584 = vmul.f32 %v68, %v261
    %v585 = vmul.f32 %v72, %v261
    %v586 = vmul.f32 %v76, %v261
    %v587 = vmul.f32 %v80, %v261
    %v588 = vmul.f32 %v84, %v261
    %v589 = vmul.f32 %v88, %v261
    %v590 = vmul.f32 %v92, %v261
    %v591 = vmul.f32 %v96, %v261
    %v592 = vmul.f32 %v100, %v261
    %v593 = vmul.f32 %v104, %v261
    %v594 = vmul.f32 %v108, %v261
    %v595 = vmul.f32 %v112, %v261
    %v596 = vmul.f32 %v116, %v261
    %v597 = vmul.f32 %v120, %v261
    %v598 = vmul.f32 %v124, %v261
    %v599 = vmul.f32 %v128, %v261
    %v600 = vmul.f32 %v132, %v261
    %v601 = vmul.f32 %v136, %v261
    %v602 = vmul.f32 %v140, %v261
    %v603 = vmul.f32 %v144, %v261
    %v604 = vmul.f32 %v148, %v261
    %v605 = vmul.f32 %v152, %v261
    %v606 = vmul.f32 %v156, %v261
    %v607 = vmul.f32 %v160, %v261
    %v608 = vmul.f32 %v164, %v261
    %v609 = vmul.f32 %v168, %v261
    %v610 = vmul.f32 %v172, %v261
    %v611 = vmul.f32 %v176, %v261
    %v612 = vmul.f32 %v180, %v261
    %v613 = vmul.f32 %v56, %v266
    %v614 = vmul.f32 %v60, %v266
    %v615 = vmul.f32 %v64, %v266
    %v616 = vmul.f32 %v68, %v266
    %v617 = vmul.f32 %v72, %v266
    %v618 = vmul.f32 %v76, %v266
    %v619 = vmul.f32 %v80, %v266
    %v620 = vmul.f32 %v84, %v266
    %v621 = vmul.f32 %v88, %v266
    %v622 = vmul.f32 %v92, %v266
    %v623 = vmul.f32 %v96, %v266
    %v624 = vmul.f32 %v100, %v266
    %v625 = vmul.f32 %v104, %v266
    %v626 = vmul.f32 %v108, %v266
    %v627 = vmul.f32 %v112, %v266
    %v628 = vmul.f32 %v116, %v266
    %v629 = vmul.f32 %v120, %v266
    %v630 = vmul.f32 %v124, %v266
    %v631 = vmul.f32 %v128, %v266
    %v632 = vmul.f32 %v132, %v266
    %v633 = vmul.f32 %v136, %v266
    %v634 = vmul.f32 %v140, %v266
    %v635 = vmul.f32 %v144, %v266
    %v636 = vmul.f32 %v148, %v266
    %v637 = vmul.f32 %v152, %v266
    %v638 = vmul.f32 %v156, %v266
    %v639 = vmul.f32 %v160, %v266
    %v640 = vmul.f32 %v164, %v266
    %v641 = vmul.f32 %v168, %v266
    %v642 = vmul.f32 %v172, %v266
    %v643 = vmul.f32 %v176, %v266
    %v644 = vmul.f32 %v180, %v266
    %v645 = vmul.f32 %v56, %v271
    %v646 = vmul.f32 %v60, %v271
    %v647 = vmul.f32 %v64, %v271
    %v648 = vmul.f32 %v68, %v271
    %v649 = vmul.f32 %v72, %v271
    %v650 = vmul.f32 %v76, %v271
    %v651 = vmul.f32 %v80, %v271
    %v652 = vmul.f32 %v84, %v271
    %v653 = vmul.f32 %v88, %v271
    %v654 = vmul.f32 %v92, %v271
    %v655 = vmul.f32 %v96, %v271
    %v656 = vmul.f32 %v100, %v271
    %v657 = vmul.f32 %v104, %v271
    %v658 = vmul.f32 %v108, %v271
    %v659 = vmul.f32 %v112, %v271
    %v660 = vmul.f32 %v116, %v271
    %v661 = vmul.f32 %v120, %v271
    %v662 = vmul.f32 %v124, %v271
    %v663 = vmul.f32 %v128, %v271
    %v664 = vmul.f32 %v132, %v271
    %v665 = vmul.f32 %v136, %v271
    %v666 = vmul.f32 %v140, %v271
    %v667 = vmul.f32 %v144, %v271
    %v668 = vmul.f32 %v148, %v271
    %v669 = vmul.f32 %v152, %v271
    %v670 = vmul.f32 %v156, %v271
    %v671 = vmul.f32 %v160, %v271
    %v672 = vmul.f32 %v164, %v271
    %v673 = vmul.f32 %v168, %v271
    %v674 = vmul.f32 %v172, %v271
    %v675 = vmul.f32 %v176, %v271
    %v676 = vmul.f32 %v180, %v271
    %v677 = vmul.f32 %v56, %v276
    %v678 = vmul.f32 %v60, %v276
    %v679 = vmul.f32 %v64, %v276
    %v680 = vmul.f32 %v68, %v276
    %v681 = vmul.f32 %v72, %v276
    %v682 = vmul.f32 %v76, %v276
    %v683 = vmul.f32 %v80, %v276
    %v684 = vmul.f32 %v84, %v276
    %v685 = vmul.f32 %v88, %v276
    %v686 = vmul.f32 %v92, %v276
    %v687 = vmul.f32 %v96, %v276
    %v688 = vmul.f32 %v100, %v276
    %v689 = vmul.f32 %v104, %v276
    %v690 = vmul.f32 %v108, %v276
    %v691 = vmul.f32 %v112, %v276
    %v692 = vmul.f32 %v116, %v276
    %v693 = vmul.f32 %v120, %v276
    %v694 = vmul.f32 %v124, %v276
    %v695 = vmul.f32 %v128, %v276
    %v696 = vmul.f32 %v132, %v276
    %v697 = vmul.f32 %v136, %v276
    %v698 = vmul.f32 %v140, %v276
    %v699 = vmul.f32 %v144, %v276
    %v700 = vmul.f32 %v148, %v276
    %v701 = vmul.f32 %v152, %v276
    %v702 = vmul.f32 %v156, %v276
    %v703 = vmul.f32 %v160, %v276
    %v704 = vmul.f32 %v164, %v276
    %v705 = vmul.f32 %v168, %v276
    %v706 = vmul.f32 %v172, %v276
    %v707 = vmul.f32 %v176, %v276
    %v708 = vmul.f32 %v180, %v276
    %v709 = vmul.f32 %v56, %v281
    %v710 = vmul.f32 %v60, %v281
    %v711 = vmul.f32 %v64, %v281
    %v712 = vmul.f32 %v68, %v281
    %v713 = vmul.f32 %v72, %v281
    %v714 = vmul.f32 %v76, %v281
    %v715 = vmul.f32 %v80, %v281
    %v716 = vmul.f32 %v84, %v281
    %v717 = vmul.f32 %v88, %v281
    %v718 = vmul.f32 %v92, %v281
    %v719 = vmul.f32 %v96, %v281
    %v720 = vmul.f32 %v100, %v281
    %v721 = vmul.f32 %v104, %v281
    %v722 = vmul.f32 %v108, %v281
    %v723 = vmul.f32 %v112, %v281
    %v724 = vmul.f32 %v116, %v281
    %v725 = vmul.f32 %v120, %v281
    %v726 = vmul.f32 %v124, %v281
    %v727 = vmul.f32 %v128, %v281
    %v728 = vmul.f32 %v132, %v281
    %v729 = vmul.f32 %v136, %v281
    %v730 = vmul.f32 %v140, %v281
    %v731 = vmul.f32 %v144, %v281
    %v732 = vmul.f32 %v148, %v281
    %v733 = vmul.f32 %v152, %v281
    %v734 = vmul.f32 %v156, %v281
    %v735 = vmul.f32 %v160, %v281
    %v736 = vmul.f32 %v164, %v281
    %v737 = vmul.f32 %v168, %v281
    %v738 = vmul.f32 %v172, %v281
    %v739 = vmul.f32 %v176, %v281
    %v740 = vmul.f32 %v180, %v281
    %v741 = vmul.f32 %v56, %v286
    %v742 = vmul.f32 %v60, %v286
    %v743 = vmul.f32 %v64, %v286
    %v744 = vmul.f32 %v68, %v286
    %v745 = vmul.f32 %v72, %v286
    %v746 = vmul.f32 %v76, %v286
    %v747 = vmul.f32 %v80, %v286
    %v748 = vmul.f32 %v84, %v286
    %v749 = vmul.f32 %v88, %v286
    %v750 = vmul.f32 %v92, %v286
    %v751 = vmul.f32 %v96, %v286
    %v752 = vmul.f32 %v100, %v286
    %v753 = vmul.f32 %v104, %v286
    %v754 = vmul.f32 %v108, %v286
    %v755 = vmul.f32 %v112, %v286
    %v756 = vmul.f32 %v116, %v286
    %v757 = vmul.f32 %v120, %v286
    %v758 = vmul.f32 %v124, %v286
    %v759 = vmul.f32 %v128, %v286
    %v760 = vmul.f32 %v132, %v286
    %v761 = vmul.f32 %v136, %v286
    %v762 = vmul.f32 %v140, %v286
    %v763 = vmul.f32 %v144, %v286
    %v764 = vmul.f32 %v148, %v286
    %v765 = vmul.f32 %v152, %v286
    %v766 = vmul.f32 %v156, %v286
    %v767 = vmul.f32 %v160, %v286
    %v768 = vmul.f32 %v164, %v286
    %v769 = vmul.f32 %v168, %v286
    %v770 = vmul.f32 %v172, %v286
    %v771 = vmul.f32 %v176, %v286
    %v772 = vmul.f32 %v180, %v286
    %v773 = vmul.f32 %v56, %v291
    %v774 = vmul.f32 %v60, %v291
    %v775 = vmul.f32 %v64, %v291
    %v776 = vmul.f32 %v68, %v291
    %v777 = vmul.f32 %v72, %v291
    %v778 = vmul.f32 %v76, %v291
    %v779 = vmul.f32 %v80, %v291
    %v780 = vmul.f32 %v84, %v291
    %v781 = vmul.f32 %v88, %v291
    %v782 = vmul.f32 %v92, %v291
    %v783 = vmul.f32 %v96, %v291
    %v784 = vmul.f32 %v100, %v291
    %v785 = vmul.f32 %v104, %v291
    %v786 = vmul.f32 %v108, %v291
    %v787 = vmul.f32 %v112, %v291
    %v788 = vmul.f32 %v116, %v291
    %v789 = vmul.f32 %v120, %v291
    %v790 = vmul.f32 %v124, %v291
    %v791 = vmul.f32 %v128, %v291
    %v792 = vmul.f32 %v132, %v291
    %v793 = vmul.f32 %v136, %v291
    %v794 = vmul.f32 %v140, %v291
    %v795 = vmul.f32 %v144, %v291
    %v796 = vmul.f32 %v148, %v291
    %v797 = vmul.f32 %v152, %v291
    %v798 = vmul.f32 %v156, %v291
    %v799 = vmul.f32 %v160, %v291
    %v800 = vmul.f32 %v164, %v291
    %v801 = vmul.f32 %v168, %v291
    %v802 = vmul.f32 %v172, %v291
    %v803 = vmul.f32 %v176, %v291
    %v804 = vmul.f32 %v180, %v291
    %v805 = vld [vmem:[%s2] sm:$0xff]
    %v806 = vld [vmem:[%s2 + $0x8] sm:$0xff]
    %v807 = vld [vmem:[%s2 + $0x10] sm:$0xff]
    %v808 = vld [vmem:[%s2 + $0x18] sm:$0xff]
    %v809 = vld [vmem:[%s2 + $0x20] sm:$0xff]
    %v810 = vld [vmem:[%s2 + $0x28] sm:$0xff]
    %v811 = vld [vmem:[%s2 + $0x30] sm:$0xff]
    %v812 = vld [vmem:[%s2 + $0x38] sm:$0xff]
    %v813 = vld [vmem:[%s2 + $0x40] sm:$0xff]
    %v814 = vld [vmem:[%s2 + $0x48] sm:$0xff]
    %v815 = vld [vmem:[%s2 + $0x50] sm:$0xff]
    %v816 = vld [vmem:[%s2 + $0x58] sm:$0xff]
    %v817 = vld [vmem:[%s2 + $0x60] sm:$0xff]
    %v818 = vld [vmem:[%s2 + $0x68] sm:$0xff]
    %v819 = vld [vmem:[%s2 + $0x70] sm:$0xff]
    %v820 = vld [vmem:[%s2 + $0x78] sm:$0xff]
    %822 = vset.pattern.permute.xlu0 0
    %823 = vperm.xlu0 %822, %v805
    %v824 = vpop.permute.xlu0 %823
    %827 = vset.pattern.permute.xlu0 0
    %828 = vperm.xlu0 %827, %v806
    %v829 = vpop.permute.xlu0 %828
    %832 = vset.pattern.permute.xlu0 0
    %833 = vperm.xlu0 %832, %v807
    %v834 = vpop.permute.xlu0 %833
    %837 = vset.pattern.permute.xlu0 0
    %838 = vperm.xlu0 %837, %v808
    %v839 = vpop.permute.xlu0 %838
    %842 = vset.pattern.permute.xlu0 0
    %843 = vperm.xlu0 %842, %v809
    %v844 = vpop.permute.xlu0 %843
    %847 = vset.pattern.permute.xlu0 0
    %848 = vperm.xlu0 %847, %v810
    %v849 = vpop.permute.xlu0 %848
    %852 = vset.pattern.permute.xlu0 0
    %853 = vperm.xlu0 %852, %v811
    %v854 = vpop.permute.xlu0 %853
    %857 = vset.pattern.permute.xlu0 0
    %858 = vperm.xlu0 %857, %v812
    %v859 = vpop.permute.xlu0 %858
    %862 = vset.pattern.permute.xlu0 0
    %863 = vperm.xlu0 %862, %v813
    %v864 = vpop.permute.xlu0 %863
    %867 = vset.pattern.permute.xlu0 0
    %868 = vperm.xlu0 %867, %v814
    %v869 = vpop.permute.xlu0 %868
    %872 = vset.pattern.permute.xlu0 0
    %873 = vperm.xlu0 %872, %v815
    %v874 = vpop.permute.xlu0 %873
    %877 = vset.pattern.permute.xlu0 0
    %878 = vperm.xlu0 %877, %v816
    %v879 = vpop.permute.xlu0 %878
    %882 = vset.pattern.permute.xlu0 0
    %883 = vperm.xlu0 %882, %v817
    %v884 = vpop.permute.xlu0 %883
    %887 = vset.pattern.permute.xlu0 0
    %888 = vperm.xlu0 %887, %v818
    %v889 = vpop.permute.xlu0 %888
    %892 = vset.pattern.permute.xlu0 0
    %893 = vperm.xlu0 %892, %v819
    %v894 = vpop.permute.xlu0 %893
    %897 = vset.pattern.permute.xlu0 0
    %898 = vperm.xlu0 %897, %v820
    %v899 = vpop.permute.xlu0 %898
    %v901 = vadd.f32 %v293, %v824
    %v902 = vadd.f32 %v294, %v824
    %v903 = vadd.f32 %v295, %v824
    %v904 = vadd.f32 %v296, %v824
    %v905 = vadd.f32 %v297, %v824
    %v906 = vadd.f32 %v298, %v824
    %v907 = vadd.f32 %v299, %v824
    %v908 = vadd.f32 %v300, %v824
    %v909 = vadd.f32 %v301, %v824
    %v910 = vadd.f32 %v302, %v824
    %v911 = vadd.f32 %v303, %v824
    %v912 = vadd.f32 %v304, %v824
    %v913 = vadd.f32 %v305, %v824
    %v914 = vadd.f32 %v306, %v824
    %v915 = vadd.f32 %v307, %v824
    %v916 = vadd.f32 %v308, %v824
    %v917 = vadd.f32 %v309, %v824
    %v918 = vadd.f32 %v310, %v824
    %v919 = vadd.f32 %v311, %v824
    %v920 = vadd.f32 %v312, %v824
    %v921 = vadd.f32 %v313, %v824
    %v922 = vadd.f32 %v314, %v824
    %v923 = vadd.f32 %v315, %v824
    %v924 = vadd.f32 %v316, %v824
    %v925 = vadd.f32 %v317, %v824
    %v926 = vadd.f32 %v318, %v824
    %v927 = vadd.f32 %v319, %v824
    %v928 = vadd.f32 %v320, %v824
    %v929 = vadd.f32 %v321, %v824
    %v930 = vadd.f32 %v322, %v824
    %v931 = vadd.f32 %v323, %v824
    %v932 = vadd.f32 %v324, %v824
    %v933 = vadd.f32 %v325, %v829
    %v934 = vadd.f32 %v326, %v829
    %v935 = vadd.f32 %v327, %v829
    %v936 = vadd.f32 %v328, %v829
    %v937 = vadd.f32 %v329, %v829
    %v938 = vadd.f32 %v330, %v829
    %v939 = vadd.f32 %v331, %v829
    %v940 = vadd.f32 %v332, %v829
    %v941 = vadd.f32 %v333, %v829
    %v942 = vadd.f32 %v334, %v829
    %v943 = vadd.f32 %v335, %v829
    %v944 = vadd.f32 %v336, %v829
    %v945 = vadd.f32 %v337, %v829
    %v946 = vadd.f32 %v338, %v829
    %v947 = vadd.f32 %v339, %v829
    %v948 = vadd.f32 %v340, %v829
    %v949 = vadd.f32 %v341, %v829
    %v950 = vadd.f32 %v342, %v829
    %v951 = vadd.f32 %v343, %v829
    %v952 = vadd.f32 %v344, %v829
    %v953 = vadd.f32 %v345, %v829
    %v954 = vadd.f32 %v346, %v829
    %v955 = vadd.f32 %v347, %v829
    %v956 = vadd.f32 %v348, %v829
    %v957 = vadd.f32 %v349, %v829
    %v958 = vadd.f32 %v350, %v829
    %v959 = vadd.f32 %v351, %v829
    %v960 = vadd.f32 %v352, %v829
    %v961 = vadd.f32 %v353, %v829
    %v962 = vadd.f32 %v354, %v829
    %v963 = vadd.f32 %v355, %v829
    %v964 = vadd.f32 %v356, %v829
    %v965 = vadd.f32 %v357, %v834
    %v966 = vadd.f32 %v358, %v834
    %v967 = vadd.f32 %v359, %v834
    %v968 = vadd.f32 %v360, %v834
    %v969 = vadd.f32 %v361, %v834
    %v970 = vadd.f32 %v362, %v834
    %v971 = vadd.f32 %v363, %v834
    %v972 = vadd.f32 %v364, %v834
    %v973 = vadd.f32 %v365, %v834
    %v974 = vadd.f32 %v366, %v834
    %v975 = vadd.f32 %v367, %v834
    %v976 = vadd.f32 %v368, %v834
    %v977 = vadd.f32 %v369, %v834
    %v978 = vadd.f32 %v370, %v834
    %v979 = vadd.f32 %v371, %v834
    %v980 = vadd.f32 %v372, %v834
    %v981 = vadd.f32 %v373, %v834
    %v982 = vadd.f32 %v374, %v834
    %v983 = vadd.f32 %v375, %v834
    %v984 = vadd.f32 %v376, %v834
    %v985 = vadd.f32 %v377, %v834
    %v986 = vadd.f32 %v378, %v834
    %v987 = vadd.f32 %v379, %v834
    %v988 = vadd.f32 %v380, %v834
    %v989 = vadd.f32 %v381, %v834
    %v990 = vadd.f32 %v382, %v834
    %v991 = vadd.f32 %v383, %v834
    %v992 = vadd.f32 %v384, %v834
    %v993 = vadd.f32 %v385, %v834
    %v994 = vadd.f32 %v386, %v834
    %v995 = vadd.f32 %v387, %v834
    %v996 = vadd.f32 %v388, %v834
    %v997 = vadd.f32 %v389, %v839
    %v998 = vadd.f32 %v390, %v839
    %v999 = vadd.f32 %v391, %v839
    %v1000 = vadd.f32 %v392, %v839
    %v1001 = vadd.f32 %v393, %v839
    %v1002 = vadd.f32 %v394, %v839
    %v1003 = vadd.f32 %v395, %v839
    %v1004 = vadd.f32 %v396, %v839
    %v1005 = vadd.f32 %v397, %v839
    %v1006 = vadd.f32 %v398, %v839
    %v1007 = vadd.f32 %v399, %v839
    %v1008 = vadd.f32 %v400, %v839
    %v1009 = vadd.f32 %v401, %v839
    %v1010 = vadd.f32 %v402, %v839
    %v1011 = vadd.f32 %v403, %v839
    %v1012 = vadd.f32 %v404, %v839
    %v1013 = vadd.f32 %v405, %v839
    %v1014 = vadd.f32 %v406, %v839
    %v1015 = vadd.f32 %v407, %v839
    %v1016 = vadd.f32 %v408, %v839
    %v1017 = vadd.f32 %v409, %v839
    %v1018 = vadd.f32 %v410, %v839
    %v1019 = vadd.f32 %v411, %v839
    %v1020 = vadd.f32 %v412, %v839
    %v1021 = vadd.f32 %v413, %v839
    %v1022 = vadd.f32 %v414, %v839
    %v1023 = vadd.f32 %v415, %v839
    %v1024 = vadd.f32 %v416, %v839
    %v1025 = vadd.f32 %v417, %v839
    %v1026 = vadd.f32 %v418, %v839
    %v1027 = vadd.f32 %v419, %v839
    %v1028 = vadd.f32 %v420, %v839
    %v1029 = vadd.f32 %v421, %v844
    %v1030 = vadd.f32 %v422, %v844
    %v1031 = vadd.f32 %v423, %v844
    %v1032 = vadd.f32 %v424, %v844
    %v1033 = vadd.f32 %v425, %v844
    %v1034 = vadd.f32 %v426, %v844
    %v1035 = vadd.f32 %v427, %v844
    %v1036 = vadd.f32 %v428, %v844
    %v1037 = vadd.f32 %v429, %v844
    %v1038 = vadd.f32 %v430, %v844
    %v1039 = vadd.f32 %v431, %v844
    %v1040 = vadd.f32 %v432, %v844
    %v1041 = vadd.f32 %v433, %v844
    %v1042 = vadd.f32 %v434, %v844
    %v1043 = vadd.f32 %v435, %v844
    %v1044 = vadd.f32 %v436, %v844
    %v1045 = vadd.f32 %v437, %v844
    %v1046 = vadd.f32 %v438, %v844
    %v1047 = vadd.f32 %v439, %v844
    %v1048 = vadd.f32 %v440, %v844
    %v1049 = vadd.f32 %v441, %v844
    %v1050 = vadd.f32 %v442, %v844
    %v1051 = vadd.f32 %v443, %v844
    %v1052 = vadd.f32 %v444, %v844
    %v1053 = vadd.f32 %v445, %v844
    %v1054 = vadd.f32 %v446, %v844
    %v1055 = vadd.f32 %v447, %v844
    %v1056 = vadd.f32 %v448, %v844
    %v1057 = vadd.f32 %v449, %v844
    %v1058 = vadd.f32 %v450, %v844
    %v1059 = vadd.f32 %v451, %v844
    %v1060 = vadd.f32 %v452, %v844
    %v1061 = vadd.f32 %v453, %v849
    %v1062 = vadd.f32 %v454, %v849
    %v1063 = vadd.f32 %v455, %v849
    %v1064 = vadd.f32 %v456, %v849
    %v1065 = vadd.f32 %v457, %v849
    %v1066 = vadd.f32 %v458, %v849
    %v1067 = vadd.f32 %v459, %v849
    %v1068 = vadd.f32 %v460, %v849
    %v1069 = vadd.f32 %v461, %v849
    %v1070 = vadd.f32 %v462, %v849
    %v1071 = vadd.f32 %v463, %v849
    %v1072 = vadd.f32 %v464, %v849
    %v1073 = vadd.f32 %v465, %v849
    %v1074 = vadd.f32 %v466, %v849
    %v1075 = vadd.f32 %v467, %v849
    %v1076 = vadd.f32 %v468, %v849
    %v1077 = vadd.f32 %v469, %v849
    %v1078 = vadd.f32 %v470, %v849
    %v1079 = vadd.f32 %v471, %v849
    %v1080 = vadd.f32 %v472, %v849
    %v1081 = vadd.f32 %v473, %v849
    %v1082 = vadd.f32 %v474, %v849
    %v1083 = vadd.f32 %v475, %v849
    %v1084 = vadd.f32 %v476, %v849
    %v1085 = vadd.f32 %v477, %v849
    %v1086 = vadd.f32 %v478, %v849
    %v1087 = vadd.f32 %v479, %v849
    %v1088 = vadd.f32 %v480, %v849
    %v1089 = vadd.f32 %v481, %v849
    %v1090 = vadd.f32 %v482, %v849
    %v1091 = vadd.f32 %v483, %v849
    %v1092 = vadd.f32 %v484, %v849
    %v1093 = vadd.f32 %v485, %v854
    %v1094 = vadd.f32 %v486, %v854
    %v1095 = vadd.f32 %v487, %v854
    %v1096 = vadd.f32 %v488, %v854
    %v1097 = vadd.f32 %v489, %v854
    %v1098 = vadd.f32 %v490, %v854
    %v1099 = vadd.f32 %v491, %v854
    %v1100 = vadd.f32 %v492, %v854
    %v1101 = vadd.f32 %v493, %v854
    %v1102 = vadd.f32 %v494, %v854
    %v1103 = vadd.f32 %v495, %v854
    %v1104 = vadd.f32 %v496, %v854
    %v1105 = vadd.f32 %v497, %v854
    %v1106 = vadd.f32 %v498, %v854
    %v1107 = vadd.f32 %v499, %v854
    %v1108 = vadd.f32 %v500, %v854
    %v1109 = vadd.f32 %v501, %v854
    %v1110 = vadd.f32 %v502, %v854
    %v1111 = vadd.f32 %v503, %v854
    %v1112 = vadd.f32 %v504, %v854
    %v1113 = vadd.f32 %v505, %v854
    %v1114 = vadd.f32 %v506, %v854
    %v1115 = vadd.f32 %v507, %v854
    %v1116 = vadd.f32 %v508, %v854
    %v1117 = vadd.f32 %v509, %v854
    %v1118 = vadd.f32 %v510, %v854
    %v1119 = vadd.f32 %v511, %v854
    %v1120 = vadd.f32 %v512, %v854
    %v1121 = vadd.f32 %v513, %v854
    %v1122 = vadd.f32 %v514, %v854
    %v1123 = vadd.f32 %v515, %v854
    %v1124 = vadd.f32 %v516, %v854
    %v1125 = vadd.f32 %v517, %v859
    %v1126 = vadd.f32 %v518, %v859
    %v1127 = vadd.f32 %v519, %v859
    %v1128 = vadd.f32 %v520, %v859
    %v1129 = vadd.f32 %v521, %v859
    %v1130 = vadd.f32 %v522, %v859
    %v1131 = vadd.f32 %v523, %v859
    %v1132 = vadd.f32 %v524, %v859
    %v1133 = vadd.f32 %v525, %v859
    %v1134 = vadd.f32 %v526, %v859
    %v1135 = vadd.f32 %v527, %v859
    %v1136 = vadd.f32 %v528, %v859
    %v1137 = vadd.f32 %v529, %v859
    %v1138 = vadd.f32 %v530, %v859
    %v1139 = vadd.f32 %v531, %v859
    %v1140 = vadd.f32 %v532, %v859
    %v1141 = vadd.f32 %v533, %v859
    %v1142 = vadd.f32 %v534, %v859
    %v1143 = vadd.f32 %v535, %v859
    %v1144 = vadd.f32 %v536, %v859
    %v1145 = vadd.f32 %v537, %v859
    %v1146 = vadd.f32 %v538, %v859
    %v1147 = vadd.f32 %v539, %v859
    %v1148 = vadd.f32 %v540, %v859
    %v1149 = vadd.f32 %v541, %v859
    %v1150 = vadd.f32 %v542, %v859
    %v1151 = vadd.f32 %v543, %v859
    %v1152 = vadd.f32 %v544, %v859
    %v1153 = vadd.f32 %v545, %v859
    %v1154 = vadd.f32 %v546, %v859
    %v1155 = vadd.f32 %v547, %v859
    %v1156 = vadd.f32 %v548, %v859
    %v1157 = vadd.f32 %v549, %v864
    %v1158 = vadd.f32 %v550, %v864
    %v1159 = vadd.f32 %v551, %v864
    %v1160 = vadd.f32 %v552, %v864
    %v1161 = vadd.f32 %v553, %v864
    %v1162 = vadd.f32 %v554, %v864
    %v1163 = vadd.f32 %v555, %v864
    %v1164 = vadd.f32 %v556, %v864
    %v1165 = vadd.f32 %v557, %v864
    %v1166 = vadd.f32 %v558, %v864
    %v1167 = vadd.f32 %v559, %v864
    %v1168 = vadd.f32 %v560, %v864
    %v1169 = vadd.f32 %v561, %v864
    %v1170 = vadd.f32 %v562, %v864
    %v1171 = vadd.f32 %v563, %v864
    %v1172 = vadd.f32 %v564, %v864
    %v1173 = vadd.f32 %v565, %v864
    %v1174 = vadd.f32 %v566, %v864
    %v1175 = vadd.f32 %v567, %v864
    %v1176 = vadd.f32 %v568, %v864
    %v1177 = vadd.f32 %v569, %v864
    %v1178 = vadd.f32 %v570, %v864
    %v1179 = vadd.f32 %v571, %v864
    %v1180 = vadd.f32 %v572, %v864
    %v1181 = vadd.f32 %v573, %v864
    %v1182 = vadd.f32 %v574, %v864
    %v1183 = vadd.f32 %v575, %v864
    %v1184 = vadd.f32 %v576, %v864
    %v1185 = vadd.f32 %v577, %v864
    %v1186 = vadd.f32 %v578, %v864
    %v1187 = vadd.f32 %v579, %v864
    %v1188 = vadd.f32 %v580, %v864
    %v1189 = vadd.f32 %v581, %v869
    %v1190 = vadd.f32 %v582, %v869
    %v1191 = vadd.f32 %v583, %v869
    %v1192 = vadd.f32 %v584, %v869
    %v1193 = vadd.f32 %v585, %v869
    %v1194 = vadd.f32 %v586, %v869
    %v1195 = vadd.f32 %v587, %v869
    %v1196 = vadd.f32 %v588, %v869
    %v1197 = vadd.f32 %v589, %v869
    %v1198 = vadd.f32 %v590, %v869
    %v1199 = vadd.f32 %v591, %v869
    %v1200 = vadd.f32 %v592, %v869
    %v1201 = vadd.f32 %v593, %v869
    %v1202 = vadd.f32 %v594, %v869
    %v1203 = vadd.f32 %v595, %v869
    %v1204 = vadd.f32 %v596, %v869
    %v1205 = vadd.f32 %v597, %v869
    %v1206 = vadd.f32 %v598, %v869
    %v1207 = vadd.f32 %v599, %v869
    %v1208 = vadd.f32 %v600, %v869
    %v1209 = vadd.f32 %v601, %v869
    %v1210 = vadd.f32 %v602, %v869
    %v1211 = vadd.f32 %v603, %v869
    %v1212 = vadd.f32 %v604, %v869
    %v1213 = vadd.f32 %v605, %v869
    %v1214 = vadd.f32 %v606, %v869
    %v1215 = vadd.f32 %v607, %v869
    %v1216 = vadd.f32 %v608, %v869
    %v1217 = vadd.f32 %v609, %v869
    %v1218 = vadd.f32 %v610, %v869
    %v1219 = vadd.f32 %v611, %v869
    %v1220 = vadd.f32 %v612, %v869
    %v1221 = vadd.f32 %v613, %v874
    %v1222 = vadd.f32 %v614, %v874
    %v1223 = vadd.f32 %v615, %v874
    %v1224 = vadd.f32 %v616, %v874
    %v1225 = vadd.f32 %v617, %v874
    %v1226 = vadd.f32 %v618, %v874
    %v1227 = vadd.f32 %v619, %v874
    %v1228 = vadd.f32 %v620, %v874
    %v1229 = vadd.f32 %v621, %v874
    %v1230 = vadd.f32 %v622, %v874
    %v1231 = vadd.f32 %v623, %v874
    %v1232 = vadd.f32 %v624, %v874
    %v1233 = vadd.f32 %v625, %v874
    %v1234 = vadd.f32 %v626, %v874
    %v1235 = vadd.f32 %v627, %v874
    %v1236 = vadd.f32 %v628, %v874
    %v1237 = vadd.f32 %v629, %v874
    %v1238 = vadd.f32 %v630, %v874
    %v1239 = vadd.f32 %v631, %v874
    %v1240 = vadd.f32 %v632, %v874
    %v1241 = vadd.f32 %v633, %v874
    %v1242 = vadd.f32 %v634, %v874
    %v1243 = vadd.f32 %v635, %v874
    %v1244 = vadd.f32 %v636, %v874
    %v1245 = vadd.f32 %v637, %v874
    %v1246 = vadd.f32 %v638, %v874
    %v1247 = vadd.f32 %v639, %v874
    %v1248 = vadd.f32 %v640, %v874
    %v1249 = vadd.f32 %v641, %v874
    %v1250 = vadd.f32 %v642, %v874
    %v1251 = vadd.f32 %v643, %v874
    %v1252 = vadd.f32 %v644, %v874
    %v1253 = vadd.f32 %v645, %v879
    %v1254 = vadd.f32 %v646, %v879
    %v1255 = vadd.f32 %v647, %v879
    %v1256 = vadd.f32 %v648, %v879
    %v1257 = vadd.f32 %v649, %v879
    %v1258 = vadd.f32 %v650, %v879
    %v1259 = vadd.f32 %v651, %v879
    %v1260 = vadd.f32 %v652, %v879
    %v1261 = vadd.f32 %v653, %v879
    %v1262 = vadd.f32 %v654, %v879
    %v1263 = vadd.f32 %v655, %v879
    %v1264 = vadd.f32 %v656, %v879
    %v1265 = vadd.f32 %v657, %v879
    %v1266 = vadd.f32 %v658, %v879
    %v1267 = vadd.f32 %v659, %v879
    %v1268 = vadd.f32 %v660, %v879
    %v1269 = vadd.f32 %v661, %v879
    %v1270 = vadd.f32 %v662, %v879
    %v1271 = vadd.f32 %v663, %v879
    %v1272 = vadd.f32 %v664, %v879
    %v1273 = vadd.f32 %v665, %v879
    %v1274 = vadd.f32 %v666, %v879
    %v1275 = vadd.f32 %v667, %v879
    %v1276 = vadd.f32 %v668, %v879
    %v1277 = vadd.f32 %v669, %v879
    %v1278 = vadd.f32 %v670, %v879
    %v1279 = vadd.f32 %v671, %v879
    %v1280 = vadd.f32 %v672, %v879
    %v1281 = vadd.f32 %v673, %v879
    %v1282 = vadd.f32 %v674, %v879
    %v1283 = vadd.f32 %v675, %v879
    %v1284 = vadd.f32 %v676, %v879
    %v1285 = vadd.f32 %v677, %v884
    %v1286 = vadd.f32 %v678, %v884
    %v1287 = vadd.f32 %v679, %v884
    %v1288 = vadd.f32 %v680, %v884
    %v1289 = vadd.f32 %v681, %v884
    %v1290 = vadd.f32 %v682, %v884
    %v1291 = vadd.f32 %v683, %v884
    %v1292 = vadd.f32 %v684, %v884
    %v1293 = vadd.f32 %v685, %v884
    %v1294 = vadd.f32 %v686, %v884
    %v1295 = vadd.f32 %v687, %v884
    %v1296 = vadd.f32 %v688, %v884
    %v1297 = vadd.f32 %v689, %v884
    %v1298 = vadd.f32 %v690, %v884
    %v1299 = vadd.f32 %v691, %v884
    %v1300 = vadd.f32 %v692, %v884
    %v1301 = vadd.f32 %v693, %v884
    %v1302 = vadd.f32 %v694, %v884
    %v1303 = vadd.f32 %v695, %v884
    %v1304 = vadd.f32 %v696, %v884
    %v1305 = vadd.f32 %v697, %v884
    %v1306 = vadd.f32 %v698, %v884
    %v1307 = vadd.f32 %v699, %v884
    %v1308 = vadd.f32 %v700, %v884
    %v1309 = vadd.f32 %v701, %v884
    %v1310 = vadd.f32 %v702, %v884
    %v1311 = vadd.f32 %v703, %v884
    %v1312 = vadd.f32 %v704, %v884
    %v1313 = vadd.f32 %v705, %v884
    %v1314 = vadd.f32 %v706, %v884
    %v1315 = vadd.f32 %v707, %v884
    %v1316 = vadd.f32 %v708, %v884
    %v1317 = vadd.f32 %v709, %v889
    %v1318 = vadd.f32 %v710, %v889
    %v1319 = vadd.f32 %v711, %v889
    %v1320 = vadd.f32 %v712, %v889
    %v1321 = vadd.f32 %v713, %v889
    %v1322 = vadd.f32 %v714, %v889
    %v1323 = vadd.f32 %v715, %v889
    %v1324 = vadd.f32 %v716, %v889
    %v1325 = vadd.f32 %v717, %v889
    %v1326 = vadd.f32 %v718, %v889
    %v1327 = vadd.f32 %v719, %v889
    %v1328 = vadd.f32 %v720, %v889
    %v1329 = vadd.f32 %v721, %v889
    %v1330 = vadd.f32 %v722, %v889
    %v1331 = vadd.f32 %v723, %v889
    %v1332 = vadd.f32 %v724, %v889
    %v1333 = vadd.f32 %v725, %v889
    %v1334 = vadd.f32 %v726, %v889
    %v1335 = vadd.f32 %v727, %v889
    %v1336 = vadd.f32 %v728, %v889
    %v1337 = vadd.f32 %v729, %v889
    %v1338 = vadd.f32 %v730, %v889
    %v1339 = vadd.f32 %v731, %v889
    %v1340 = vadd.f32 %v732, %v889
    %v1341 = vadd.f32 %v733, %v889
    %v1342 = vadd.f32 %v734, %v889
    %v1343 = vadd.f32 %v735, %v889
    %v1344 = vadd.f32 %v736, %v889
    %v1345 = vadd.f32 %v737, %v889
    %v1346 = vadd.f32 %v738, %v889
    %v1347 = vadd.f32 %v739, %v889
    %v1348 = vadd.f32 %v740, %v889
    %v1349 = vadd.f32 %v741, %v894
    %v1350 = vadd.f32 %v742, %v894
    %v1351 = vadd.f32 %v743, %v894
    %v1352 = vadd.f32 %v744, %v894
    %v1353 = vadd.f32 %v745, %v894
    %v1354 = vadd.f32 %v746, %v894
    %v1355 = vadd.f32 %v747, %v894
    %v1356 = vadd.f32 %v748, %v894
    %v1357 = vadd.f32 %v749, %v894
    %v1358 = vadd.f32 %v750, %v894
    %v1359 = vadd.f32 %v751, %v894
    %v1360 = vadd.f32 %v752, %v894
    %v1361 = vadd.f32 %v753, %v894
    %v1362 = vadd.f32 %v754, %v894
    %v1363 = vadd.f32 %v755, %v894
    %v1364 = vadd.f32 %v756, %v894
    %v1365 = vadd.f32 %v757, %v894
    %v1366 = vadd.f32 %v758, %v894
    %v1367 = vadd.f32 %v759, %v894
    %v1368 = vadd.f32 %v760, %v894
    %v1369 = vadd.f32 %v761, %v894
    %v1370 = vadd.f32 %v762, %v894
    %v1371 = vadd.f32 %v763, %v894
    %v1372 = vadd.f32 %v764, %v894
    %v1373 = vadd.f32 %v765, %v894
    %v1374 = vadd.f32 %v766, %v894
    %v1375 = vadd.f32 %v767, %v894
    %v1376 = vadd.f32 %v768, %v894
    %v1377 = vadd.f32 %v769, %v894
    %v1378 = vadd.f32 %v770, %v894
    %v1379 = vadd.f32 %v771, %v894
    %v1380 = vadd.f32 %v772, %v894
    %v1381 = vadd.f32 %v773, %v899
    %v1382 = vadd.f32 %v774, %v899
    %v1383 = vadd.f32 %v775, %v899
    %v1384 = vadd.f32 %v776, %v899
    %v1385 = vadd.f32 %v777, %v899
    %v1386 = vadd.f32 %v778, %v899
    %v1387 = vadd.f32 %v779, %v899
    %v1388 = vadd.f32 %v780, %v899
    %v1389 = vadd.f32 %v781, %v899
    %v1390 = vadd.f32 %v782, %v899
    %v1391 = vadd.f32 %v783, %v899
    %v1392 = vadd.f32 %v784, %v899
    %v1393 = vadd.f32 %v785, %v899
    %v1394 = vadd.f32 %v786, %v899
    %v1395 = vadd.f32 %v787, %v899
    %v1396 = vadd.f32 %v788, %v899
    %v1397 = vadd.f32 %v789, %v899
    %v1398 = vadd.f32 %v790, %v899
    %v1399 = vadd.f32 %v791, %v899
    %v1400 = vadd.f32 %v792, %v899
    %v1401 = vadd.f32 %v793, %v899
    %v1402 = vadd.f32 %v794, %v899
    %v1403 = vadd.f32 %v795, %v899
    %v1404 = vadd.f32 %v796, %v899
    %v1405 = vadd.f32 %v797, %v899
    %v1406 = vadd.f32 %v798, %v899
    %v1407 = vadd.f32 %v799, %v899
    %v1408 = vadd.f32 %v800, %v899
    %v1409 = vadd.f32 %v801, %v899
    %v1410 = vadd.f32 %v802, %v899
    %v1411 = vadd.f32 %v803, %v899
    %v1412 = vadd.f32 %v804, %v899
    %v1413 = vmax.f32 %v901, 0.0
    %v1414 = vmax.f32 %v902, 0.0
    %v1415 = vmax.f32 %v903, 0.0
    %v1416 = vmax.f32 %v904, 0.0
    %v1417 = vmax.f32 %v905, 0.0
    %v1418 = vmax.f32 %v906, 0.0
    %v1419 = vmax.f32 %v907, 0.0
    %v1420 = vmax.f32 %v908, 0.0
    %v1421 = vmax.f32 %v909, 0.0
    %v1422 = vmax.f32 %v910, 0.0
    %v1423 = vmax.f32 %v911, 0.0
    %v1424 = vmax.f32 %v912, 0.0
    %v1425 = vmax.f32 %v913, 0.0
    %v1426 = vmax.f32 %v914, 0.0
    %v1427 = vmax.f32 %v915, 0.0
    %v1428 = vmax.f32 %v916, 0.0
    %v1429 = vmax.f32 %v917, 0.0
    %v1430 = vmax.f32 %v918, 0.0
    %v1431 = vmax.f32 %v919, 0.0
    %v1432 = vmax.f32 %v920, 0.0
    %v1433 = vmax.f32 %v921, 0.0
    %v1434 = vmax.f32 %v922, 0.0
    %v1435 = vmax.f32 %v923, 0.0
    %v1436 = vmax.f32 %v924, 0.0
    %v1437 = vmax.f32 %v925, 0.0
    %v1438 = vmax.f32 %v926, 0.0
    %v1439 = vmax.f32 %v927, 0.0
    %v1440 = vmax.f32 %v928, 0.0
    %v1441 = vmax.f32 %v929, 0.0
    %v1442 = vmax.f32 %v930, 0.0
    %v1443 = vmax.f32 %v931, 0.0
    %v1444 = vmax.f32 %v932, 0.0
    %v1445 = vmax.f32 %v933, 0.0
    %v1446 = vmax.f32 %v934, 0.0
    %v1447 = vmax.f32 %v935, 0.0
    %v1448 = vmax.f32 %v936, 0.0
    %v1449 = vmax.f32 %v937, 0.0
    %v1450 = vmax.f32 %v938, 0.0
    %v1451 = vmax.f32 %v939, 0.0
    %v1452 = vmax.f32 %v940, 0.0
    %v1453 = vmax.f32 %v941, 0.0
    %v1454 = vmax.f32 %v942, 0.0
    %v1455 = vmax.f32 %v943, 0.0
    %v1456 = vmax.f32 %v944, 0.0
    %v1457 = vmax.f32 %v945, 0.0
    %v1458 = vmax.f32 %v946, 0.0
    %v1459 = vmax.f32 %v947, 0.0
    %v1460 = vmax.f32 %v948, 0.0
    %v1461 = vmax.f32 %v949, 0.0
    %v1462 = vmax.f32 %v950, 0.0
    %v1463 = vmax.f32 %v951, 0.0
    %v1464 = vmax.f32 %v952, 0.0
    %v1465 = vmax.f32 %v953, 0.0
    %v1466 = vmax.f32 %v954, 0.0
    %v1467 = vmax.f32 %v955, 0.0
    %v1468 = vmax.f32 %v956, 0.0
    %v1469 = vmax.f32 %v957, 0.0
    %v1470 = vmax.f32 %v958, 0.0
    %v1471 = vmax.f32 %v959, 0.0
    %v1472 = vmax.f32 %v960, 0.0
    %v1473 = vmax.f32 %v961, 0.0
    %v1474 = vmax.f32 %v962, 0.0
    %v1475 = vmax.f32 %v963, 0.0
    %v1476 = vmax.f32 %v964, 0.0
    %v1477 = vmax.f32 %v965, 0.0
    %v1478 = vmax.f32 %v966, 0.0
    %v1479 = vmax.f32 %v967, 0.0
    %v1480 = vmax.f32 %v968, 0.0
    %v1481 = vmax.f32 %v969, 0.0
    %v1482 = vmax.f32 %v970, 0.0
    %v1483 = vmax.f32 %v971, 0.0
    %v1484 = vmax.f32 %v972, 0.0
    %v1485 = vmax.f32 %v973, 0.0
    %v1486 = vmax.f32 %v974, 0.0
    %v1487 = vmax.f32 %v975, 0.0
    %v1488 = vmax.f32 %v976, 0.0
    %v1489 = vmax.f32 %v977, 0.0
    %v1490 = vmax.f32 %v978, 0.0
    %v1491 = vmax.f32 %v979, 0.0
    %v1492 = vmax.f32 %v980, 0.0
    %v1493 = vmax.f32 %v981, 0.0
    %v1494 = vmax.f32 %v982, 0.0
    %v1495 = vmax.f32 %v983, 0.0
    %v1496 = vmax.f32 %v984, 0.0
    %v1497 = vmax.f32 %v985, 0.0
    %v1498 = vmax.f32 %v986, 0.0
    %v1499 = vmax.f32 %v987, 0.0
    %v1500 = vmax.f32 %v988, 0.0
    %v1501 = vmax.f32 %v989, 0.0
    %v1502 = vmax.f32 %v990, 0.0
    %v1503 = vmax.f32 %v991, 0.0
    %v1504 = vmax.f32 %v992, 0.0
    %v1505 = vmax.f32 %v993, 0.0
    %v1506 = vmax.f32 %v994, 0.0
    %v1507 = vmax.f32 %v995, 0.0
    %v1508 = vmax.f32 %v996, 0.0
    %v1509 = vmax.f32 %v997, 0.0
    %v1510 = vmax.f32 %v998, 0.0
    %v1511 = vmax.f32 %v999, 0.0
    %v1512 = vmax.f32 %v1000, 0.0
    %v1513 = vmax.f32 %v1001, 0.0
    %v1514 = vmax.f32 %v1002, 0.0
    %v1515 = vmax.f32 %v1003, 0.0
    %v1516 = vmax.f32 %v1004, 0.0
    %v1517 = vmax.f32 %v1005, 0.0
    %v1518 = vmax.f32 %v1006, 0.0
    %v1519 = vmax.f32 %v1007, 0.0
    %v1520 = vmax.f32 %v1008, 0.0
    %v1521 = vmax.f32 %v1009, 0.0
    %v1522 = vmax.f32 %v1010, 0.0
    %v1523 = vmax.f32 %v1011, 0.0
    %v1524 = vmax.f32 %v1012, 0.0
    %v1525 = vmax.f32 %v1013, 0.0
    %v1526 = vmax.f32 %v1014, 0.0
    %v1527 = vmax.f32 %v1015, 0.0
    %v1528 = vmax.f32 %v1016, 0.0
    %v1529 = vmax.f32 %v1017, 0.0
    %v1530 = vmax.f32 %v1018, 0.0
    %v1531 = vmax.f32 %v1019, 0.0
    %v1532 = vmax.f32 %v1020, 0.0
    %v1533 = vmax.f32 %v1021, 0.0
    %v1534 = vmax.f32 %v1022, 0.0
    %v1535 = vmax.f32 %v1023, 0.0
    %v1536 = vmax.f32 %v1024, 0.0
    %v1537 = vmax.f32 %v1025, 0.0
    %v1538 = vmax.f32 %v1026, 0.0
    %v1539 = vmax.f32 %v1027, 0.0
    %v1540 = vmax.f32 %v1028, 0.0
    %v1541 = vmax.f32 %v1029, 0.0
    %v1542 = vmax.f32 %v1030, 0.0
    %v1543 = vmax.f32 %v1031, 0.0
    %v1544 = vmax.f32 %v1032, 0.0
    %v1545 = vmax.f32 %v1033, 0.0
    %v1546 = vmax.f32 %v1034, 0.0
    %v1547 = vmax.f32 %v1035, 0.0
    %v1548 = vmax.f32 %v1036, 0.0
    %v1549 = vmax.f32 %v1037, 0.0
    %v1550 = vmax.f32 %v1038, 0.0
    %v1551 = vmax.f32 %v1039, 0.0
    %v1552 = vmax.f32 %v1040, 0.0
    %v1553 = vmax.f32 %v1041, 0.0
    %v1554 = vmax.f32 %v1042, 0.0
    %v1555 = vmax.f32 %v1043, 0.0
    %v1556 = vmax.f32 %v1044, 0.0
    %v1557 = vmax.f32 %v1045, 0.0
    %v1558 = vmax.f32 %v1046, 0.0
    %v1559 = vmax.f32 %v1047, 0.0
    %v1560 = vmax.f32 %v1048, 0.0
    %v1561 = vmax.f32 %v1049, 0.0
    %v1562 = vmax.f32 %v1050, 0.0
    %v1563 = vmax.f32 %v1051, 0.0
    %v1564 = vmax.f32 %v1052, 0.0
    %v1565 = vmax.f32 %v1053, 0.0
    %v1566 = vmax.f32 %v1054, 0.0
    %v1567 = vmax.f32 %v1055, 0.0
    %v1568 = vmax.f32 %v1056, 0.0
    %v1569 = vmax.f32 %v1057, 0.0
    %v1570 = vmax.f32 %v1058, 0.0
    %v1571 = vmax.f32 %v1059, 0.0
    %v1572 = vmax.f32 %v1060, 0.0
    %v1573 = vmax.f32 %v1061, 0.0
    %v1574 = vmax.f32 %v1062, 0.0
    %v1575 = vmax.f32 %v1063, 0.0
    %v1576 = vmax.f32 %v1064, 0.0
    %v1577 = vmax.f32 %v1065, 0.0
    %v1578 = vmax.f32 %v1066, 0.0
    %v1579 = vmax.f32 %v1067, 0.0
    %v1580 = vmax.f32 %v1068, 0.0
    %v1581 = vmax.f32 %v1069, 0.0
    %v1582 = vmax.f32 %v1070, 0.0
    %v1583 = vmax.f32 %v1071, 0.0
    %v1584 = vmax.f32 %v1072, 0.0
    %v1585 = vmax.f32 %v1073, 0.0
    %v1586 = vmax.f32 %v1074, 0.0
    %v1587 = vmax.f32 %v1075, 0.0
    %v1588 = vmax.f32 %v1076, 0.0
    %v1589 = vmax.f32 %v1077, 0.0
    %v1590 = vmax.f32 %v1078, 0.0
    %v1591 = vmax.f32 %v1079, 0.0
    %v1592 = vmax.f32 %v1080, 0.0
    %v1593 = vmax.f32 %v1081, 0.0
    %v1594 = vmax.f32 %v1082, 0.0
    %v1595 = vmax.f32 %v1083, 0.0
    %v1596 = vmax.f32 %v1084, 0.0
    %v1597 = vmax.f32 %v1085, 0.0
    %v1598 = vmax.f32 %v1086, 0.0
    %v1599 = vmax.f32 %v1087, 0.0
    %v1600 = vmax.f32 %v1088, 0.0
    %v1601 = vmax.f32 %v1089, 0.0
    %v1602 = vmax.f32 %v1090, 0.0
    %v1603 = vmax.f32 %v1091, 0.0
    %v1604 = vmax.f32 %v1092, 0.0
    %v1605 = vmax.f32 %v1093, 0.0
    %v1606 = vmax.f32 %v1094, 0.0
    %v1607 = vmax.f32 %v1095, 0.0
    %v1608 = vmax.f32 %v1096, 0.0
    %v1609 = vmax.f32 %v1097, 0.0
    %v1610 = vmax.f32 %v1098, 0.0
    %v1611 = vmax.f32 %v1099, 0.0
    %v1612 = vmax.f32 %v1100, 0.0
    %v1613 = vmax.f32 %v1101, 0.0
    %v1614 = vmax.f32 %v1102, 0.0
    %v1615 = vmax.f32 %v1103, 0.0
    %v1616 = vmax.f32 %v1104, 0.0
    %v1617 = vmax.f32 %v1105, 0.0
    %v1618 = vmax.f32 %v1106, 0.0
    %v1619 = vmax.f32 %v1107, 0.0
    %v1620 = vmax.f32 %v1108, 0.0
    %v1621 = vmax.f32 %v1109, 0.0
    %v1622 = vmax.f32 %v1110, 0.0
    %v1623 = vmax.f32 %v1111, 0.0
    %v1624 = vmax.f32 %v1112, 0.0
    %v1625 = vmax.f32 %v1113, 0.0
    %v1626 = vmax.f32 %v1114, 0.0
    %v1627 = vmax.f32 %v1115, 0.0
    %v1628 = vmax.f32 %v1116, 0.0
    %v1629 = vmax.f32 %v1117, 0.0
    %v1630 = vmax.f32 %v1118, 0.0
    %v1631 = vmax.f32 %v1119, 0.0
    %v1632 = vmax.f32 %v1120, 0.0
    %v1633 = vmax.f32 %v1121, 0.0
    %v1634 = vmax.f32 %v1122, 0.0
    %v1635 = vmax.f32 %v1123, 0.0
    %v1636 = vmax.f32 %v1124, 0.0
    %v1637 = vmax.f32 %v1125, 0.0
    %v1638 = vmax.f32 %v1126, 0.0
    %v1639 = vmax.f32 %v1127, 0.0
    %v1640 = vmax.f32 %v1128, 0.0
    %v1641 = vmax.f32 %v1129, 0.0
    %v1642 = vmax.f32 %v1130, 0.0
    %v1643 = vmax.f32 %v1131, 0.0
    %v1644 = vmax.f32 %v1132, 0.0
    %v1645 = vmax.f32 %v1133, 0.0
    %v1646 = vmax.f32 %v1134, 0.0
    %v1647 = vmax.f32 %v1135, 0.0
    %v1648 = vmax.f32 %v1136, 0.0
    %v1649 = vmax.f32 %v1137, 0.0
    %v1650 = vmax.f32 %v1138, 0.0
    %v1651 = vmax.f32 %v1139, 0.0
    %v1652 = vmax.f32 %v1140, 0.0
    %v1653 = vmax.f32 %v1141, 0.0
    %v1654 = vmax.f32 %v1142, 0.0
    %v1655 = vmax.f32 %v1143, 0.0
    %v1656 = vmax.f32 %v1144, 0.0
    %v1657 = vmax.f32 %v1145, 0.0
    %v1658 = vmax.f32 %v1146, 0.0
    %v1659 = vmax.f32 %v1147, 0.0
    %v1660 = vmax.f32 %v1148, 0.0
    %v1661 = vmax.f32 %v1149, 0.0
    %v1662 = vmax.f32 %v1150, 0.0
    %v1663 = vmax.f32 %v1151, 0.0
    %v1664 = vmax.f32 %v1152, 0.0
    %v1665 = vmax.f32 %v1153, 0.0
    %v1666 = vmax.f32 %v1154, 0.0
    %v1667 = vmax.f32 %v1155, 0.0
    %v1668 = vmax.f32 %v1156, 0.0
    %v1669 = vmax.f32 %v1157, 0.0
    %v1670 = vmax.f32 %v1158, 0.0
    %v1671 = vmax.f32 %v1159, 0.0
    %v1672 = vmax.f32 %v1160, 0.0
    %v1673 = vmax.f32 %v1161, 0.0
    %v1674 = vmax.f32 %v1162, 0.0
    %v1675 = vmax.f32 %v1163, 0.0
    %v1676 = vmax.f32 %v1164, 0.0
    %v1677 = vmax.f32 %v1165, 0.0
    %v1678 = vmax.f32 %v1166, 0.0
    %v1679 = vmax.f32 %v1167, 0.0
    %v1680 = vmax.f32 %v1168, 0.0
    %v1681 = vmax.f32 %v1169, 0.0
    %v1682 = vmax.f32 %v1170, 0.0
    %v1683 = vmax.f32 %v1171, 0.0
    %v1684 = vmax.f32 %v1172, 0.0
    %v1685 = vmax.f32 %v1173, 0.0
    %v1686 = vmax.f32 %v1174, 0.0
    %v1687 = vmax.f32 %v1175, 0.0
    %v1688 = vmax.f32 %v1176, 0.0
    %v1689 = vmax.f32 %v1177, 0.0
    %v1690 = vmax.f32 %v1178, 0.0
    %v1691 = vmax.f32 %v1179, 0.0
    %v1692 = vmax.f32 %v1180, 0.0
    %v1693 = vmax.f32 %v1181, 0.0
    %v1694 = vmax.f32 %v1182, 0.0
    %v1695 = vmax.f32 %v1183, 0.0
    %v1696 = vmax.f32 %v1184, 0.0
    %v1697 = vmax.f32 %v1185, 0.0
    %v1698 = vmax.f32 %v1186, 0.0
    %v1699 = vmax.f32 %v1187, 0.0
    %v1700 = vmax.f32 %v1188, 0.0
    %v1701 = vmax.f32 %v1189, 0.0
    %v1702 = vmax.f32 %v1190, 0.0
    %v1703 = vmax.f32 %v1191, 0.0
    %v1704 = vmax.f32 %v1192, 0.0
    %v1705 = vmax.f32 %v1193, 0.0
    %v1706 = vmax.f32 %v1194, 0.0
    %v1707 = vmax.f32 %v1195, 0.0
    %v1708 = vmax.f32 %v1196, 0.0
    %v1709 = vmax.f32 %v1197, 0.0
    %v1710 = vmax.f32 %v1198, 0.0
    %v1711 = vmax.f32 %v1199, 0.0
    %v1712 = vmax.f32 %v1200, 0.0
    %v1713 = vmax.f32 %v1201, 0.0
    %v1714 = vmax.f32 %v1202, 0.0
    %v1715 = vmax.f32 %v1203, 0.0
    %v1716 = vmax.f32 %v1204, 0.0
    %v1717 = vmax.f32 %v1205, 0.0
    %v1718 = vmax.f32 %v1206, 0.0
    %v1719 = vmax.f32 %v1207, 0.0
    %v1720 = vmax.f32 %v1208, 0.0
    %v1721 = vmax.f32 %v1209, 0.0
    %v1722 = vmax.f32 %v1210, 0.0
    %v1723 = vmax.f32 %v1211, 0.0
    %v1724 = vmax.f32 %v1212, 0.0
    %v1725 = vmax.f32 %v1213, 0.0
    %v1726 = vmax.f32 %v1214, 0.0
    %v1727 = vmax.f32 %v1215, 0.0
    %v1728 = vmax.f32 %v1216, 0.0
    %v1729 = vmax.f32 %v1217, 0.0
    %v1730 = vmax.f32 %v1218, 0.0
    %v1731 = vmax.f32 %v1219, 0.0
    %v1732 = vmax.f32 %v1220, 0.0
    %v1733 = vmax.f32 %v1221, 0.0
    %v1734 = vmax.f32 %v1222, 0.0
    %v1735 = vmax.f32 %v1223, 0.0
    %v1736 = vmax.f32 %v1224, 0.0
    %v1737 = vmax.f32 %v1225, 0.0
    %v1738 = vmax.f32 %v1226, 0.0
    %v1739 = vmax.f32 %v1227, 0.0
    %v1740 = vmax.f32 %v1228, 0.0
    %v1741 = vmax.f32 %v1229, 0.0
    %v1742 = vmax.f32 %v1230, 0.0
    %v1743 = vmax.f32 %v1231, 0.0
    %v1744 = vmax.f32 %v1232, 0.0
    %v1745 = vmax.f32 %v1233, 0.0
    %v1746 = vmax.f32 %v1234, 0.0
    %v1747 = vmax.f32 %v1235, 0.0
    %v1748 = vmax.f32 %v1236, 0.0
    %v1749 = vmax.f32 %v1237, 0.0
    %v1750 = vmax.f32 %v1238, 0.0
    %v1751 = vmax.f32 %v1239, 0.0
    %v1752 = vmax.f32 %v1240, 0.0
    %v1753 = vmax.f32 %v1241, 0.0
    %v1754 = vmax.f32 %v1242, 0.0
    %v1755 = vmax.f32 %v1243, 0.0
    %v1756 = vmax.f32 %v1244, 0.0
    %v1757 = vmax.f32 %v1245, 0.0
    %v1758 = vmax.f32 %v1246, 0.0
    %v1759 = vmax.f32 %v1247, 0.0
    %v1760 = vmax.f32 %v1248, 0.0
    %v1761 = vmax.f32 %v1249, 0.0
    %v1762 = vmax.f32 %v1250, 0.0
    %v1763 = vmax.f32 %v1251, 0.0
    %v1764 = vmax.f32 %v1252, 0.0
    %v1765 = vmax.f32 %v1253, 0.0
    %v1766 = vmax.f32 %v1254, 0.0
    %v1767 = vmax.f32 %v1255, 0.0
    %v1768 = vmax.f32 %v1256, 0.0
    %v1769 = vmax.f32 %v1257, 0.0
    %v1770 = vmax.f32 %v1258, 0.0
    %v1771 = vmax.f32 %v1259, 0.0
    %v1772 = vmax.f32 %v1260, 0.0
    %v1773 = vmax.f32 %v1261, 0.0
    %v1774 = vmax.f32 %v1262, 0.0
    %v1775 = vmax.f32 %v1263, 0.0
    %v1776 = vmax.f32 %v1264, 0.0
    %v1777 = vmax.f32 %v1265, 0.0
    %v1778 = vmax.f32 %v1266, 0.0
    %v1779 = vmax.f32 %v1267, 0.0
    %v1780 = vmax.f32 %v1268, 0.0
    %v1781 = vmax.f32 %v1269, 0.0
    %v1782 = vmax.f32 %v1270, 0.0
    %v1783 = vmax.f32 %v1271, 0.0
    %v1784 = vmax.f32 %v1272, 0.0
    %v1785 = vmax.f32 %v1273, 0.0
    %v1786 = vmax.f32 %v1274, 0.0
    %v1787 = vmax.f32 %v1275, 0.0
    %v1788 = vmax.f32 %v1276, 0.0
    %v1789 = vmax.f32 %v1277, 0.0
    %v1790 = vmax.f32 %v1278, 0.0
    %v1791 = vmax.f32 %v1279, 0.0
    %v1792 = vmax.f32 %v1280, 0.0
    %v1793 = vmax.f32 %v1281, 0.0
    %v1794 = vmax.f32 %v1282, 0.0
    %v1795 = vmax.f32 %v1283, 0.0
    %v1796 = vmax.f32 %v1284, 0.0
    %v1797 = vmax.f32 %v1285, 0.0
    %v1798 = vmax.f32 %v1286, 0.0
    %v1799 = vmax.f32 %v1287, 0.0
    %v1800 = vmax.f32 %v1288, 0.0
    %v1801 = vmax.f32 %v1289, 0.0
    %v1802 = vmax.f32 %v1290, 0.0
    %v1803 = vmax.f32 %v1291, 0.0
    %v1804 = vmax.f32 %v1292, 0.0
    %v1805 = vmax.f32 %v1293, 0.0
    %v1806 = vmax.f32 %v1294, 0.0
    %v1807 = vmax.f32 %v1295, 0.0
    %v1808 = vmax.f32 %v1296, 0.0
    %v1809 = vmax.f32 %v1297, 0.0
    %v1810 = vmax.f32 %v1298, 0.0
    %v1811 = vmax.f32 %v1299, 0.0
    %v1812 = vmax.f32 %v1300, 0.0
    %v1813 = vmax.f32 %v1301, 0.0
    %v1814 = vmax.f32 %v1302, 0.0
    %v1815 = vmax.f32 %v1303, 0.0
    %v1816 = vmax.f32 %v1304, 0.0
    %v1817 = vmax.f32 %v1305, 0.0
    %v1818 = vmax.f32 %v1306, 0.0
    %v1819 = vmax.f32 %v1307, 0.0
    %v1820 = vmax.f32 %v1308, 0.0
    %v1821 = vmax.f32 %v1309, 0.0
    %v1822 = vmax.f32 %v1310, 0.0
    %v1823 = vmax.f32 %v1311, 0.0
    %v1824 = vmax.f32 %v1312, 0.0
    %v1825 = vmax.f32 %v1313, 0.0
    %v1826 = vmax.f32 %v1314, 0.0
    %v1827 = vmax.f32 %v1315, 0.0
    %v1828 = vmax.f32 %v1316, 0.0
    %v1829 = vmax.f32 %v1317, 0.0
    %v1830 = vmax.f32 %v1318, 0.0
    %v1831 = vmax.f32 %v1319, 0.0
    %v1832 = vmax.f32 %v1320, 0.0
    %v1833 = vmax.f32 %v1321, 0.0
    %v1834 = vmax.f32 %v1322, 0.0
    %v1835 = vmax.f32 %v1323, 0.0
    %v1836 = vmax.f32 %v1324, 0.0
    %v1837 = vmax.f32 %v1325, 0.0
    %v1838 = vmax.f32 %v1326, 0.0
    %v1839 = vmax.f32 %v1327, 0.0
    %v1840 = vmax.f32 %v1328, 0.0
    %v1841 = vmax.f32 %v1329, 0.0
    %v1842 = vmax.f32 %v1330, 0.0
    %v1843 = vmax.f32 %v1331, 0.0
    %v1844 = vmax.f32 %v1332, 0.0
    %v1845 = vmax.f32 %v1333, 0.0
    %v1846 = vmax.f32 %v1334, 0.0
    %v1847 = vmax.f32 %v1335, 0.0
    %v1848 = vmax.f32 %v1336, 0.0
    %v1849 = vmax.f32 %v1337, 0.0
    %v1850 = vmax.f32 %v1338, 0.0
    %v1851 = vmax.f32 %v1339, 0.0
    %v1852 = vmax.f32 %v1340, 0.0
    %v1853 = vmax.f32 %v1341, 0.0
    %v1854 = vmax.f32 %v1342, 0.0
    %v1855 = vmax.f32 %v1343, 0.0
    %v1856 = vmax.f32 %v1344, 0.0
    %v1857 = vmax.f32 %v1345, 0.0
    %v1858 = vmax.f32 %v1346, 0.0
    %v1859 = vmax.f32 %v1347, 0.0
    %v1860 = vmax.f32 %v1348, 0.0
    %v1861 = vmax.f32 %v1349, 0.0
    %v1862 = vmax.f32 %v1350, 0.0
    %v1863 = vmax.f32 %v1351, 0.0
    %v1864 = vmax.f32 %v1352, 0.0
    %v1865 = vmax.f32 %v1353, 0.0
    %v1866 = vmax.f32 %v1354, 0.0
    %v1867 = vmax.f32 %v1355, 0.0
    %v1868 = vmax.f32 %v1356, 0.0
    %v1869 = vmax.f32 %v1357, 0.0
    %v1870 = vmax.f32 %v1358, 0.0
    %v1871 = vmax.f32 %v1359, 0.0
    %v1872 = vmax.f32 %v1360, 0.0
    %v1873 = vmax.f32 %v1361, 0.0
    %v1874 = vmax.f32 %v1362, 0.0
    %v1875 = vmax.f32 %v1363, 0.0
    %v1876 = vmax.f32 %v1364, 0.0
    %v1877 = vmax.f32 %v1365, 0.0
    %v1878 = vmax.f32 %v1366, 0.0
    %v1879 = vmax.f32 %v1367, 0.0
    %v1880 = vmax.f32 %v1368, 0.0
    %v1881 = vmax.f32 %v1369, 0.0
    %v1882 = vmax.f32 %v1370, 0.0
    %v1883 = vmax.f32 %v1371, 0.0
    %v1884 = vmax.f32 %v1372, 0.0
    %v1885 = vmax.f32 %v1373, 0.0
    %v1886 = vmax.f32 %v1374, 0.0
    %v1887 = vmax.f32 %v1375, 0.0
    %v1888 = vmax.f32 %v1376, 0.0
    %v1889 = vmax.f32 %v1377, 0.0
    %v1890 = vmax.f32 %v1378, 0.0
    %v1891 = vmax.f32 %v1379, 0.0
    %v1892 = vmax.f32 %v1380, 0.0
    %v1893 = vmax.f32 %v1381, 0.0
    %v1894 = vmax.f32 %v1382, 0.0
    %v1895 = vmax.f32 %v1383, 0.0
    %v1896 = vmax.f32 %v1384, 0.0
    %v1897 = vmax.f32 %v1385, 0.0
    %v1898 = vmax.f32 %v1386, 0.0
    %v1899 = vmax.f32 %v1387, 0.0
    %v1900 = vmax.f32 %v1388, 0.0
    %v1901 = vmax.f32 %v1389, 0.0
    %v1902 = vmax.f32 %v1390, 0.0
    %v1903 = vmax.f32 %v1391, 0.0
    %v1904 = vmax.f32 %v1392, 0.0
    %v1905 = vmax.f32 %v1393, 0.0
    %v1906 = vmax.f32 %v1394, 0.0
    %v1907 = vmax.f32 %v1395, 0.0
    %v1908 = vmax.f32 %v1396, 0.0
    %v1909 = vmax.f32 %v1397, 0.0
    %v1910 = vmax.f32 %v1398, 0.0
    %v1911 = vmax.f32 %v1399, 0.0
    %v1912 = vmax.f32 %v1400, 0.0
    %v1913 = vmax.f32 %v1401, 0.0
    %v1914 = vmax.f32 %v1402, 0.0
    %v1915 = vmax.f32 %v1403, 0.0
    %v1916 = vmax.f32 %v1404, 0.0
    %v1917 = vmax.f32 %v1405, 0.0
    %v1918 = vmax.f32 %v1406, 0.0
    %v1919 = vmax.f32 %v1407, 0.0
    %v1920 = vmax.f32 %v1408, 0.0
    %v1921 = vmax.f32 %v1409, 0.0
    %v1922 = vmax.f32 %v1410, 0.0
    %v1923 = vmax.f32 %v1411, 0.0
    %v1924 = vmax.f32 %v1412, 0.0
    %v1925 = vld [vmem:[%s3] sm:$0xff]
    %v1926 = vld [vmem:[%s3 + $0x8] sm:$0xff]
    %v1927 = vld [vmem:[%s3 + $0x10] sm:$0xff]
    %v1928 = vld [vmem:[%s3 + $0x18] sm:$0xff]
    %v1929 = vld [vmem:[%s4] sm:$0xff]
    %v1930 = vld [vmem:[%s4 + $0x8] sm:$0xff]
    %v1931 = vld [vmem:[%s4 + $0x10] sm:$0xff]
    %v1932 = vld [vmem:[%s4 + $0x18] sm:$0xff]
    %1934 = vset.pattern.permute.xlu0 0
    %1935 = vperm.xlu0 %1934, %v1929
    %v1936 = vpop.permute.xlu0 %1935
    %1939 = vset.pattern.permute.xlu0 0
    %1940 = vperm.xlu0 %1939, %v1930
    %v1941 = vpop.permute.xlu0 %1940
    %1944 = vset.pattern.permute.xlu0 0
    %1945 = vperm.xlu0 %1944, %v1931
    %v1946 = vpop.permute.xlu0 %1945
    %1949 = vset.pattern.permute.xlu0 0
    %1950 = vperm.xlu0 %1949, %v1932
    %v1951 = vpop.permute.xlu0 %1950
    %1953 = vmatprep.subr.mxu0 %v1414
    %1954 = vmatpush1.msra.mxu0 %v1413
    %1955 = vmatprep.subr.mxu0 %v1446
    %1956 = vmatpush1.msra.mxu0 %v1445
    %1957 = vmatprep.subr.mxu0 %v1478
    %1958 = vmatpush1.msra.mxu0 %v1477
    %1959 = vmatprep.subr.mxu0 %v1510
    %1960 = vmatpush1.msra.mxu0 %v1509
    %1961 = vmatprep.subr.mxu0 %v1542
    %1962 = vmatpush1.msra.mxu0 %v1541
    %1963 = vmatprep.subr.mxu0 %v1574
    %1964 = vmatpush1.msra.mxu0 %v1573
    %1965 = vmatprep.subr.mxu0 %v1606
    %1966 = vmatpush1.msra.mxu0 %v1605
    %1967 = vmatprep.subr.mxu0 %v1638
    %1968 = vmatpush1.msra.mxu0 %v1637
    %1969 = vmatprep.subr.mxu0 %v1670
    %1970 = vmatpush1.msra.mxu0 %v1669
    %1971 = vmatprep.subr.mxu0 %v1702
    %1972 = vmatpush1.msra.mxu0 %v1701
    %1973 = vmatprep.subr.mxu0 %v1734
    %1974 = vmatpush1.msra.mxu0 %v1733
    %1975 = vmatprep.subr.mxu0 %v1766
    %1976 = vmatpush1.msra.mxu0 %v1765
    %1977 = vmatprep.subr.mxu0 %v1798
    %1978 = vmatpush1.msra.mxu0 %v1797
    %1979 = vmatprep.subr.mxu0 %v1830
    %1980 = vmatpush1.msra.mxu0 %v1829
    %1981 = vmatprep.subr.mxu0 %v1862
    %1982 = vmatpush1.msra.mxu0 %v1861
    %1983 = vmatprep.subr.mxu0 %v1894
    %1984 = vmatpush1.msra.mxu0 %v1893
    %1985 = vmatprep.subr.mxu0 0.0
    %1986 = vmatpush1.msra.mxu0 0.0
    %1987 = vmatprep.subr.mxu0 0.0
    %1988 = vmatpush1.msra.mxu0 0.0
    %1989 = vmatprep.subr.mxu0 0.0
    %1990 = vmatpush1.msra.mxu0 0.0
    %1991 = vmatprep.subr.mxu0 0.0
    %1992 = vmatpush1.msra.mxu0 0.0
    %1993 = vmatprep.subr.mxu0 0.0
    %1994 = vmatpush1.msra.mxu0 0.0
    %1995 = vmatprep.subr.mxu0 0.0
    %1996 = vmatpush1.msra.mxu0 0.0
    %1997 = vmatprep.subr.mxu0 0.0
    %1998 = vmatpush1.msra.mxu0 0.0
    %1999 = vmatprep.subr.mxu0 0.0
    %2000 = vmatpush1.msra.mxu0 0.0
    %2001 = vmatprep.subr.mxu0 0.0
    %2002 = vmatpush1.msra.mxu0 0.0
    %2003 = vmatprep.subr.mxu0 0.0
    %2004 = vmatpush1.msra.mxu0 0.0
    %2005 = vmatprep.subr.mxu0 0.0
    %2006 = vmatpush1.msra.mxu0 0.0
    %2007 = vmatprep.subr.mxu0 0.0
    %2008 = vmatpush1.msra.mxu0 0.0
    %2009 = vmatprep.subr.mxu0 0.0
    %2010 = vmatpush1.msra.mxu0 0.0
    %2011 = vmatprep.subr.mxu0 0.0
    %2012 = vmatpush1.msra.mxu0 0.0
    %2013 = vmatprep.subr.mxu0 0.0
    %2014 = vmatpush1.msra.mxu0 0.0
    %2015 = vmatprep.subr.mxu0 0.0
    %2016 = vmatpush1.msra.mxu0 0.0
    %2017 = vmatprep.mubr.f32.mxu0 0.0
    %2018 = vmatmul.mubr.f32.gmra.mrb[0].mxu0 %v1925
    %v2019 = vpop.f32.mrb[0].mxu0
    %v2020 = vadd.f32 %v1936, %v2019
    %v2021 = vpop.f32.mrb[0].mxu0
    %v2022 = vadd.f32 %v1936, %v2021
    %2023 = vmatprep.mubr.f32.mxu0 0.0
    %2024 = vmatmul.mubr.f32.gmra.mrb[0].mxu0 %v1926
    %v2025 = vpop.f32.mrb[0].mxu0
    %v2026 = vadd.f32 %v1941, %v2025
    %v2027 = vpop.f32.mrb[0].mxu0
    %v2028 = vadd.f32 %v1941, %v2027
    %2029 = vmatprep.mubr.f32.mxu0 0.0
    %2030 = vmatmul.mubr.f32.gmra.mrb[0].mxu0 %v1927
    %v2031 = vpop.f32.mrb[0].mxu0
    %v2032 = vadd.f32 %v1946, %v2031
    %v2033 = vpop.f32.mrb[0].mxu0
    %v2034 = vadd.f32 %v1946, %v2033
    %2035 = vmatprep.mubr.f32.mxu0 0.0
    %2036 = vmatmul.mubr.f32.gmra.mrb[0].mxu0 %v1928
    %v2037 = vpop.f32.mrb[0].mxu0
    %v2038 = vadd.f32 %v1951, %v2037
    %v2039 = vpop.f32.mrb[0].mxu0
    %v2040 = vadd.f32 %v1951, %v2039
    %2041 = vdwg.mxu0
    %2042 = vmatprep.subr.mxu0 %v1416
    %2043 = vmatpush1.msra.mxu0 %v1415
    %2044 = vmatprep.subr.mxu0 %v1448
    %2045 = vmatpush1.msra.mxu0 %v1447
    %2046 = vmatprep.subr.mxu0 %v1480
    %2047 = vmatpush1.msra.mxu0 %v1479
    %2048 = vmatprep.subr.mxu0 %v1512
    %2049 = vmatpush1.msra.mxu0 %v1511
    %2050 = vmatprep.subr.mxu0 %v1544
    %2051 = vmatpush1.msra.mxu0 %v1543
    %2052 = vmatprep.subr.mxu0 %v1576
    %2053 = vmatpush1.msra.mxu0 %v1575
    %2054 = vmatprep.subr.mxu0 %v1608
    %2055 = vmatpush1.msra.mxu0 %v1607
    %2056 = vmatprep.subr.mxu0 %v1640
    %2057 = vmatpush1.msra.mxu0 %v1639
    %2058 = vmatprep.subr.mxu0 %v1672
    %2059 = vmatpush1.msra.mxu0 %v1671
    %2060 = vmatprep.subr.mxu0 %v1704
    %2061 = vmatpush1.msra.mxu0 %v1703
    %2062 = vmatprep.subr.mxu0 %v1736
    %2063 = vmatpush1.msra.mxu0 %v1735
    %2064 = vmatprep.subr.mxu0 %v1768
    %2065 = vmatpush1.msra.mxu0 %v1767
    %2066 = vmatprep.subr.mxu0 %v1800
    %2067 = vmatpush1.msra.mxu0 %v1799
    %2068 = vmatprep.subr.mxu0 %v1832
    %2069 = vmatpush1.msra.mxu0 %v1831
    %2070 = vmatprep.subr.mxu0 %v1864
    %2071 = vmatpush1.msra.mxu0 %v1863
    %2072 = vmatprep.subr.mxu0 %v1896
    %2073 = vmatpush1.msra.mxu0 %v1895
    %2074 = vmatprep.subr.mxu0 0.0
    %2075 = vmatpush1.msra.mxu0 0.0
    %2076 = vmatprep.subr.mxu0 0.0
    %2077 = vmatpush1.msra.mxu0 0.0
    %2078 = vmatprep.subr.mxu0 0.0
    %2079 = vmatpush1.msra.mxu0 0.0
    %2080 = vmatprep.subr.mxu0 0.0
    %2081 = vmatpush1.msra.mxu0 0.0
    %2082 = vmatprep.subr.mxu0 0.0
    %2083 = vmatpush1.msra.mxu0 0.0
    %2084 = vmatprep.subr.mxu0 0.0
    %2085 = vmatpush1.msra.mxu0 0.0
    %2086 = vmatprep.subr.mxu0 0.0
    %2087 = vmatpush1.msra.mxu0 0.0
    %2088 = vmatprep.subr.mxu0 0.0
    %2089 = vmatpush1.msra.mxu0 0.0
    %2090 = vmatprep.subr.mxu0 0.0
    %2091 = vmatpush1.msra.mxu0 0.0
    %2092 = vmatprep.subr.mxu0 0.0
    %2093 = vmatpush1.msra.mxu0 0.0
    %2094 = vmatprep.subr.mxu0 0.0
    %2095 = vmatpush1.msra.mxu0 0.0
    %2096 = vmatprep.subr.mxu0 0.0
    %2097 = vmatpush1.msra.mxu0 0.0
    %2098 = vmatprep.subr.mxu0 0.0
    %2099 = vmatpush1.msra.mxu0 0.0
    %2100 = vmatprep.subr.mxu0 0.0
    %2101 = vmatpush1.msra.mxu0 0.0
    %2102 = vmatprep.subr.mxu0 0.0
    %2103 = vmatpush1.msra.mxu0 0.0
    %2104 = vmatprep.subr.mxu0 0.0
    %2105 = vmatpush1.msra.mxu0 0.0
    %2106 = vmatprep.mubr.f32.mxu0 0.0
    %2107 = vmatmul.mubr.f32.gmra.mrb[0].mxu0 %v1925
    %v2108 = vpop.f32.mrb[0].mxu0
    %v2109 = vadd.f32 %v1936, %v2108
    %v2110 = vpop.f32.mrb[0].mxu0
    %v2111 = vadd.f32 %v1936, %v2110
    %2112 = vmatprep.mubr.f32.mxu0 0.0
    %2113 = vmatmul.mubr.f32.gmra.mrb[0].mxu0 %v1926
    %v2114 = vpop.f32.mrb[0].mxu0
    %v2115 = vadd.f32 %v1941, %v2114
    %v2116 = vpop.f32.mrb[0].mxu0
    %v2117 = vadd.f32 %v1941, %v2116
    %2118 = vmatprep.mubr.f32.mxu0 0.0
    %2119 = vmatmul.mubr.f32.gmra.mrb[0].mxu0 %v1927
    %v2120 = vpop.f32.mrb[0].mxu0
    %v2121 = vadd.f32 %v1946, %v2120
    %v2122 = vpop.f32.mrb[0].mxu0
    %v2123 = vadd.f32 %v1946, %v2122
    %2124 = vmatprep.mubr.f32.mxu0 0.0
    %2125 = vmatmul.mubr.f32.gmra.mrb[0].mxu0 %v1928
    %v2126 = vpop.f32.mrb[0].mxu0
    %v2127 = vadd.f32 %v1951, %v2126
    %v2128 = vpop.f32.mrb[0].mxu0
    %v2129 = vadd.f32 %v1951, %v2128
    %2130 = vdwg.mxu0
    %2131 = vmatprep.subr.mxu0 %v1418
    %2132 = vmatpush1.msra.mxu0 %v1417
    %2133 = vmatprep.subr.mxu0 %v1450
    %2134 = vmatpush1.msra.mxu0 %v1449
    %2135 = vmatprep.subr.mxu0 %v1482
    %2136 = vmatpush1.msra.mxu0 %v1481
    %2137 = vmatprep.subr.mxu0 %v1514
    %2138 = vmatpush1.msra.mxu0 %v1513
    %2139 = vmatprep.subr.mxu0 %v1546
    %2140 = vmatpush1.msra.mxu0 %v1545
    %2141 = vmatprep.subr.mxu0 %v1578
    %2142 = vmatpush1.msra.mxu0 %v1577
    %2143 = vmatprep.subr.mxu0 %v1610
    %2144 = vmatpush1.msra.mxu0 %v1609
    %2145 = vmatprep.subr.mxu0 %v1642
    %2146 = vmatpush1.msra.mxu0 %v1641
    %2147 = vmatprep.subr.mxu0 %v1674
    %2148 = vmatpush1.msra.mxu0 %v1673
    %2149 = vmatprep.subr.mxu0 %v1706
    %2150 = vmatpush1.msra.mxu0 %v1705
    %2151 = vmatprep.subr.mxu0 %v1738
    %2152 = vmatpush1.msra.mxu0 %v1737
    %2153 = vmatprep.subr.mxu0 %v1770
    %2154 = vmatpush1.msra.mxu0 %v1769
    %2155 = vmatprep.subr.mxu0 %v1802
    %2156 = vmatpush1.msra.mxu0 %v1801
    %2157 = vmatprep.subr.mxu0 %v1834
    %2158 = vmatpush1.msra.mxu0 %v1833
    %2159 = vmatprep.subr.mxu0 %v1866
    %2160 = vmatpush1.msra.mxu0 %v1865
    %2161 = vmatprep.subr.mxu0 %v1898
    %2162 = vmatpush1.msra.mxu0 %v1897
    %2163 = vmatprep.subr.mxu0 0.0
    %2164 = vmatpush1.msra.mxu0 0.0
    %2165 = vmatprep.subr.mxu0 0.0
    %2166 = vmatpush1.msra.mxu0 0.0
    %2167 = vmatprep.subr.mxu0 0.0
    %2168 = vmatpush1.msra.mxu0 0.0
    %2169 = vmatprep.subr.mxu0 0.0
    %2170 = vmatpush1.msra.mxu0 0.0
    %2171 = vmatprep.subr.mxu0 0.0
    %2172 = vmatpush1.msra.mxu0 0.0
    %2173 = vmatprep.subr.mxu0 0.0
    %2174 = vmatpush1.msra.mxu0 0.0
    %2175 = vmatprep.subr.mxu0 0.0
    %2176 = vmatpush1.msra.mxu0 0.0
    %2177 = vmatprep.subr.mxu0 0.0
    %2178 = vmatpush1.msra.mxu0 0.0
    %2179 = vmatprep.subr.mxu0 0.0
    %2180 = vmatpush1.msra.mxu0 0.0
    %2181 = vmatprep.subr.mxu0 0.0
    %2182 = vmatpush1.msra.mxu0 0.0
    %2183 = vmatprep.subr.mxu0 0.0
    %2184 = vmatpush1.msra.mxu0 0.0
    %2185 = vmatprep.subr.mxu0 0.0
    %2186 = vmatpush1.msra.mxu0 0.0
    %2187 = vmatprep.subr.mxu0 0.0
    %2188 = vmatpush1.msra.mxu0 0.0
    %2189 = vmatprep.subr.mxu0 0.0
    %2190 = vmatpush1.msra.mxu0 0.0
    %2191 = vmatprep.subr.mxu0 0.0
    %2192 = vmatpush1.msra.mxu0 0.0
    %2193 = vmatprep.subr.mxu0 0.0
    %2194 = vmatpush1.msra.mxu0 0.0
    %2195 = vmatprep.mubr.f32.mxu0 0.0
    %2196 = vmatmul.mubr.f32.gmra.mrb[0].mxu0 %v1925
    %v2197 = vpop.f32.mrb[0].mxu0
    %v2198 = vadd.f32 %v1936, %v2197
    %v2199 = vpop.f32.mrb[0].mxu0
    %v2200 = vadd.f32 %v1936, %v2199
    %2201 = vmatprep.mubr.f32.mxu0 0.0
    %2202 = vmatmul.mubr.f32.gmra.mrb[0].mxu0 %v1926
    %v2203 = vpop.f32.mrb[0].mxu0
    %v2204 = vadd.f32 %v1941, %v2203
    %v2205 = vpop.f32.mrb[0].mxu0
    %v2206 = vadd.f32 %v1941, %v2205
    %2207 = vmatprep.mubr.f32.mxu0 0.0
    %2208 = vmatmul.mubr.f32.gmra.mrb[0].mxu0 %v1927
    %v2209 = vpop.f32.mrb[0].mxu0
    %v2210 = vadd.f32 %v1946, %v2209
    %v2211 = vpop.f32.mrb[0].mxu0
    %v2212 = vadd.f32 %v1946, %v2211
    %2213 = vmatprep.mubr.f32.mxu0 0.0
    %2214 = vmatmul.mubr.f32.gmra.mrb[0].mxu0 %v1928
    %v2215 = vpop.f32.mrb[0].mxu0
    %v2216 = vadd.f32 %v1951, %v2215
    %v2217 = vpop.f32.mrb[0].mxu0
    %v2218 = vadd.f32 %v1951, %v2217
    %2219 = vdwg.mxu0
    %2220 = vmatprep.subr.mxu0 %v1420
    %2221 = vmatpush1.msra.mxu0 %v1419
    %2222 = vmatprep.subr.mxu0 %v1452
    %2223 = vmatpush1.msra.mxu0 %v1451
    %2224 = vmatprep.subr.mxu0 %v1484
    %2225 = vmatpush1.msra.mxu0 %v1483
    %2226 = vmatprep.subr.mxu0 %v1516
    %2227 = vmatpush1.msra.mxu0 %v1515
    %2228 = vmatprep.subr.mxu0 %v1548
    %2229 = vmatpush1.msra.mxu0 %v1547
    %2230 = vmatprep.subr.mxu0 %v1580
    %2231 = vmatpush1.msra.mxu0 %v1579
    %2232 = vmatprep.subr.mxu0 %v1612
    %2233 = vmatpush1.msra.mxu0 %v1611
    %2234 = vmatprep.subr.mxu0 %v1644
    %2235 = vmatpush1.msra.mxu0 %v1643
    %2236 = vmatprep.subr.mxu0 %v1676
    %2237 = vmatpush1.msra.mxu0 %v1675
    %2238 = vmatprep.subr.mxu0 %v1708
    %2239 = vmatpush1.msra.mxu0 %v1707
    %2240 = vmatprep.subr.mxu0 %v1740
    %2241 = vmatpush1.msra.mxu0 %v1739
    %2242 = vmatprep.subr.mxu0 %v1772
    %2243 = vmatpush1.msra.mxu0 %v1771
    %2244 = vmatprep.subr.mxu0 %v1804
    %2245 = vmatpush1.msra.mxu0 %v1803
    %2246 = vmatprep.subr.mxu0 %v1836
    %2247 = vmatpush1.msra.mxu0 %v1835
    %2248 = vmatprep.subr.mxu0 %v1868
    %2249 = vmatpush1.msra.mxu0 %v1867
    %2250 = vmatprep.subr.mxu0 %v1900
    %2251 = vmatpush1.msra.mxu0 %v1899
    %2252 = vmatprep.subr.mxu0 0.0
    %2253 = vmatpush1.msra.mxu0 0.0
    %2254 = vmatprep.subr.mxu0 0.0
    %2255 = vmatpush1.msra.mxu0 0.0
    %2256 = vmatprep.subr.mxu0 0.0
    %2257 = vmatpush1.msra.mxu0 0.0
    %2258 = vmatprep.subr.mxu0 0.0
    %2259 = vmatpush1.msra.mxu0 0.0
    %2260 = vmatprep.subr.mxu0 0.0
    %2261 = vmatpush1.msra.mxu0 0.0
    %2262 = vmatprep.subr.mxu0 0.0
    %2263 = vmatpush1.msra.mxu0 0.0
    %2264 = vmatprep.subr.mxu0 0.0
    %2265 = vmatpush1.msra.mxu0 0.0
    %2266 = vmatprep.subr.mxu0 0.0
    %2267 = vmatpush1.msra.mxu0 0.0
    %2268 = vmatprep.subr.mxu0 0.0
    %2269 = vmatpush1.msra.mxu0 0.0
    %2270 = vmatprep.subr.mxu0 0.0
    %2271 = vmatpush1.msra.mxu0 0.0
    %2272 = vmatprep.subr.mxu0 0.0
    %2273 = vmatpush1.msra.mxu0 0.0
    %2274 = vmatprep.subr.mxu0 0.0
    %2275 = vmatpush1.msra.mxu0 0.0
    %2276 = vmatprep.subr.mxu0 0.0
    %2277 = vmatpush1.msra.mxu0 0.0
    %2278 = vmatprep.subr.mxu0 0.0
    %2279 = vmatpush1.msra.mxu0 0.0
    %2280 = vmatprep.subr.mxu0 0.0
    %2281 = vmatpush1.msra.mxu0 0.0
    %2282 = vmatprep.subr.mxu0 0.0
    %2283 = vmatpush1.msra.mxu0 0.0
    %2284 = vmatprep.mubr.f32.mxu0 0.0
    %2285 = vmatmul.mubr.f32.gmra.mrb[0].mxu0 %v1925
    %v2286 = vpop.f32.mrb[0].mxu0
    %v2287 = vadd.f32 %v1936, %v2286
    %v2288 = vpop.f32.mrb[0].mxu0
    %v2289 = vadd.f32 %v1936, %v2288
    %2290 = vmatprep.mubr.f32.mxu0 0.0
    %2291 = vmatmul.mubr.f32.gmra.mrb[0].mxu0 %v1926
    %v2292 = vpop.f32.mrb[0].mxu0
    %v2293 = vadd.f32 %v1941, %v2292
    %v2294 = vpop.f32.mrb[0].mxu0
    %v2295 = vadd.f32 %v1941, %v2294
    %2296 = vmatprep.mubr.f32.mxu0 0.0
    %2297 = vmatmul.mubr.f32.gmra.mrb[0].mxu0 %v1927
    %v2298 = vpop.f32.mrb[0].mxu0
    %v2299 = vadd.f32 %v1946, %v2298
    %v2300 = vpop.f32.mrb[0].mxu0
    %v2301 = vadd.f32 %v1946, %v2300
    %2302 = vmatprep.mubr.f32.mxu0 0.0
    %2303 = vmatmul.mubr.f32.gmra.mrb[0].mxu0 %v1928
    %v2304 = vpop.f32.mrb[0].mxu0
    %v2305 = vadd.f32 %v1951, %v2304
    %v2306 = vpop.f32.mrb[0].mxu0
    %v2307 = vadd.f32 %v1951, %v2306
    %2308 = vdwg.mxu0
    %2309 = vmatprep.subr.mxu0 %v1422
    %2310 = vmatpush1.msra.mxu0 %v1421
    %2311 = vmatprep.subr.mxu0 %v1454
    %2312 = vmatpush1.msra.mxu0 %v1453
    %2313 = vmatprep.subr.mxu0 %v1486
    %2314 = vmatpush1.msra.mxu0 %v1485
    %2315 = vmatprep.subr.mxu0 %v1518
    %2316 = vmatpush1.msra.mxu0 %v1517
    %2317 = vmatprep.subr.mxu0 %v1550
    %2318 = vmatpush1.msra.mxu0 %v1549
    %2319 = vmatprep.subr.mxu0 %v1582
    %2320 = vmatpush1.msra.mxu0 %v1581
    %2321 = vmatprep.subr.mxu0 %v1614
    %2322 = vmatpush1.msra.mxu0 %v1613
    %2323 = vmatprep.subr.mxu0 %v1646
    %2324 = vmatpush1.msra.mxu0 %v1645
    %2325 = vmatprep.subr.mxu0 %v1678
    %2326 = vmatpush1.msra.mxu0 %v1677
    %2327 = vmatprep.subr.mxu0 %v1710
    %2328 = vmatpush1.msra.mxu0 %v1709
    %2329 = vmatprep.subr.mxu0 %v1742
    %2330 = vmatpush1.msra.mxu0 %v1741
    %2331 = vmatprep.subr.mxu0 %v1774
    %2332 = vmatpush1.msra.mxu0 %v1773
    %2333 = vmatprep.subr.mxu0 %v1806
    %2334 = vmatpush1.msra.mxu0 %v1805
    %2335 = vmatprep.subr.mxu0 %v1838
    %2336 = vmatpush1.msra.mxu0 %v1837
    %2337 = vmatprep.subr.mxu0 %v1870
    %2338 = vmatpush1.msra.mxu0 %v1869
    %2339 = vmatprep.subr.mxu0 %v1902
    %2340 = vmatpush1.msra.mxu0 %v1901
    %2341 = vmatprep.subr.mxu0 0.0
    %2342 = vmatpush1.msra.mxu0 0.0
    %2343 = vmatprep.subr.mxu0 0.0
    %2344 = vmatpush1.msra.mxu0 0.0
    %2345 = vmatprep.subr.mxu0 0.0
    %2346 = vmatpush1.msra.mxu0 0.0
    %2347 = vmatprep.subr.mxu0 0.0
    %2348 = vmatpush1.msra.mxu0 0.0
    %2349 = vmatprep.subr.mxu0 0.0
    %2350 = vmatpush1.msra.mxu0 0.0
    %2351 = vmatprep.subr.mxu0 0.0
    %2352 = vmatpush1.msra.mxu0 0.0
    %2353 = vmatprep.subr.mxu0 0.0
    %2354 = vmatpush1.msra.mxu0 0.0
    %2355 = vmatprep.subr.mxu0 0.0
    %2356 = vmatpush1.msra.mxu0 0.0
    %2357 = vmatprep.subr.mxu0 0.0
    %2358 = vmatpush1.msra.mxu0 0.0
    %2359 = vmatprep.subr.mxu0 0.0
    %2360 = vmatpush1.msra.mxu0 0.0
    %2361 = vmatprep.subr.mxu0 0.0
    %2362 = vmatpush1.msra.mxu0 0.0
    %2363 = vmatprep.subr.mxu0 0.0
    %2364 = vmatpush1.msra.mxu0 0.0
    %2365 = vmatprep.subr.mxu0 0.0
    %2366 = vmatpush1.msra.mxu0 0.0
    %2367 = vmatprep.subr.mxu0 0.0
    %2368 = vmatpush1.msra.mxu0 0.0
    %2369 = vmatprep.subr.mxu0 0.0
    %2370 = vmatpush1.msra.mxu0 0.0
    %2371 = vmatprep.subr.mxu0 0.0
    %2372 = vmatpush1.msra.mxu0 0.0
    %2373 = vmatprep.mubr.f32.mxu0 0.0
    %2374 = vmatmul.mubr.f32.gmra.mrb[0].mxu0 %v1925
    %v2375 = vpop.f32.mrb[0].mxu0
    %v2376 = vadd.f32 %v1936, %v2375
    %v2377 = vpop.f32.mrb[0].mxu0
    %v2378 = vadd.f32 %v1936, %v2377
    %2379 = vmatprep.mubr.f32.mxu0 0.0
    %2380 = vmatmul.mubr.f32.gmra.mrb[0].mxu0 %v1926
    %v2381 = vpop.f32.mrb[0].mxu0
    %v2382 = vadd.f32 %v1941, %v2381
    %v2383 = vpop.f32.mrb[0].mxu0
    %v2384 = vadd.f32 %v1941, %v2383
    %2385 = vmatprep.mubr.f32.mxu0 0.0
    %2386 = vmatmul.mubr.f32.gmra.mrb[0].mxu0 %v1927
    %v2387 = vpop.f32.mrb[0].mxu0
    %v2388 = vadd.f32 %v1946, %v2387
    %v2389 = vpop.f32.mrb[0].mxu0
    %v2390 = vadd.f32 %v1946, %v2389
    %2391 = vmatprep.mubr.f32.mxu0 0.0
    %2392 = vmatmul.mubr.f32.gmra.mrb[0].mxu0 %v1928
    %v2393 = vpop.f32.mrb[0].mxu0
    %v2394 = vadd.f32 %v1951, %v2393
    %v2395 = vpop.f32.mrb[0].mxu0
    %v2396 = vadd.f32 %v1951, %v2395
    %2397 = vdwg.mxu0
    %2398 = vmatprep.subr.mxu0 %v1424
    %2399 = vmatpush1.msra.mxu0 %v1423
    %2400 = vmatprep.subr.mxu0 %v1456
    %2401 = vmatpush1.msra.mxu0 %v1455
    %2402 = vmatprep.subr.mxu0 %v1488
    %2403 = vmatpush1.msra.mxu0 %v1487
    %2404 = vmatprep.subr.mxu0 %v1520
    %2405 = vmatpush1.msra.mxu0 %v1519
    %2406 = vmatprep.subr.mxu0 %v1552
    %2407 = vmatpush1.msra.mxu0 %v1551
    %2408 = vmatprep.subr.mxu0 %v1584
    %2409 = vmatpush1.msra.mxu0 %v1583
    %2410 = vmatprep.subr.mxu0 %v1616
    %2411 = vmatpush1.msra.mxu0 %v1615
    %2412 = vmatprep.subr.mxu0 %v1648
    %2413 = vmatpush1.msra.mxu0 %v1647
    %2414 = vmatprep.subr.mxu0 %v1680
    %2415 = vmatpush1.msra.mxu0 %v1679
    %2416 = vmatprep.subr.mxu0 %v1712
    %2417 = vmatpush1.msra.mxu0 %v1711
    %2418 = vmatprep.subr.mxu0 %v1744
    %2419 = vmatpush1.msra.mxu0 %v1743
    %2420 = vmatprep.subr.mxu0 %v1776
    %2421 = vmatpush1.msra.mxu0 %v1775
    %2422 = vmatprep.subr.mxu0 %v1808
    %2423 = vmatpush1.msra.mxu0 %v1807
    %2424 = vmatprep.subr.mxu0 %v1840
    %2425 = vmatpush1.msra.mxu0 %v1839
    %2426 = vmatprep.subr.mxu0 %v1872
    %2427 = vmatpush1.msra.mxu0 %v1871
    %2428 = vmatprep.subr.mxu0 %v1904
    %2429 = vmatpush1.msra.mxu0 %v1903
    %2430 = vmatprep.subr.mxu0 0.0
    %2431 = vmatpush1.msra.mxu0 0.0
    %2432 = vmatprep.subr.mxu0 0.0
    %2433 = vmatpush1.msra.mxu0 0.0
    %2434 = vmatprep.subr.mxu0 0.0
    %2435 = vmatpush1.msra.mxu0 0.0
    %2436 = vmatprep.subr.mxu0 0.0
    %2437 = vmatpush1.msra.mxu0 0.0
    %2438 = vmatprep.subr.mxu0 0.0
    %2439 = vmatpush1.msra.mxu0 0.0
    %2440 = vmatprep.subr.mxu0 0.0
    %2441 = vmatpush1.msra.mxu0 0.0
    %2442 = vmatprep.subr.mxu0 0.0
    %2443 = vmatpush1.msra.mxu0 0.0
    %2444 = vmatprep.subr.mxu0 0.0
    %2445 = vmatpush1.msra.mxu0 0.0
    %2446 = vmatprep.subr.mxu0 0.0
    %2447 = vmatpush1.msra.mxu0 0.0
    %2448 = vmatprep.subr.mxu0 0.0
    %2449 = vmatpush1.msra.mxu0 0.0
    %2450 = vmatprep.subr.mxu0 0.0
    %2451 = vmatpush1.msra.mxu0 0.0
    %2452 = vmatprep.subr.mxu0 0.0
    %2453 = vmatpush1.msra.mxu0 0.0
    %2454 = vmatprep.subr.mxu0 0.0
    %2455 = vmatpush1.msra.mxu0 0.0
    %2456 = vmatprep.subr.mxu0 0.0
    %2457 = vmatpush1.msra.mxu0 0.0
    %2458 = vmatprep.subr.mxu0 0.0
    %2459 = vmatpush1.msra.mxu0 0.0
    %2460 = vmatprep.subr.mxu0 0.0
    %2461 = vmatpush1.msra.mxu0 0.0
    %2462 = vmatprep.mubr.f32.mxu0 0.0
    %2463 = vmatmul.mubr.f32.gmra.mrb[0].mxu0 %v1925
    %v2464 = vpop.f32.mrb[0].mxu0
    %v2465 = vadd.f32 %v1936, %v2464
    %v2466 = vpop.f32.mrb[0].mxu0
    %v2467 = vadd.f32 %v1936, %v2466
    %2468 = vmatprep.mubr.f32.mxu0 0.0
    %2469 = vmatmul.mubr.f32.gmra.mrb[0].mxu0 %v1926
    %v2470 = vpop.f32.mrb[0].mxu0
    %v2471 = vadd.f32 %v1941, %v2470
    %v2472 = vpop.f32.mrb[0].mxu0
    %v2473 = vadd.f32 %v1941, %v2472
    %2474 = vmatprep.mubr.f32.mxu0 0.0
    %2475 = vmatmul.mubr.f32.gmra.mrb[0].mxu0 %v1927
    %v2476 = vpop.f32.mrb[0].mxu0
    %v2477 = vadd.f32 %v1946, %v2476
    %v2478 = vpop.f32.mrb[0].mxu0
    %v2479 = vadd.f32 %v1946, %v2478
    %2480 = vmatprep.mubr.f32.mxu0 0.0
    %2481 = vmatmul.mubr.f32.gmra.mrb[0].mxu0 %v1928
    %v2482 = vpop.f32.mrb[0].mxu0
    %v2483 = vadd.f32 %v1951, %v2482
    %v2484 = vpop.f32.mrb[0].mxu0
    %v2485 = vadd.f32 %v1951, %v2484
    %2486 = vdwg.mxu0
    %2487 = vmatprep.subr.mxu0 %v1426
    %2488 = vmatpush1.msra.mxu0 %v1425
    %2489 = vmatprep.subr.mxu0 %v1458
    %2490 = vmatpush1.msra.mxu0 %v1457
    %2491 = vmatprep.subr.mxu0 %v1490
    %2492 = vmatpush1.msra.mxu0 %v1489
    %2493 = vmatprep.subr.mxu0 %v1522
    %2494 = vmatpush1.msra.mxu0 %v1521
    %2495 = vmatprep.subr.mxu0 %v1554
    %2496 = vmatpush1.msra.mxu0 %v1553
    %2497 = vmatprep.subr.mxu0 %v1586
    %2498 = vmatpush1.msra.mxu0 %v1585
    %2499 = vmatprep.subr.mxu0 %v1618
    %2500 = vmatpush1.msra.mxu0 %v1617
    %2501 = vmatprep.subr.mxu0 %v1650
    %2502 = vmatpush1.msra.mxu0 %v1649
    %2503 = vmatprep.subr.mxu0 %v1682
    %2504 = vmatpush1.msra.mxu0 %v1681
    %2505 = vmatprep.subr.mxu0 %v1714
    %2506 = vmatpush1.msra.mxu0 %v1713
    %2507 = vmatprep.subr.mxu0 %v1746
    %2508 = vmatpush1.msra.mxu0 %v1745
    %2509 = vmatprep.subr.mxu0 %v1778
    %2510 = vmatpush1.msra.mxu0 %v1777
    %2511 = vmatprep.subr.mxu0 %v1810
    %2512 = vmatpush1.msra.mxu0 %v1809
    %2513 = vmatprep.subr.mxu0 %v1842
    %2514 = vmatpush1.msra.mxu0 %v1841
    %2515 = vmatprep.subr.mxu0 %v1874
    %2516 = vmatpush1.msra.mxu0 %v1873
    %2517 = vmatprep.subr.mxu0 %v1906
    %2518 = vmatpush1.msra.mxu0 %v1905
    %2519 = vmatprep.subr.mxu0 0.0
    %2520 = vmatpush1.msra.mxu0 0.0
    %2521 = vmatprep.subr.mxu0 0.0
    %2522 = vmatpush1.msra.mxu0 0.0
    %2523 = vmatprep.subr.mxu0 0.0
    %2524 = vmatpush1.msra.mxu0 0.0
    %2525 = vmatprep.subr.mxu0 0.0
    %2526 = vmatpush1.msra.mxu0 0.0
    %2527 = vmatprep.subr.mxu0 0.0
    %2528 = vmatpush1.msra.mxu0 0.0
    %2529 = vmatprep.subr.mxu0 0.0
    %2530 = vmatpush1.msra.mxu0 0.0
    %2531 = vmatprep.subr.mxu0 0.0
    %2532 = vmatpush1.msra.mxu0 0.0
    %2533 = vmatprep.subr.mxu0 0.0
    %2534 = vmatpush1.msra.mxu0 0.0
    %2535 = vmatprep.subr.mxu0 0.0
    %2536 = vmatpush1.msra.mxu0 0.0
    %2537 = vmatprep.subr.mxu0 0.0
    %2538 = vmatpush1.msra.mxu0 0.0
    %2539 = vmatprep.subr.mxu0 0.0
    %2540 = vmatpush1.msra.mxu0 0.0
    %2541 = vmatprep.subr.mxu0 0.0
    %2542 = vmatpush1.msra.mxu0 0.0
    %2543 = vmatprep.subr.mxu0 0.0
    %2544 = vmatpush1.msra.mxu0 0.0
    %2545 = vmatprep.subr.mxu0 0.0
    %2546 = vmatpush1.msra.mxu0 0.0
    %2547 = vmatprep.subr.mxu0 0.0
    %2548 = vmatpush1.msra.mxu0 0.0
    %2549 = vmatprep.subr.mxu0 0.0
    %2550 = vmatpush1.msra.mxu0 0.0
    %2551 = vmatprep.mubr.f32.mxu0 0.0
    %2552 = vmatmul.mubr.f32.gmra.mrb[0].mxu0 %v1925
    %v2553 = vpop.f32.mrb[0].mxu0
    %v2554 = vadd.f32 %v1936, %v2553
    %v2555 = vpop.f32.mrb[0].mxu0
    %v2556 = vadd.f32 %v1936, %v2555
    %2557 = vmatprep.mubr.f32.mxu0 0.0
    %2558 = vmatmul.mubr.f32.gmra.mrb[0].mxu0 %v1926
    %v2559 = vpop.f32.mrb[0].mxu0
    %v2560 = vadd.f32 %v1941, %v2559
    %v2561 = vpop.f32.mrb[0].mxu0
    %v2562 = vadd.f32 %v1941, %v2561
    %2563 = vmatprep.mubr.f32.mxu0 0.0
    %2564 = vmatmul.mubr.f32.gmra.mrb[0].mxu0 %v1927
    %v2565 = vpop.f32.mrb[0].mxu0
    %v2566 = vadd.f32 %v1946, %v2565
    %v2567 = vpop.f32.mrb[0].mxu0
    %v2568 = vadd.f32 %v1946, %v2567
    %2569 = vmatprep.mubr.f32.mxu0 0.0
    %2570 = vmatmul.mubr.f32.gmra.mrb[0].mxu0 %v1928
    %v2571 = vpop.f32.mrb[0].mxu0
    %v2572 = vadd.f32 %v1951, %v2571
    %v2573 = vpop.f32.mrb[0].mxu0
    %v2574 = vadd.f32 %v1951, %v2573
    %2575 = vdwg.mxu0
    %2576 = vmatprep.subr.mxu0 %v1428
    %2577 = vmatpush1.msra.mxu0 %v1427
    %2578 = vmatprep.subr.mxu0 %v1460
    %2579 = vmatpush1.msra.mxu0 %v1459
    %2580 = vmatprep.subr.mxu0 %v1492
    %2581 = vmatpush1.msra.mxu0 %v1491
    %2582 = vmatprep.subr.mxu0 %v1524
    %2583 = vmatpush1.msra.mxu0 %v1523
    %2584 = vmatprep.subr.mxu0 %v1556
    %2585 = vmatpush1.msra.mxu0 %v1555
    %2586 = vmatprep.subr.mxu0 %v1588
    %2587 = vmatpush1.msra.mxu0 %v1587
    %2588 = vmatprep.subr.mxu0 %v1620
    %2589 = vmatpush1.msra.mxu0 %v1619
    %2590 = vmatprep.subr.mxu0 %v1652
    %2591 = vmatpush1.msra.mxu0 %v1651
    %2592 = vmatprep.subr.mxu0 %v1684
    %2593 = vmatpush1.msra.mxu0 %v1683
    %2594 = vmatprep.subr.mxu0 %v1716
    %2595 = vmatpush1.msra.mxu0 %v1715
    %2596 = vmatprep.subr.mxu0 %v1748
    %2597 = vmatpush1.msra.mxu0 %v1747
    %2598 = vmatprep.subr.mxu0 %v1780
    %2599 = vmatpush1.msra.mxu0 %v1779
    %2600 = vmatprep.subr.mxu0 %v1812
    %2601 = vmatpush1.msra.mxu0 %v1811
    %2602 = vmatprep.subr.mxu0 %v1844
    %2603 = vmatpush1.msra.mxu0 %v1843
    %2604 = vmatprep.subr.mxu0 %v1876
    %2605 = vmatpush1.msra.mxu0 %v1875
    %2606 = vmatprep.subr.mxu0 %v1908
    %2607 = vmatpush1.msra.mxu0 %v1907
    %2608 = vmatprep.subr.mxu0 0.0
    %2609 = vmatpush1.msra.mxu0 0.0
    %2610 = vmatprep.subr.mxu0 0.0
    %2611 = vmatpush1.msra.mxu0 0.0
    %2612 = vmatprep.subr.mxu0 0.0
    %2613 = vmatpush1.msra.mxu0 0.0
    %2614 = vmatprep.subr.mxu0 0.0
    %2615 = vmatpush1.msra.mxu0 0.0
    %2616 = vmatprep.subr.mxu0 0.0
    %2617 = vmatpush1.msra.mxu0 0.0
    %2618 = vmatprep.subr.mxu0 0.0
    %2619 = vmatpush1.msra.mxu0 0.0
    %2620 = vmatprep.subr.mxu0 0.0
    %2621 = vmatpush1.msra.mxu0 0.0
    %2622 = vmatprep.subr.mxu0 0.0
    %2623 = vmatpush1.msra.mxu0 0.0
    %2624 = vmatprep.subr.mxu0 0.0
    %2625 = vmatpush1.msra.mxu0 0.0
    %2626 = vmatprep.subr.mxu0 0.0
    %2627 = vmatpush1.msra.mxu0 0.0
    %2628 = vmatprep.subr.mxu0 0.0
    %2629 = vmatpush1.msra.mxu0 0.0
    %2630 = vmatprep.subr.mxu0 0.0
    %2631 = vmatpush1.msra.mxu0 0.0
    %2632 = vmatprep.subr.mxu0 0.0
    %2633 = vmatpush1.msra.mxu0 0.0
    %2634 = vmatprep.subr.mxu0 0.0
    %2635 = vmatpush1.msra.mxu0 0.0
    %2636 = vmatprep.subr.mxu0 0.0
    %2637 = vmatpush1.msra.mxu0 0.0
    %2638 = vmatprep.subr.mxu0 0.0
    %2639 = vmatpush1.msra.mxu0 0.0
    %2640 = vmatprep.mubr.f32.mxu0 0.0
    %2641 = vmatmul.mubr.f32.gmra.mrb[0].mxu0 %v1925
    %v2642 = vpop.f32.mrb[0].mxu0
    %v2643 = vadd.f32 %v1936, %v2642
    %v2644 = vpop.f32.mrb[0].mxu0
    %v2645 = vadd.f32 %v1936, %v2644
    %2646 = vmatprep.mubr.f32.mxu0 0.0
    %2647 = vmatmul.mubr.f32.gmra.mrb[0].mxu0 %v1926
    %v2648 = vpop.f32.mrb[0].mxu0
    %v2649 = vadd.f32 %v1941, %v2648
    %v2650 = vpop.f32.mrb[0].mxu0
    %v2651 = vadd.f32 %v1941, %v2650
    %2652 = vmatprep.mubr.f32.mxu0 0.0
    %2653 = vmatmul.mubr.f32.gmra.mrb[0].mxu0 %v1927
    %v2654 = vpop.f32.mrb[0].mxu0
    %v2655 = vadd.f32 %v1946, %v2654
    %v2656 = vpop.f32.mrb[0].mxu0
    %v2657 = vadd.f32 %v1946, %v2656
    %2658 = vmatprep.mubr.f32.mxu0 0.0
    %2659 = vmatmul.mubr.f32.gmra.mrb[0].mxu0 %v1928
    %v2660 = vpop.f32.mrb[0].mxu0
    %v2661 = vadd.f32 %v1951, %v2660
    %v2662 = vpop.f32.mrb[0].mxu0
    %v2663 = vadd.f32 %v1951, %v2662
    %2664 = vdwg.mxu0
    %2665 = vmatprep.subr.mxu0 %v1430
    %2666 = vmatpush1.msra.mxu0 %v1429
    %2667 = vmatprep.subr.mxu0 %v1462
    %2668 = vmatpush1.msra.mxu0 %v1461
    %2669 = vmatprep.subr.mxu0 %v1494
    %2670 = vmatpush1.msra.mxu0 %v1493
    %2671 = vmatprep.subr.mxu0 %v1526
    %2672 = vmatpush1.msra.mxu0 %v1525
    %2673 = vmatprep.subr.mxu0 %v1558
    %2674 = vmatpush1.msra.mxu0 %v1557
    %2675 = vmatprep.subr.mxu0 %v1590
    %2676 = vmatpush1.msra.mxu0 %v1589
    %2677 = vmatprep.subr.mxu0 %v1622
    %2678 = vmatpush1.msra.mxu0 %v1621
    %2679 = vmatprep.subr.mxu0 %v1654
    %2680 = vmatpush1.msra.mxu0 %v1653
    %2681 = vmatprep.subr.mxu0 %v1686
    %2682 = vmatpush1.msra.mxu0 %v1685
    %2683 = vmatprep.subr.mxu0 %v1718
    %2684 = vmatpush1.msra.mxu0 %v1717
    %2685 = vmatprep.subr.mxu0 %v1750
    %2686 = vmatpush1.msra.mxu0 %v1749
    %2687 = vmatprep.subr.mxu0 %v1782
    %2688 = vmatpush1.msra.mxu0 %v1781
    %2689 = vmatprep.subr.mxu0 %v1814
    %2690 = vmatpush1.msra.mxu0 %v1813
    %2691 = vmatprep.subr.mxu0 %v1846
    %2692 = vmatpush1.msra.mxu0 %v1845
    %2693 = vmatprep.subr.mxu0 %v1878
    %2694 = vmatpush1.msra.mxu0 %v1877
    %2695 = vmatprep.subr.mxu0 %v1910
    %2696 = vmatpush1.msra.mxu0 %v1909
    %2697 = vmatprep.subr.mxu0 0.0
    %2698 = vmatpush1.msra.mxu0 0.0
    %2699 = vmatprep.subr.mxu0 0.0
    %2700 = vmatpush1.msra.mxu0 0.0
    %2701 = vmatprep.subr.mxu0 0.0
    %2702 = vmatpush1.msra.mxu0 0.0
    %2703 = vmatprep.subr.mxu0 0.0
    %2704 = vmatpush1.msra.mxu0 0.0
    %2705 = vmatprep.subr.mxu0 0.0
    %2706 = vmatpush1.msra.mxu0 0.0
    %2707 = vmatprep.subr.mxu0 0.0
    %2708 = vmatpush1.msra.mxu0 0.0
    %2709 = vmatprep.subr.mxu0 0.0
    %2710 = vmatpush1.msra.mxu0 0.0
    %2711 = vmatprep.subr.mxu0 0.0
    %2712 = vmatpush1.msra.mxu0 0.0
    %2713 = vmatprep.subr.mxu0 0.0
    %2714 = vmatpush1.msra.mxu0 0.0
    %2715 = vmatprep.subr.mxu0 0.0
    %2716 = vmatpush1.msra.mxu0 0.0
    %2717 = vmatprep.subr.mxu0 0.0
    %2718 = vmatpush1.msra.mxu0 0.0
    %2719 = vmatprep.subr.mxu0 0.0
    %2720 = vmatpush1.msra.mxu0 0.0
    %2721 = vmatprep.subr.mxu0 0.0
    %2722 = vmatpush1.msra.mxu0 0.0
    %2723 = vmatprep.subr.mxu0 0.0
    %2724 = vmatpush1.msra.mxu0 0.0
    %2725 = vmatprep.subr.mxu0 0.0
    %2726 = vmatpush1.msra.mxu0 0.0
    %2727 = vmatprep.subr.mxu0 0.0
    %2728 = vmatpush1.msra.mxu0 0.0
    %2729 = vmatprep.mubr.f32.mxu0 0.0
    %2730 = vmatmul.mubr.f32.gmra.mrb[0].mxu0 %v1925
    %v2731 = vpop.f32.mrb[0].mxu0
    %v2732 = vadd.f32 %v1936, %v2731
    %v2733 = vpop.f32.mrb[0].mxu0
    %v2734 = vadd.f32 %v1936, %v2733
    %2735 = vmatprep.mubr.f32.mxu0 0.0
    %2736 = vmatmul.mubr.f32.gmra.mrb[0].mxu0 %v1926
    %v2737 = vpop.f32.mrb[0].mxu0
    %v2738 = vadd.f32 %v1941, %v2737
    %v2739 = vpop.f32.mrb[0].mxu0
    %v2740 = vadd.f32 %v1941, %v2739
    %2741 = vmatprep.mubr.f32.mxu0 0.0
    %2742 = vmatmul.mubr.f32.gmra.mrb[0].mxu0 %v1927
    %v2743 = vpop.f32.mrb[0].mxu0
    %v2744 = vadd.f32 %v1946, %v2743
    %v2745 = vpop.f32.mrb[0].mxu0
    %v2746 = vadd.f32 %v1946, %v2745
    %2747 = vmatprep.mubr.f32.mxu0 0.0
    %2748 = vmatmul.mubr.f32.gmra.mrb[0].mxu0 %v1928
    %v2749 = vpop.f32.mrb[0].mxu0
    %v2750 = vadd.f32 %v1951, %v2749
    %v2751 = vpop.f32.mrb[0].mxu0
    %v2752 = vadd.f32 %v1951, %v2751
    %2753 = vdwg.mxu0
    %2754 = vmatprep.subr.mxu0 %v1432
    %2755 = vmatpush1.msra.mxu0 %v1431
    %2756 = vmatprep.subr.mxu0 %v1464
    %2757 = vmatpush1.msra.mxu0 %v1463
    %2758 = vmatprep.subr.mxu0 %v1496
    %2759 = vmatpush1.msra.mxu0 %v1495
    %2760 = vmatprep.subr.mxu0 %v1528
    %2761 = vmatpush1.msra.mxu0 %v1527
    %2762 = vmatprep.subr.mxu0 %v1560
    %2763 = vmatpush1.msra.mxu0 %v1559
    %2764 = vmatprep.subr.mxu0 %v1592
    %2765 = vmatpush1.msra.mxu0 %v1591
    %2766 = vmatprep.subr.mxu0 %v1624
    %2767 = vmatpush1.msra.mxu0 %v1623
    %2768 = vmatprep.subr.mxu0 %v1656
    %2769 = vmatpush1.msra.mxu0 %v1655
    %2770 = vmatprep.subr.mxu0 %v1688
    %2771 = vmatpush1.msra.mxu0 %v1687
    %2772 = vmatprep.subr.mxu0 %v1720
    %2773 = vmatpush1.msra.mxu0 %v1719
    %2774 = vmatprep.subr.mxu0 %v1752
    %2775 = vmatpush1.msra.mxu0 %v1751
    %2776 = vmatprep.subr.mxu0 %v1784
    %2777 = vmatpush1.msra.mxu0 %v1783
    %2778 = vmatprep.subr.mxu0 %v1816
    %2779 = vmatpush1.msra.mxu0 %v1815
    %2780 = vmatprep.subr.mxu0 %v1848
    %2781 = vmatpush1.msra.mxu0 %v1847
    %2782 = vmatprep.subr.mxu0 %v1880
    %2783 = vmatpush1.msra.mxu0 %v1879
    %2784 = vmatprep.subr.mxu0 %v1912
    %2785 = vmatpush1.msra.mxu0 %v1911
    %2786 = vmatprep.subr.mxu0 0.0
    %2787 = vmatpush1.msra.mxu0 0.0
    %2788 = vmatprep.subr.mxu0 0.0
    %2789 = vmatpush1.msra.mxu0 0.0
    %2790 = vmatprep.subr.mxu0 0.0
    %2791 = vmatpush1.msra.mxu0 0.0
    %2792 = vmatprep.subr.mxu0 0.0
    %2793 = vmatpush1.msra.mxu0 0.0
    %2794 = vmatprep.subr.mxu0 0.0
    %2795 = vmatpush1.msra.mxu0 0.0
    %2796 = vmatprep.subr.mxu0 0.0
    %2797 = vmatpush1.msra.mxu0 0.0
    %2798 = vmatprep.subr.mxu0 0.0
    %2799 = vmatpush1.msra.mxu0 0.0
    %2800 = vmatprep.subr.mxu0 0.0
    %2801 = vmatpush1.msra.mxu0 0.0
    %2802 = vmatprep.subr.mxu0 0.0
    %2803 = vmatpush1.msra.mxu0 0.0
    %2804 = vmatprep.subr.mxu0 0.0
    %2805 = vmatpush1.msra.mxu0 0.0
    %2806 = vmatprep.subr.mxu0 0.0
    %2807 = vmatpush1.msra.mxu0 0.0
    %2808 = vmatprep.subr.mxu0 0.0
    %2809 = vmatpush1.msra.mxu0 0.0
    %2810 = vmatprep.subr.mxu0 0.0
    %2811 = vmatpush1.msra.mxu0 0.0
    %2812 = vmatprep.subr.mxu0 0.0
    %2813 = vmatpush1.msra.mxu0 0.0
    %2814 = vmatprep.subr.mxu0 0.0
    %2815 = vmatpush1.msra.mxu0 0.0
    %2816 = vmatprep.subr.mxu0 0.0
    %2817 = vmatpush1.msra.mxu0 0.0
    %2818 = vmatprep.mubr.f32.mxu0 0.0
    %2819 = vmatmul.mubr.f32.gmra.mrb[0].mxu0 %v1925
    %v2820 = vpop.f32.mrb[0].mxu0
    %v2821 = vadd.f32 %v1936, %v2820
    %v2822 = vpop.f32.mrb[0].mxu0
    %v2823 = vadd.f32 %v1936, %v2822
    %2824 = vmatprep.mubr.f32.mxu0 0.0
    %2825 = vmatmul.mubr.f32.gmra.mrb[0].mxu0 %v1926
    %v2826 = vpop.f32.mrb[0].mxu0
    %v2827 = vadd.f32 %v1941, %v2826
    %v2828 = vpop.f32.mrb[0].mxu0
    %v2829 = vadd.f32 %v1941, %v2828
    %2830 = vmatprep.mubr.f32.mxu0 0.0
    %2831 = vmatmul.mubr.f32.gmra.mrb[0].mxu0 %v1927
    %v2832 = vpop.f32.mrb[0].mxu0
    %v2833 = vadd.f32 %v1946, %v2832
    %v2834 = vpop.f32.mrb[0].mxu0
    %v2835 = vadd.f32 %v1946, %v2834
    %2836 = vmatprep.mubr.f32.mxu0 0.0
    %2837 = vmatmul.mubr.f32.gmra.mrb[0].mxu0 %v1928
    %v2838 = vpop.f32.mrb[0].mxu0
    %v2839 = vadd.f32 %v1951, %v2838
    %v2840 = vpop.f32.mrb[0].mxu0
    %v2841 = vadd.f32 %v1951, %v2840
    %2842 = vdwg.mxu0
    %2843 = vmatprep.subr.mxu0 %v1434
    %2844 = vmatpush1.msra.mxu0 %v1433
    %2845 = vmatprep.subr.mxu0 %v1466
    %2846 = vmatpush1.msra.mxu0 %v1465
    %2847 = vmatprep.subr.mxu0 %v1498
    %2848 = vmatpush1.msra.mxu0 %v1497
    %2849 = vmatprep.subr.mxu0 %v1530
    %2850 = vmatpush1.msra.mxu0 %v1529
    %2851 = vmatprep.subr.mxu0 %v1562
    %2852 = vmatpush1.msra.mxu0 %v1561
    %2853 = vmatprep.subr.mxu0 %v1594
    %2854 = vmatpush1.msra.mxu0 %v1593
    %2855 = vmatprep.subr.mxu0 %v1626
    %2856 = vmatpush1.msra.mxu0 %v1625
    %2857 = vmatprep.subr.mxu0 %v1658
    %2858 = vmatpush1.msra.mxu0 %v1657
    %2859 = vmatprep.subr.mxu0 %v1690
    %2860 = vmatpush1.msra.mxu0 %v1689
    %2861 = vmatprep.subr.mxu0 %v1722
    %2862 = vmatpush1.msra.mxu0 %v1721
    %2863 = vmatprep.subr.mxu0 %v1754
    %2864 = vmatpush1.msra.mxu0 %v1753
    %2865 = vmatprep.subr.mxu0 %v1786
    %2866 = vmatpush1.msra.mxu0 %v1785
    %2867 = vmatprep.subr.mxu0 %v1818
    %2868 = vmatpush1.msra.mxu0 %v1817
    %2869 = vmatprep.subr.mxu0 %v1850
    %2870 = vmatpush1.msra.mxu0 %v1849
    %2871 = vmatprep.subr.mxu0 %v1882
    %2872 = vmatpush1.msra.mxu0 %v1881
    %2873 = vmatprep.subr.mxu0 %v1914
    %2874 = vmatpush1.msra.mxu0 %v1913
    %2875 = vmatprep.subr.mxu0 0.0
    %2876 = vmatpush1.msra.mxu0 0.0
    %2877 = vmatprep.subr.mxu0 0.0
    %2878 = vmatpush1.msra.mxu0 0.0
    %2879 = vmatprep.subr.mxu0 0.0
    %2880 = vmatpush1.msra.mxu0 0.0
    %2881 = vmatprep.subr.mxu0 0.0
    %2882 = vmatpush1.msra.mxu0 0.0
    %2883 = vmatprep.subr.mxu0 0.0
    %2884 = vmatpush1.msra.mxu0 0.0
    %2885 = vmatprep.subr.mxu0 0.0
    %2886 = vmatpush1.msra.mxu0 0.0
    %2887 = vmatprep.subr.mxu0 0.0
    %2888 = vmatpush1.msra.mxu0 0.0
    %2889 = vmatprep.subr.mxu0 0.0
    %2890 = vmatpush1.msra.mxu0 0.0
    %2891 = vmatprep.subr.mxu0 0.0
    %2892 = vmatpush1.msra.mxu0 0.0
    %2893 = vmatprep.subr.mxu0 0.0
    %2894 = vmatpush1.msra.mxu0 0.0
    %2895 = vmatprep.subr.mxu0 0.0
    %2896 = vmatpush1.msra.mxu0 0.0
    %2897 = vmatprep.subr.mxu0 0.0
    %2898 = vmatpush1.msra.mxu0 0.0
    %2899 = vmatprep.subr.mxu0 0.0
    %2900 = vmatpush1.msra.mxu0 0.0
    %2901 = vmatprep.subr.mxu0 0.0
    %2902 = vmatpush1.msra.mxu0 0.0
    %2903 = vmatprep.subr.mxu0 0.0
    %2904 = vmatpush1.msra.mxu0 0.0
    %2905 = vmatprep.subr.mxu0 0.0
    %2906 = vmatpush1.msra.mxu0 0.0
    %2907 = vmatprep.mubr.f32.mxu0 0.0
    %2908 = vmatmul.mubr.f32.gmra.mrb[0].mxu0 %v1925
    %v2909 = vpop.f32.mrb[0].mxu0
    %v2910 = vadd.f32 %v1936, %v2909
    %v2911 = vpop.f32.mrb[0].mxu0
    %v2912 = vadd.f32 %v1936, %v2911
    %2913 = vmatprep.mubr.f32.mxu0 0.0
    %2914 = vmatmul.mubr.f32.gmra.mrb[0].mxu0 %v1926
    %v2915 = vpop.f32.mrb[0].mxu0
    %v2916 = vadd.f32 %v1941, %v2915
    %v2917 = vpop.f32.mrb[0].mxu0
    %v2918 = vadd.f32 %v1941, %v2917
    %2919 = vmatprep.mubr.f32.mxu0 0.0
    %2920 = vmatmul.mubr.f32.gmra.mrb[0].mxu0 %v1927
    %v2921 = vpop.f32.mrb[0].mxu0
    %v2922 = vadd.f32 %v1946, %v2921
    %v2923 = vpop.f32.mrb[0].mxu0
    %v2924 = vadd.f32 %v1946, %v2923
    %2925 = vmatprep.mubr.f32.mxu0 0.0
    %2926 = vmatmul.mubr.f32.gmra.mrb[0].mxu0 %v1928
    %v2927 = vpop.f32.mrb[0].mxu0
    %v2928 = vadd.f32 %v1951, %v2927
    %v2929 = vpop.f32.mrb[0].mxu0
    %v2930 = vadd.f32 %v1951, %v2929
    %2931 = vdwg.mxu0
    %2932 = vmatprep.subr.mxu0 %v1436
    %2933 = vmatpush1.msra.mxu0 %v1435
    %2934 = vmatprep.subr.mxu0 %v1468
    %2935 = vmatpush1.msra.mxu0 %v1467
    %2936 = vmatprep.subr.mxu0 %v1500
    %2937 = vmatpush1.msra.mxu0 %v1499
    %2938 = vmatprep.subr.mxu0 %v1532
    %2939 = vmatpush1.msra.mxu0 %v1531
    %2940 = vmatprep.subr.mxu0 %v1564
    %2941 = vmatpush1.msra.mxu0 %v1563
    %2942 = vmatprep.subr.mxu0 %v1596
    %2943 = vmatpush1.msra.mxu0 %v1595
    %2944 = vmatprep.subr.mxu0 %v1628
    %2945 = vmatpush1.msra.mxu0 %v1627
    %2946 = vmatprep.subr.mxu0 %v1660
    %2947 = vmatpush1.msra.mxu0 %v1659
    %2948 = vmatprep.subr.mxu0 %v1692
    %2949 = vmatpush1.msra.mxu0 %v1691
    %2950 = vmatprep.subr.mxu0 %v1724
    %2951 = vmatpush1.msra.mxu0 %v1723
    %2952 = vmatprep.subr.mxu0 %v1756
    %2953 = vmatpush1.msra.mxu0 %v1755
    %2954 = vmatprep.subr.mxu0 %v1788
    %2955 = vmatpush1.msra.mxu0 %v1787
    %2956 = vmatprep.subr.mxu0 %v1820
    %2957 = vmatpush1.msra.mxu0 %v1819
    %2958 = vmatprep.subr.mxu0 %v1852
    %2959 = vmatpush1.msra.mxu0 %v1851
    %2960 = vmatprep.subr.mxu0 %v1884
    %2961 = vmatpush1.msra.mxu0 %v1883
    %2962 = vmatprep.subr.mxu0 %v1916
    %2963 = vmatpush1.msra.mxu0 %v1915
    %2964 = vmatprep.subr.mxu0 0.0
    %2965 = vmatpush1.msra.mxu0 0.0
    %2966 = vmatprep.subr.mxu0 0.0
    %2967 = vmatpush1.msra.mxu0 0.0
    %2968 = vmatprep.subr.mxu0 0.0
    %2969 = vmatpush1.msra.mxu0 0.0
    %2970 = vmatprep.subr.mxu0 0.0
    %2971 = vmatpush1.msra.mxu0 0.0
    %2972 = vmatprep.subr.mxu0 0.0
    %2973 = vmatpush1.msra.mxu0 0.0
    %2974 = vmatprep.subr.mxu0 0.0
    %2975 = vmatpush1.msra.mxu0 0.0
    %2976 = vmatprep.subr.mxu0 0.0
    %2977 = vmatpush1.msra.mxu0 0.0
    %2978 = vmatprep.subr.mxu0 0.0
    %2979 = vmatpush1.msra.mxu0 0.0
    %2980 = vmatprep.subr.mxu0 0.0
    %2981 = vmatpush1.msra.mxu0 0.0
    %2982 = vmatprep.subr.mxu0 0.0
    %2983 = vmatpush1.msra.mxu0 0.0
    %2984 = vmatprep.subr.mxu0 0.0
    %2985 = vmatpush1.msra.mxu0 0.0
    %2986 = vmatprep.subr.mxu0 0.0
    %2987 = vmatpush1.msra.mxu0 0.0
    %2988 = vmatprep.subr.mxu0 0.0
    %2989 = vmatpush1.msra.mxu0 0.0
    %2990 = vmatprep.subr.mxu0 0.0
    %2991 = vmatpush1.msra.mxu0 0.0
    %2992 = vmatprep.subr.mxu0 0.0
    %2993 = vmatpush1.msra.mxu0 0.0
    %2994 = vmatprep.subr.mxu0 0.0
    %2995 = vmatpush1.msra.mxu0 0.0
    %2996 = vmatprep.mubr.f32.mxu0 0.0
    %2997 = vmatmul.mubr.f32.gmra.mrb[0].mxu0 %v1925
    %v2998 = vpop.f32.mrb[0].mxu0
    %v2999 = vadd.f32 %v1936, %v2998
    %v3000 = vpop.f32.mrb[0].mxu0
    %v3001 = vadd.f32 %v1936, %v3000
    %3002 = vmatprep.mubr.f32.mxu0 0.0
    %3003 = vmatmul.mubr.f32.gmra.mrb[0].mxu0 %v1926
    %v3004 = vpop.f32.mrb[0].mxu0
    %v3005 = vadd.f32 %v1941, %v3004
    %v3006 = vpop.f32.mrb[0].mxu0
    %v3007 = vadd.f32 %v1941, %v3006
    %3008 = vmatprep.mubr.f32.mxu0 0.0
    %3009 = vmatmul.mubr.f32.gmra.mrb[0].mxu0 %v1927
    %v3010 = vpop.f32.mrb[0].mxu0
    %v3011 = vadd.f32 %v1946, %v3010
    %v3012 = vpop.f32.mrb[0].mxu0
    %v3013 = vadd.f32 %v1946, %v3012
    %3014 = vmatprep.mubr.f32.mxu0 0.0
    %3015 = vmatmul.mubr.f32.gmra.mrb[0].mxu0 %v1928
    %v3016 = vpop.f32.mrb[0].mxu0
    %v3017 = vadd.f32 %v1951, %v3016
    %v3018 = vpop.f32.mrb[0].mxu0
    %v3019 = vadd.f32 %v1951, %v3018
    %3020 = vdwg.mxu0
    %3021 = vmatprep.subr.mxu0 %v1438
    %3022 = vmatpush1.msra.mxu0 %v1437
    %3023 = vmatprep.subr.mxu0 %v1470
    %3024 = vmatpush1.msra.mxu0 %v1469
    %3025 = vmatprep.subr.mxu0 %v1502
    %3026 = vmatpush1.msra.mxu0 %v1501
    %3027 = vmatprep.subr.mxu0 %v1534
    %3028 = vmatpush1.msra.mxu0 %v1533
    %3029 = vmatprep.subr.mxu0 %v1566
    %3030 = vmatpush1.msra.mxu0 %v1565
    %3031 = vmatprep.subr.mxu0 %v1598
    %3032 = vmatpush1.msra.mxu0 %v1597
    %3033 = vmatprep.subr.mxu0 %v1630
    %3034 = vmatpush1.msra.mxu0 %v1629
    %3035 = vmatprep.subr.mxu0 %v1662
    %3036 = vmatpush1.msra.mxu0 %v1661
    %3037 = vmatprep.subr.mxu0 %v1694
    %3038 = vmatpush1.msra.mxu0 %v1693
    %3039 = vmatprep.subr.mxu0 %v1726
    %3040 = vmatpush1.msra.mxu0 %v1725
    %3041 = vmatprep.subr.mxu0 %v1758
    %3042 = vmatpush1.msra.mxu0 %v1757
    %3043 = vmatprep.subr.mxu0 %v1790
    %3044 = vmatpush1.msra.mxu0 %v1789
    %3045 = vmatprep.subr.mxu0 %v1822
    %3046 = vmatpush1.msra.mxu0 %v1821
    %3047 = vmatprep.subr.mxu0 %v1854
    %3048 = vmatpush1.msra.mxu0 %v1853
    %3049 = vmatprep.subr.mxu0 %v1886
    %3050 = vmatpush1.msra.mxu0 %v1885
    %3051 = vmatprep.subr.mxu0 %v1918
    %3052 = vmatpush1.msra.mxu0 %v1917
    %3053 = vmatprep.subr.mxu0 0.0
    %3054 = vmatpush1.msra.mxu0 0.0
    %3055 = vmatprep.subr.mxu0 0.0
    %3056 = vmatpush1.msra.mxu0 0.0
    %3057 = vmatprep.subr.mxu0 0.0
    %3058 = vmatpush1.msra.mxu0 0.0
    %3059 = vmatprep.subr.mxu0 0.0
    %3060 = vmatpush1.msra.mxu0 0.0
    %3061 = vmatprep.subr.mxu0 0.0
    %3062 = vmatpush1.msra.mxu0 0.0
    %3063 = vmatprep.subr.mxu0 0.0
    %3064 = vmatpush1.msra.mxu0 0.0
    %3065 = vmatprep.subr.mxu0 0.0
    %3066 = vmatpush1.msra.mxu0 0.0
    %3067 = vmatprep.subr.mxu0 0.0
    %3068 = vmatpush1.msra.mxu0 0.0
    %3069 = vmatprep.subr.mxu0 0.0
    %3070 = vmatpush1.msra.mxu0 0.0
    %3071 = vmatprep.subr.mxu0 0.0
    %3072 = vmatpush1.msra.mxu0 0.0
    %3073 = vmatprep.subr.mxu0 0.0
    %3074 = vmatpush1.msra.mxu0 0.0
    %3075 = vmatprep.subr.mxu0 0.0
    %3076 = vmatpush1.msra.mxu0 0.0
    %3077 = vmatprep.subr.mxu0 0.0
    %3078 = vmatpush1.msra.mxu0 0.0
    %3079 = vmatprep.subr.mxu0 0.0
    %3080 = vmatpush1.msra.mxu0 0.0
    %3081 = vmatprep.subr.mxu0 0.0
    %3082 = vmatpush1.msra.mxu0 0.0
    %3083 = vmatprep.subr.mxu0 0.0
    %3084 = vmatpush1.msra.mxu0 0.0
    %3085 = vmatprep.mubr.f32.mxu0 0.0
    %3086 = vmatmul.mubr.f32.gmra.mrb[0].mxu0 %v1925
    %v3087 = vpop.f32.mrb[0].mxu0
    %v3088 = vadd.f32 %v1936, %v3087
    %v3089 = vpop.f32.mrb[0].mxu0
    %v3090 = vadd.f32 %v1936, %v3089
    %3091 = vmatprep.mubr.f32.mxu0 0.0
    %3092 = vmatmul.mubr.f32.gmra.mrb[0].mxu0 %v1926
    %v3093 = vpop.f32.mrb[0].mxu0
    %v3094 = vadd.f32 %v1941, %v3093
    %v3095 = vpop.f32.mrb[0].mxu0
    %v3096 = vadd.f32 %v1941, %v3095
    %3097 = vmatprep.mubr.f32.mxu0 0.0
    %3098 = vmatmul.mubr.f32.gmra.mrb[0].mxu0 %v1927
    %v3099 = vpop.f32.mrb[0].mxu0
    %v3100 = vadd.f32 %v1946, %v3099
    %v3101 = vpop.f32.mrb[0].mxu0
    %v3102 = vadd.f32 %v1946, %v3101
    %3103 = vmatprep.mubr.f32.mxu0 0.0
    %3104 = vmatmul.mubr.f32.gmra.mrb[0].mxu0 %v1928
    %v3105 = vpop.f32.mrb[0].mxu0
    %v3106 = vadd.f32 %v1951, %v3105
    %v3107 = vpop.f32.mrb[0].mxu0
    %v3108 = vadd.f32 %v1951, %v3107
    %3109 = vdwg.mxu0
    %3110 = vmatprep.subr.mxu0 %v1440
    %3111 = vmatpush1.msra.mxu0 %v1439
    %3112 = vmatprep.subr.mxu0 %v1472
    %3113 = vmatpush1.msra.mxu0 %v1471
    %3114 = vmatprep.subr.mxu0 %v1504
    %3115 = vmatpush1.msra.mxu0 %v1503
    %3116 = vmatprep.subr.mxu0 %v1536
    %3117 = vmatpush1.msra.mxu0 %v1535
    %3118 = vmatprep.subr.mxu0 %v1568
    %3119 = vmatpush1.msra.mxu0 %v1567
    %3120 = vmatprep.subr.mxu0 %v1600
    %3121 = vmatpush1.msra.mxu0 %v1599
    %3122 = vmatprep.subr.mxu0 %v1632
    %3123 = vmatpush1.msra.mxu0 %v1631
    %3124 = vmatprep.subr.mxu0 %v1664
    %3125 = vmatpush1.msra.mxu0 %v1663
    %3126 = vmatprep.subr.mxu0 %v1696
    %3127 = vmatpush1.msra.mxu0 %v1695
    %3128 = vmatprep.subr.mxu0 %v1728
    %3129 = vmatpush1.msra.mxu0 %v1727
    %3130 = vmatprep.subr.mxu0 %v1760
    %3131 = vmatpush1.msra.mxu0 %v1759
    %3132 = vmatprep.subr.mxu0 %v1792
    %3133 = vmatpush1.msra.mxu0 %v1791
    %3134 = vmatprep.subr.mxu0 %v1824
    %3135 = vmatpush1.msra.mxu0 %v1823
    %3136 = vmatprep.subr.mxu0 %v1856
    %3137 = vmatpush1.msra.mxu0 %v1855
    %3138 = vmatprep.subr.mxu0 %v1888
    %3139 = vmatpush1.msra.mxu0 %v1887
    %3140 = vmatprep.subr.mxu0 %v1920
    %3141 = vmatpush1.msra.mxu0 %v1919
    %3142 = vmatprep.subr.mxu0 0.0
    %3143 = vmatpush1.msra.mxu0 0.0
    %3144 = vmatprep.subr.mxu0 0.0
    %3145 = vmatpush1.msra.mxu0 0.0
    %3146 = vmatprep.subr.mxu0 0.0
    %3147 = vmatpush1.msra.mxu0 0.0
    %3148 = vmatprep.subr.mxu0 0.0
    %3149 = vmatpush1.msra.mxu0 0.0
    %3150 = vmatprep.subr.mxu0 0.0
    %3151 = vmatpush1.msra.mxu0 0.0
    %3152 = vmatprep.subr.mxu0 0.0
    %3153 = vmatpush1.msra.mxu0 0.0
    %3154 = vmatprep.subr.mxu0 0.0
    %3155 = vmatpush1.msra.mxu0 0.0
    %3156 = vmatprep.subr.mxu0 0.0
    %3157 = vmatpush1.msra.mxu0 0.0
    %3158 = vmatprep.subr.mxu0 0.0
    %3159 = vmatpush1.msra.mxu0 0.0
    %3160 = vmatprep.subr.mxu0 0.0
    %3161 = vmatpush1.msra.mxu0 0.0
    %3162 = vmatprep.subr.mxu0 0.0
    %3163 = vmatpush1.msra.mxu0 0.0
    %3164 = vmatprep.subr.mxu0 0.0
    %3165 = vmatpush1.msra.mxu0 0.0
    %3166 = vmatprep.subr.mxu0 0.0
    %3167 = vmatpush1.msra.mxu0 0.0
    %3168 = vmatprep.subr.mxu0 0.0
    %3169 = vmatpush1.msra.mxu0 0.0
    %3170 = vmatprep.subr.mxu0 0.0
    %3171 = vmatpush1.msra.mxu0 0.0
    %3172 = vmatprep.subr.mxu0 0.0
    %3173 = vmatpush1.msra.mxu0 0.0
    %3174 = vmatprep.mubr.f32.mxu0 0.0
    %3175 = vmatmul.mubr.f32.gmra.mrb[0].mxu0 %v1925
    %v3176 = vpop.f32.mrb[0].mxu0
    %v3177 = vadd.f32 %v1936, %v3176
    %v3178 = vpop.f32.mrb[0].mxu0
    %v3179 = vadd.f32 %v1936, %v3178
    %3180 = vmatprep.mubr.f32.mxu0 0.0
    %3181 = vmatmul.mubr.f32.gmra.mrb[0].mxu0 %v1926
    %v3182 = vpop.f32.mrb[0].mxu0
    %v3183 = vadd.f32 %v1941, %v3182
    %v3184 = vpop.f32.mrb[0].mxu0
    %v3185 = vadd.f32 %v1941, %v3184
    %3186 = vmatprep.mubr.f32.mxu0 0.0
    %3187 = vmatmul.mubr.f32.gmra.mrb[0].mxu0 %v1927
    %v3188 = vpop.f32.mrb[0].mxu0
    %v3189 = vadd.f32 %v1946, %v3188
    %v3190 = vpop.f32.mrb[0].mxu0
    %v3191 = vadd.f32 %v1946, %v3190
    %3192 = vmatprep.mubr.f32.mxu0 0.0
    %3193 = vmatmul.mubr.f32.gmra.mrb[0].mxu0 %v1928
    %v3194 = vpop.f32.mrb[0].mxu0
    %v3195 = vadd.f32 %v1951, %v3194
    %v3196 = vpop.f32.mrb[0].mxu0
    %v3197 = vadd.f32 %v1951, %v3196
    %3198 = vdwg.mxu0
    %3199 = vmatprep.subr.mxu0 %v1442
    %3200 = vmatpush1.msra.mxu0 %v1441
    %3201 = vmatprep.subr.mxu0 %v1474
    %3202 = vmatpush1.msra.mxu0 %v1473
    %3203 = vmatprep.subr.mxu0 %v1506
    %3204 = vmatpush1.msra.mxu0 %v1505
    %3205 = vmatprep.subr.mxu0 %v1538
    %3206 = vmatpush1.msra.mxu0 %v1537
    %3207 = vmatprep.subr.mxu0 %v1570
    %3208 = vmatpush1.msra.mxu0 %v1569
    %3209 = vmatprep.subr.mxu0 %v1602
    %3210 = vmatpush1.msra.mxu0 %v1601
    %3211 = vmatprep.subr.mxu0 %v1634
    %3212 = vmatpush1.msra.mxu0 %v1633
    %3213 = vmatprep.subr.mxu0 %v1666
    %3214 = vmatpush1.msra.mxu0 %v1665
    %3215 = vmatprep.subr.mxu0 %v1698
    %3216 = vmatpush1.msra.mxu0 %v1697
    %3217 = vmatprep.subr.mxu0 %v1730
    %3218 = vmatpush1.msra.mxu0 %v1729
    %3219 = vmatprep.subr.mxu0 %v1762
    %3220 = vmatpush1.msra.mxu0 %v1761
    %3221 = vmatprep.subr.mxu0 %v1794
    %3222 = vmatpush1.msra.mxu0 %v1793
    %3223 = vmatprep.subr.mxu0 %v1826
    %3224 = vmatpush1.msra.mxu0 %v1825
    %3225 = vmatprep.subr.mxu0 %v1858
    %3226 = vmatpush1.msra.mxu0 %v1857
    %3227 = vmatprep.subr.mxu0 %v1890
    %3228 = vmatpush1.msra.mxu0 %v1889
    %3229 = vmatprep.subr.mxu0 %v1922
    %3230 = vmatpush1.msra.mxu0 %v1921
    %3231 = vmatprep.subr.mxu0 0.0
    %3232 = vmatpush1.msra.mxu0 0.0
    %3233 = vmatprep.subr.mxu0 0.0
    %3234 = vmatpush1.msra.mxu0 0.0
    %3235 = vmatprep.subr.mxu0 0.0
    %3236 = vmatpush1.msra.mxu0 0.0
    %3237 = vmatprep.subr.mxu0 0.0
    %3238 = vmatpush1.msra.mxu0 0.0
    %3239 = vmatprep.subr.mxu0 0.0
    %3240 = vmatpush1.msra.mxu0 0.0
    %3241 = vmatprep.subr.mxu0 0.0
    %3242 = vmatpush1.msra.mxu0 0.0
    %3243 = vmatprep.subr.mxu0 0.0
    %3244 = vmatpush1.msra.mxu0 0.0
    %3245 = vmatprep.subr.mxu0 0.0
    %3246 = vmatpush1.msra.mxu0 0.0
    %3247 = vmatprep.subr.mxu0 0.0
    %3248 = vmatpush1.msra.mxu0 0.0
    %3249 = vmatprep.subr.mxu0 0.0
    %3250 = vmatpush1.msra.mxu0 0.0
    %3251 = vmatprep.subr.mxu0 0.0
    %3252 = vmatpush1.msra.mxu0 0.0
    %3253 = vmatprep.subr.mxu0 0.0
    %3254 = vmatpush1.msra.mxu0 0.0
    %3255 = vmatprep.subr.mxu0 0.0
    %3256 = vmatpush1.msra.mxu0 0.0
    %3257 = vmatprep.subr.mxu0 0.0
    %3258 = vmatpush1.msra.mxu0 0.0
    %3259 = vmatprep.subr.mxu0 0.0
    %3260 = vmatpush1.msra.mxu0 0.0
    %3261 = vmatprep.subr.mxu0 0.0
    %3262 = vmatpush1.msra.mxu0 0.0
    %3263 = vmatprep.mubr.f32.mxu0 0.0
    %3264 = vmatmul.mubr.f32.gmra.mrb[0].mxu0 %v1925
    %v3265 = vpop.f32.mrb[0].mxu0
    %v3266 = vadd.f32 %v1936, %v3265
    %v3267 = vpop.f32.mrb[0].mxu0
    %v3268 = vadd.f32 %v1936, %v3267
    %3269 = vmatprep.mubr.f32.mxu0 0.0
    %3270 = vmatmul.mubr.f32.gmra.mrb[0].mxu0 %v1926
    %v3271 = vpop.f32.mrb[0].mxu0
    %v3272 = vadd.f32 %v1941, %v3271
    %v3273 = vpop.f32.mrb[0].mxu0
    %v3274 = vadd.f32 %v1941, %v3273
    %3275 = vmatprep.mubr.f32.mxu0 0.0
    %3276 = vmatmul.mubr.f32.gmra.mrb[0].mxu0 %v1927
    %v3277 = vpop.f32.mrb[0].mxu0
    %v3278 = vadd.f32 %v1946, %v3277
    %v3279 = vpop.f32.mrb[0].mxu0
    %v3280 = vadd.f32 %v1946, %v3279
    %3281 = vmatprep.mubr.f32.mxu0 0.0
    %3282 = vmatmul.mubr.f32.gmra.mrb[0].mxu0 %v1928
    %v3283 = vpop.f32.mrb[0].mxu0
    %v3284 = vadd.f32 %v1951, %v3283
    %v3285 = vpop.f32.mrb[0].mxu0
    %v3286 = vadd.f32 %v1951, %v3285
    %3287 = vdwg.mxu0
    %3288 = vmatprep.subr.mxu0 %v1444
    %3289 = vmatpush1.msra.mxu0 %v1443
    %3290 = vmatprep.subr.mxu0 %v1476
    %3291 = vmatpush1.msra.mxu0 %v1475
    %3292 = vmatprep.subr.mxu0 %v1508
    %3293 = vmatpush1.msra.mxu0 %v1507
    %3294 = vmatprep.subr.mxu0 %v1540
    %3295 = vmatpush1.msra.mxu0 %v1539
    %3296 = vmatprep.subr.mxu0 %v1572
    %3297 = vmatpush1.msra.mxu0 %v1571
    %3298 = vmatprep.subr.mxu0 %v1604
    %3299 = vmatpush1.msra.mxu0 %v1603
    %3300 = vmatprep.subr.mxu0 %v1636
    %3301 = vmatpush1.msra.mxu0 %v1635
    %3302 = vmatprep.subr.mxu0 %v1668
    %3303 = vmatpush1.msra.mxu0 %v1667
    %3304 = vmatprep.subr.mxu0 %v1700
    %3305 = vmatpush1.msra.mxu0 %v1699
    %3306 = vmatprep.subr.mxu0 %v1732
    %3307 = vmatpush1.msra.mxu0 %v1731
    %3308 = vmatprep.subr.mxu0 %v1764
    %3309 = vmatpush1.msra.mxu0 %v1763
    %3310 = vmatprep.subr.mxu0 %v1796
    %3311 = vmatpush1.msra.mxu0 %v1795
    %3312 = vmatprep.subr.mxu0 %v1828
    %3313 = vmatpush1.msra.mxu0 %v1827
    %3314 = vmatprep.subr.mxu0 %v1860
    %3315 = vmatpush1.msra.mxu0 %v1859
    %3316 = vmatprep.subr.mxu0 %v1892
    %3317 = vmatpush1.msra.mxu0 %v1891
    %3318 = vmatprep.subr.mxu0 %v1924
    %3319 = vmatpush1.msra.mxu0 %v1923
    %3320 = vmatprep.subr.mxu0 0.0
    %3321 = vmatpush1.msra.mxu0 0.0
    %3322 = vmatprep.subr.mxu0 0.0
    %3323 = vmatpush1.msra.mxu0 0.0
    %3324 = vmatprep.subr.mxu0 0.0
    %3325 = vmatpush1.msra.mxu0 0.0
    %3326 = vmatprep.subr.mxu0 0.0
    %3327 = vmatpush1.msra.mxu0 0.0
    %3328 = vmatprep.subr.mxu0 0.0
    %3329 = vmatpush1.msra.mxu0 0.0
    %3330 = vmatprep.subr.mxu0 0.0
    %3331 = vmatpush1.msra.mxu0 0.0
    %3332 = vmatprep.subr.mxu0 0.0
    %3333 = vmatpush1.msra.mxu0 0.0
    %3334 = vmatprep.subr.mxu0 0.0
    %3335 = vmatpush1.msra.mxu0 0.0
    %3336 = vmatprep.subr.mxu0 0.0
    %3337 = vmatpush1.msra.mxu0 0.0
    %3338 = vmatprep.subr.mxu0 0.0
    %3339 = vmatpush1.msra.mxu0 0.0
    %3340 = vmatprep.subr.mxu0 0.0
    %3341 = vmatpush1.msra.mxu0 0.0
    %3342 = vmatprep.subr.mxu0 0.0
    %3343 = vmatpush1.msra.mxu0 0.0
    %3344 = vmatprep.subr.mxu0 0.0
    %3345 = vmatpush1.msra.mxu0 0.0
    %3346 = vmatprep.subr.mxu0 0.0
    %3347 = vmatpush1.msra.mxu0 0.0
    %3348 = vmatprep.subr.mxu0 0.0
    %3349 = vmatpush1.msra.mxu0 0.0
    %3350 = vmatprep.subr.mxu0 0.0
    %3351 = vmatpush1.msra.mxu0 0.0
    %3352 = vmatprep.mubr.f32.mxu0 0.0
    %3353 = vmatmul.mubr.f32.gmra.mrb[0].mxu0 %v1925
    %v3354 = vpop.f32.mrb[0].mxu0
    %v3355 = vadd.f32 %v1936, %v3354
    %v3356 = vpop.f32.mrb[0].mxu0
    %v3357 = vadd.f32 %v1936, %v3356
    %3358 = vmatprep.mubr.f32.mxu0 0.0
    %3359 = vmatmul.mubr.f32.gmra.mrb[0].mxu0 %v1926
    %v3360 = vpop.f32.mrb[0].mxu0
    %v3361 = vadd.f32 %v1941, %v3360
    %v3362 = vpop.f32.mrb[0].mxu0
    %v3363 = vadd.f32 %v1941, %v3362
    %3364 = vmatprep.mubr.f32.mxu0 0.0
    %3365 = vmatmul.mubr.f32.gmra.mrb[0].mxu0 %v1927
    %v3366 = vpop.f32.mrb[0].mxu0
    %v3367 = vadd.f32 %v1946, %v3366
    %v3368 = vpop.f32.mrb[0].mxu0
    %v3369 = vadd.f32 %v1946, %v3368
    %3370 = vmatprep.mubr.f32.mxu0 0.0
    %3371 = vmatmul.mubr.f32.gmra.mrb[0].mxu0 %v1928
    %v3372 = vpop.f32.mrb[0].mxu0
    %v3373 = vadd.f32 %v1951, %v3372
    %v3374 = vpop.f32.mrb[0].mxu0
    %v3375 = vadd.f32 %v1951, %v3374
    %3376 = vdwg.mxu0
    %v3377 = vmax.f32 %v2020, 0.0
    %v3378 = vmax.f32 %v2022, 0.0
    %v3379 = vmax.f32 %v2109, 0.0
    %v3380 = vmax.f32 %v2111, 0.0
    %v3381 = vmax.f32 %v2198, 0.0
    %v3382 = vmax.f32 %v2200, 0.0
    %v3383 = vmax.f32 %v2287, 0.0
    %v3384 = vmax.f32 %v2289, 0.0
    %v3385 = vmax.f32 %v2376, 0.0
    %v3386 = vmax.f32 %v2378, 0.0
    %v3387 = vmax.f32 %v2465, 0.0
    %v3388 = vmax.f32 %v2467, 0.0
    %v3389 = vmax.f32 %v2554, 0.0
    %v3390 = vmax.f32 %v2556, 0.0
    %v3391 = vmax.f32 %v2643, 0.0
    %v3392 = vmax.f32 %v2645, 0.0
    %v3393 = vmax.f32 %v2732, 0.0
    %v3394 = vmax.f32 %v2734, 0.0
    %v3395 = vmax.f32 %v2821, 0.0
    %v3396 = vmax.f32 %v2823, 0.0
    %v3397 = vmax.f32 %v2910, 0.0
    %v3398 = vmax.f32 %v2912, 0.0
    %v3399 = vmax.f32 %v2999, 0.0
    %v3400 = vmax.f32 %v3001, 0.0
    %v3401 = vmax.f32 %v3088, 0.0
    %v3402 = vmax.f32 %v3090, 0.0
    %v3403 = vmax.f32 %v3177, 0.0
    %v3404 = vmax.f32 %v3179, 0.0
    %v3405 = vmax.f32 %v3266, 0.0
    %v3406 = vmax.f32 %v3268, 0.0
    %v3407 = vmax.f32 %v3355, 0.0
    %v3408 = vmax.f32 %v3357, 0.0
    %v3409 = vmax.f32 %v2026, 0.0
    %v3410 = vmax.f32 %v2028, 0.0
    %v3411 = vmax.f32 %v2115, 0.0
    %v3412 = vmax.f32 %v2117, 0.0
    %v3413 = vmax.f32 %v2204, 0.0
    %v3414 = vmax.f32 %v2206, 0.0
    %v3415 = vmax.f32 %v2293, 0.0
    %v3416 = vmax.f32 %v2295, 0.0
    %v3417 = vmax.f32 %v2382, 0.0
    %v3418 = vmax.f32 %v2384, 0.0
    %v3419 = vmax.f32 %v2471, 0.0
    %v3420 = vmax.f32 %v2473, 0.0
    %v3421 = vmax.f32 %v2560, 0.0
    %v3422 = vmax.f32 %v2562, 0.0
    %v3423 = vmax.f32 %v2649, 0.0
    %v3424 = vmax.f32 %v2651, 0.0
    %v3425 = vmax.f32 %v2738, 0.0
    %v3426 = vmax.f32 %v2740, 0.0
    %v3427 = vmax.f32 %v2827, 0.0
    %v3428 = vmax.f32 %v2829, 0.0
    %v3429 = vmax.f32 %v2916, 0.0
    %v3430 = vmax.f32 %v2918, 0.0
    %v3431 = vmax.f32 %v3005, 0.0
    %v3432 = vmax.f32 %v3007, 0.0
    %v3433 = vmax.f32 %v3094, 0.0
    %v3434 = vmax.f32 %v3096, 0.0
    %v3435 = vmax.f32 %v3183, 0.0
    %v3436 = vmax.f32 %v3185, 0.0
    %v3437 = vmax.f32 %v3272, 0.0
    %v3438 = vmax.f32 %v3274, 0.0
    %v3439 = vmax.f32 %v3361, 0.0
    %v3440 = vmax.f32 %v3363, 0.0
    %v3441 = vmax.f32 %v2032, 0.0
    %v3442 = vmax.f32 %v2034, 0.0
    %v3443 = vmax.f32 %v2121, 0.0
    %v3444 = vmax.f32 %v2123, 0.0
    %v3445 = vmax.f32 %v2210, 0.0
    %v3446 = vmax.f32 %v2212, 0.0
    %v3447 = vmax.f32 %v2299, 0.0
    %v3448 = vmax.f32 %v2301, 0.0
    %v3449 = vmax.f32 %v2388, 0.0
    %v3450 = vmax.f32 %v2390, 0.0
    %v3451 = vmax.f32 %v2477, 0.0
    %v3452 = vmax.f32 %v2479, 0.0
    %v3453 = vmax.f32 %v2566, 0.0
    %v3454 = vmax.f32 %v2568, 0.0
    %v3455 = vmax.f32 %v2655, 0.0
    %v3456 = vmax.f32 %v2657, 0.0
    %v3457 = vmax.f32 %v2744, 0.0
    %v3458 = vmax.f32 %v2746, 0.0
    %v3459 = vmax.f32 %v2833, 0.0
    %v3460 = vmax.f32 %v2835, 0.0
    %v3461 = vmax.f32 %v2922, 0.0
    %v3462 = vmax.f32 %v2924, 0.0
    %v3463 = vmax.f32 %v3011, 0.0
    %v3464 = vmax.f32 %v3013, 0.0
    %v3465 = vmax.f32 %v3100, 0.0
    %v3466 = vmax.f32 %v3102, 0.0
    %v3467 = vmax.f32 %v3189, 0.0
    %v3468 = vmax.f32 %v3191, 0.0
    %v3469 = vmax.f32 %v3278, 0.0
    %v3470 = vmax.f32 %v3280, 0.0
    %v3471 = vmax.f32 %v3367, 0.0
    %v3472 = vmax.f32 %v3369, 0.0
    %v3473 = vmax.f32 %v2038, 0.0
    %v3474 = vmax.f32 %v2040, 0.0
    %v3475 = vmax.f32 %v2127, 0.0
    %v3476 = vmax.f32 %v2129, 0.0
    %v3477 = vmax.f32 %v2216, 0.0
    %v3478 = vmax.f32 %v2218, 0.0
    %v3479 = vmax.f32 %v2305, 0.0
    %v3480 = vmax.f32 %v2307, 0.0
    %v3481 = vmax.f32 %v2394, 0.0
    %v3482 = vmax.f32 %v2396, 0.0
    %v3483 = vmax.f32 %v2483, 0.0
    %v3484 = vmax.f32 %v2485, 0.0
    %v3485 = vmax.f32 %v2572, 0.0
    %v3486 = vmax.f32 %v2574, 0.0
    %v3487 = vmax.f32 %v2661, 0.0
    %v3488 = vmax.f32 %v2663, 0.0
    %v3489 = vmax.f32 %v2750, 0.0
    %v3490 = vmax.f32 %v2752, 0.0
    %v3491 = vmax.f32 %v2839, 0.0
    %v3492 = vmax.f32 %v2841, 0.0
    %v3493 = vmax.f32 %v2928, 0.0
    %v3494 = vmax.f32 %v2930, 0.0
    %v3495 = vmax.f32 %v3017, 0.0
    %v3496 = vmax.f32 %v3019, 0.0
    %v3497 = vmax.f32 %v3106, 0.0
    %v3498 = vmax.f32 %v3108, 0.0
    %v3499 = vmax.f32 %v3195, 0.0
    %v3500 = vmax.f32 %v3197, 0.0
    %v3501 = vmax.f32 %v3284, 0.0
    %v3502 = vmax.f32 %v3286, 0.0
    %v3503 = vmax.f32 %v3373, 0.0
    %v3504 = vmax.f32 %v3375, 0.0
    %v3505 = vld [vmem:[%s5] sm:$0xff]
    %v3506 = vld [vmem:[%s5 + $0x8] sm:$0xff]
    %v3507 = vld [vmem:[%s5 + $0x10] sm:$0xff]
    %v3508 = vld [vmem:[%s5 + $0x18] sm:$0xff]
    %3510 = vset.pattern.permute.xlu0 0
    %3511 = vperm.xlu0 %3510, %v3505
    %v3512 = vpop.permute.xlu0 %3511
    %3515 = vset.pattern.permute.xlu0 0
    %3516 = vperm.xlu0 %3515, %v3506
    %v3517 = vpop.permute.xlu0 %3516
    %3520 = vset.pattern.permute.xlu0 0
    %3521 = vperm.xlu0 %3520, %v3507
    %v3522 = vpop.permute.xlu0 %3521
    %3525 = vset.pattern.permute.xlu0 0
    %3526 = vperm.xlu0 %3525, %v3508
    %v3527 = vpop.permute.xlu0 %3526
    %v3529 = vmul.f32 %v3377, %v3512
    %v3530 = vmul.f32 %v3378, %v3512
    %v3531 = vmul.f32 %v3379, %v3512
    %v3532 = vmul.f32 %v3380, %v3512
    %v3533 = vmul.f32 %v3381, %v3512
    %v3534 = vmul.f32 %v3382, %v3512
    %v3535 = vmul.f32 %v3383, %v3512
    %v3536 = vmul.f32 %v3384, %v3512
    %v3537 = vmul.f32 %v3385, %v3512
    %v3538 = vmul.f32 %v3386, %v3512
    %v3539 = vmul.f32 %v3387, %v3512
    %v3540 = vmul.f32 %v3388, %v3512
    %v3541 = vmul.f32 %v3389, %v3512
    %v3542 = vmul.f32 %v3390, %v3512
    %v3543 = vmul.f32 %v3391, %v3512
    %v3544 = vmul.f32 %v3392, %v3512
    %v3545 = vmul.f32 %v3393, %v3512
    %v3546 = vmul.f32 %v3394, %v3512
    %v3547 = vmul.f32 %v3395, %v3512
    %v3548 = vmul.f32 %v3396, %v3512
    %v3549 = vmul.f32 %v3397, %v3512
    %v3550 = vmul.f32 %v3398, %v3512
    %v3551 = vmul.f32 %v3399, %v3512
    %v3552 = vmul.f32 %v3400, %v3512
    %v3553 = vmul.f32 %v3401, %v3512
    %v3554 = vmul.f32 %v3402, %v3512
    %v3555 = vmul.f32 %v3403, %v3512
    %v3556 = vmul.f32 %v3404, %v3512
    %v3557 = vmul.f32 %v3405, %v3512
    %v3558 = vmul.f32 %v3406, %v3512
    %v3559 = vmul.f32 %v3407, %v3512
    %v3560 = vmul.f32 %v3408, %v3512
    %v3561 = vmul.f32 %v3409, %v3517
    %v3562 = vmul.f32 %v3410, %v3517
    %v3563 = vmul.f32 %v3411, %v3517
    %v3564 = vmul.f32 %v3412, %v3517
    %v3565 = vmul.f32 %v3413, %v3517
    %v3566 = vmul.f32 %v3414, %v3517
    %v3567 = vmul.f32 %v3415, %v3517
    %v3568 = vmul.f32 %v3416, %v3517
    %v3569 = vmul.f32 %v3417, %v3517
    %v3570 = vmul.f32 %v3418, %v3517
    %v3571 = vmul.f32 %v3419, %v3517
    %v3572 = vmul.f32 %v3420, %v3517
    %v3573 = vmul.f32 %v3421, %v3517
    %v3574 = vmul.f32 %v3422, %v3517
    %v3575 = vmul.f32 %v3423, %v3517
    %v3576 = vmul.f32 %v3424, %v3517
    %v3577 = vmul.f32 %v3425, %v3517
    %v3578 = vmul.f32 %v3426, %v3517
    %v3579 = vmul.f32 %v3427, %v3517
    %v3580 = vmul.f32 %v3428, %v3517
    %v3581 = vmul.f32 %v3429, %v3517
    %v3582 = vmul.f32 %v3430, %v3517
    %v3583 = vmul.f32 %v3431, %v3517
    %v3584 = vmul.f32 %v3432, %v3517
    %v3585 = vmul.f32 %v3433, %v3517
    %v3586 = vmul.f32 %v3434, %v3517
    %v3587 = vmul.f32 %v3435, %v3517
    %v3588 = vmul.f32 %v3436, %v3517
    %v3589 = vmul.f32 %v3437, %v3517
    %v3590 = vmul.f32 %v3438, %v3517
    %v3591 = vmul.f32 %v3439, %v3517
    %v3592 = vmul.f32 %v3440, %v3517
    %v3593 = vmul.f32 %v3441, %v3522
    %v3594 = vmul.f32 %v3442, %v3522
    %v3595 = vmul.f32 %v3443, %v3522
    %v3596 = vmul.f32 %v3444, %v3522
    %v3597 = vmul.f32 %v3445, %v3522
    %v3598 = vmul.f32 %v3446, %v3522
    %v3599 = vmul.f32 %v3447, %v3522
    %v3600 = vmul.f32 %v3448, %v3522
    %v3601 = vmul.f32 %v3449, %v3522
    %v3602 = vmul.f32 %v3450, %v3522
    %v3603 = vmul.f32 %v3451, %v3522
    %v3604 = vmul.f32 %v3452, %v3522
    %v3605 = vmul.f32 %v3453, %v3522
    %v3606 = vmul.f32 %v3454, %v3522
    %v3607 = vmul.f32 %v3455, %v3522
    %v3608 = vmul.f32 %v3456, %v3522
    %v3609 = vmul.f32 %v3457, %v3522
    %v3610 = vmul.f32 %v3458, %v3522
    %v3611 = vmul.f32 %v3459, %v3522
    %v3612 = vmul.f32 %v3460, %v3522
    %v3613 = vmul.f32 %v3461, %v3522
    %v3614 = vmul.f32 %v3462, %v3522
    %v3615 = vmul.f32 %v3463, %v3522
    %v3616 = vmul.f32 %v3464, %v3522
    %v3617 = vmul.f32 %v3465, %v3522
    %v3618 = vmul.f32 %v3466, %v3522
    %v3619 = vmul.f32 %v3467, %v3522
    %v3620 = vmul.f32 %v3468, %v3522
    %v3621 = vmul.f32 %v3469, %v3522
    %v3622 = vmul.f32 %v3470, %v3522
    %v3623 = vmul.f32 %v3471, %v3522
    %v3624 = vmul.f32 %v3472, %v3522
    %v3625 = vmul.f32 %v3473, %v3527
    %v3626 = vmul.f32 %v3474, %v3527
    %v3627 = vmul.f32 %v3475, %v3527
    %v3628 = vmul.f32 %v3476, %v3527
    %v3629 = vmul.f32 %v3477, %v3527
    %v3630 = vmul.f32 %v3478, %v3527
    %v3631 = vmul.f32 %v3479, %v3527
    %v3632 = vmul.f32 %v3480, %v3527
    %v3633 = vmul.f32 %v3481, %v3527
    %v3634 = vmul.f32 %v3482, %v3527
    %v3635 = vmul.f32 %v3483, %v3527
    %v3636 = vmul.f32 %v3484, %v3527
    %v3637 = vmul.f32 %v3485, %v3527
    %v3638 = vmul.f32 %v3486, %v3527
    %v3639 = vmul.f32 %v3487, %v3527
    %v3640 = vmul.f32 %v3488, %v3527
    %v3641 = vmul.f32 %v3489, %v3527
    %v3642 = vmul.f32 %v3490, %v3527
    %v3643 = vmul.f32 %v3491, %v3527
    %v3644 = vmul.f32 %v3492, %v3527
    %v3645 = vmul.f32 %v3493, %v3527
    %v3646 = vmul.f32 %v3494, %v3527
    %v3647 = vmul.f32 %v3495, %v3527
    %v3648 = vmul.f32 %v3496, %v3527
    %v3649 = vmul.f32 %v3497, %v3527
    %v3650 = vmul.f32 %v3498, %v3527
    %v3651 = vmul.f32 %v3499, %v3527
    %v3652 = vmul.f32 %v3500, %v3527
    %v3653 = vmul.f32 %v3501, %v3527
    %v3654 = vmul.f32 %v3502, %v3527
    %v3655 = vmul.f32 %v3503, %v3527
    %v3656 = vmul.f32 %v3504, %v3527
    %v3657 = vadd.f32 %v3529, %v3561
    %v3658 = vadd.f32 %v3657, %v3593
    %v3659 = vadd.f32 %v3658, %v3625
    %v3660 = vrot.slane %v3659, 4
    %v3661 = vadd.f32 %v3659, %v3660
    %v3662 = vrot.slane %v3661, 2
    %v3663 = vadd.f32 %v3661, %v3662
    %v3664 = vrot.slane %v3663, 1
    %v3665 = vadd.f32 %v3663, %v3664
    %v3666 = vadd.f32 %v3530, %v3562
    %v3667 = vadd.f32 %v3666, %v3594
    %v3668 = vadd.f32 %v3667, %v3626
    %v3669 = vrot.slane %v3668, 4
    %v3670 = vadd.f32 %v3668, %v3669
    %v3671 = vrot.slane %v3670, 2
    %v3672 = vadd.f32 %v3670, %v3671
    %v3673 = vrot.slane %v3672, 1
    %v3674 = vadd.f32 %v3672, %v3673
    %v3675 = vadd.f32 %v3531, %v3563
    %v3676 = vadd.f32 %v3675, %v3595
    %v3677 = vadd.f32 %v3676, %v3627
    %v3678 = vrot.slane %v3677, 4
    %v3679 = vadd.f32 %v3677, %v3678
    %v3680 = vrot.slane %v3679, 2
    %v3681 = vadd.f32 %v3679, %v3680
    %v3682 = vrot.slane %v3681, 1
    %v3683 = vadd.f32 %v3681, %v3682
    %v3684 = vadd.f32 %v3532, %v3564
    %v3685 = vadd.f32 %v3684, %v3596
    %v3686 = vadd.f32 %v3685, %v3628
    %v3687 = vrot.slane %v3686, 4
    %v3688 = vadd.f32 %v3686, %v3687
    %v3689 = vrot.slane %v3688, 2
    %v3690 = vadd.f32 %v3688, %v3689
    %v3691 = vrot.slane %v3690, 1
    %v3692 = vadd.f32 %v3690, %v3691
    %v3693 = vadd.f32 %v3533, %v3565
    %v3694 = vadd.f32 %v3693, %v3597
    %v3695 = vadd.f32 %v3694, %v3629
    %v3696 = vrot.slane %v3695, 4
    %v3697 = vadd.f32 %v3695, %v3696
    %v3698 = vrot.slane %v3697, 2
    %v3699 = vadd.f32 %v3697, %v3698
    %v3700 = vrot.slane %v3699, 1
    %v3701 = vadd.f32 %v3699, %v3700
    %v3702 = vadd.f32 %v3534, %v3566
    %v3703 = vadd.f32 %v3702, %v3598
    %v3704 = vadd.f32 %v3703, %v3630
    %v3705 = vrot.slane %v3704, 4
    %v3706 = vadd.f32 %v3704, %v3705
    %v3707 = vrot.slane %v3706, 2
    %v3708 = vadd.f32 %v3706, %v3707
    %v3709 = vrot.slane %v3708, 1
    %v3710 = vadd.f32 %v3708, %v3709
    %v3711 = vadd.f32 %v3535, %v3567
    %v3712 = vadd.f32 %v3711, %v3599
    %v3713 = vadd.f32 %v3712, %v3631
    %v3714 = vrot.slane %v3713, 4
    %v3715 = vadd.f32 %v3713, %v3714
    %v3716 = vrot.slane %v3715, 2
    %v3717 = vadd.f32 %v3715, %v3716
    %v3718 = vrot.slane %v3717, 1
    %v3719 = vadd.f32 %v3717, %v3718
    %v3720 = vadd.f32 %v3536, %v3568
    %v3721 = vadd.f32 %v3720, %v3600
    %v3722 = vadd.f32 %v3721, %v3632
    %v3723 = vrot.slane %v3722, 4
    %v3724 = vadd.f32 %v3722, %v3723
    %v3725 = vrot.slane %v3724, 2
    %v3726 = vadd.f32 %v3724, %v3725
    %v3727 = vrot.slane %v3726, 1
    %v3728 = vadd.f32 %v3726, %v3727
    %v3729 = vadd.f32 %v3537, %v3569
    %v3730 = vadd.f32 %v3729, %v3601
    %v3731 = vadd.f32 %v3730, %v3633
    %v3732 = vrot.slane %v3731, 4
    %v3733 = vadd.f32 %v3731, %v3732
    %v3734 = vrot.slane %v3733, 2
    %v3735 = vadd.f32 %v3733, %v3734
    %v3736 = vrot.slane %v3735, 1
    %v3737 = vadd.f32 %v3735, %v3736
    %v3738 = vadd.f32 %v3538, %v3570
    %v3739 = vadd.f32 %v3738, %v3602
    %v3740 = vadd.f32 %v3739, %v3634
    %v3741 = vrot.slane %v3740, 4
    %v3742 = vadd.f32 %v3740, %v3741
    %v3743 = vrot.slane %v3742, 2
    %v3744 = vadd.f32 %v3742, %v3743
    %v3745 = vrot.slane %v3744, 1
    %v3746 = vadd.f32 %v3744, %v3745
    %v3747 = vadd.f32 %v3539, %v3571
    %v3748 = vadd.f32 %v3747, %v3603
    %v3749 = vadd.f32 %v3748, %v3635
    %v3750 = vrot.slane %v3749, 4
    %v3751 = vadd.f32 %v3749, %v3750
    %v3752 = vrot.slane %v3751, 2
    %v3753 = vadd.f32 %v3751, %v3752
    %v3754 = vrot.slane %v3753, 1
    %v3755 = vadd.f32 %v3753, %v3754
    %v3756 = vadd.f32 %v3540, %v3572
    %v3757 = vadd.f32 %v3756, %v3604
    %v3758 = vadd.f32 %v3757, %v3636
    %v3759 = vrot.slane %v3758, 4
    %v3760 = vadd.f32 %v3758, %v3759
    %v3761 = vrot.slane %v3760, 2
    %v3762 = vadd.f32 %v3760, %v3761
    %v3763 = vrot.slane %v3762, 1
    %v3764 = vadd.f32 %v3762, %v3763
    %v3765 = vadd.f32 %v3541, %v3573
    %v3766 = vadd.f32 %v3765, %v3605
    %v3767 = vadd.f32 %v3766, %v3637
    %v3768 = vrot.slane %v3767, 4
    %v3769 = vadd.f32 %v3767, %v3768
    %v3770 = vrot.slane %v3769, 2
    %v3771 = vadd.f32 %v3769, %v3770
    %v3772 = vrot.slane %v3771, 1
    %v3773 = vadd.f32 %v3771, %v3772
    %v3774 = vadd.f32 %v3542, %v3574
    %v3775 = vadd.f32 %v3774, %v3606
    %v3776 = vadd.f32 %v3775, %v3638
    %v3777 = vrot.slane %v3776, 4
    %v3778 = vadd.f32 %v3776, %v3777
    %v3779 = vrot.slane %v3778, 2
    %v3780 = vadd.f32 %v3778, %v3779
    %v3781 = vrot.slane %v3780, 1
    %v3782 = vadd.f32 %v3780, %v3781
    %v3783 = vadd.f32 %v3543, %v3575
    %v3784 = vadd.f32 %v3783, %v3607
    %v3785 = vadd.f32 %v3784, %v3639
    %v3786 = vrot.slane %v3785, 4
    %v3787 = vadd.f32 %v3785, %v3786
    %v3788 = vrot.slane %v3787, 2
    %v3789 = vadd.f32 %v3787, %v3788
    %v3790 = vrot.slane %v3789, 1
    %v3791 = vadd.f32 %v3789, %v3790
    %v3792 = vadd.f32 %v3544, %v3576
    %v3793 = vadd.f32 %v3792, %v3608
    %v3794 = vadd.f32 %v3793, %v3640
    %v3795 = vrot.slane %v3794, 4
    %v3796 = vadd.f32 %v3794, %v3795
    %v3797 = vrot.slane %v3796, 2
    %v3798 = vadd.f32 %v3796, %v3797
    %v3799 = vrot.slane %v3798, 1
    %v3800 = vadd.f32 %v3798, %v3799
    %v3801 = vadd.f32 %v3545, %v3577
    %v3802 = vadd.f32 %v3801, %v3609
    %v3803 = vadd.f32 %v3802, %v3641
    %v3804 = vrot.slane %v3803, 4
    %v3805 = vadd.f32 %v3803, %v3804
    %v3806 = vrot.slane %v3805, 2
    %v3807 = vadd.f32 %v3805, %v3806
    %v3808 = vrot.slane %v3807, 1
    %v3809 = vadd.f32 %v3807, %v3808
    %v3810 = vadd.f32 %v3546, %v3578
    %v3811 = vadd.f32 %v3810, %v3610
    %v3812 = vadd.f32 %v3811, %v3642
    %v3813 = vrot.slane %v3812, 4
    %v3814 = vadd.f32 %v3812, %v3813
    %v3815 = vrot.slane %v3814, 2
    %v3816 = vadd.f32 %v3814, %v3815
    %v3817 = vrot.slane %v3816, 1
    %v3818 = vadd.f32 %v3816, %v3817
    %v3819 = vadd.f32 %v3547, %v3579
    %v3820 = vadd.f32 %v3819, %v3611
    %v3821 = vadd.f32 %v3820, %v3643
    %v3822 = vrot.slane %v3821, 4
    %v3823 = vadd.f32 %v3821, %v3822
    %v3824 = vrot.slane %v3823, 2
    %v3825 = vadd.f32 %v3823, %v3824
    %v3826 = vrot.slane %v3825, 1
    %v3827 = vadd.f32 %v3825, %v3826
    %v3828 = vadd.f32 %v3548, %v3580
    %v3829 = vadd.f32 %v3828, %v3612
    %v3830 = vadd.f32 %v3829, %v3644
    %v3831 = vrot.slane %v3830, 4
    %v3832 = vadd.f32 %v3830, %v3831
    %v3833 = vrot.slane %v3832, 2
    %v3834 = vadd.f32 %v3832, %v3833
    %v3835 = vrot.slane %v3834, 1
    %v3836 = vadd.f32 %v3834, %v3835
    %v3837 = vadd.f32 %v3549, %v3581
    %v3838 = vadd.f32 %v3837, %v3613
    %v3839 = vadd.f32 %v3838, %v3645
    %v3840 = vrot.slane %v3839, 4
    %v3841 = vadd.f32 %v3839, %v3840
    %v3842 = vrot.slane %v3841, 2
    %v3843 = vadd.f32 %v3841, %v3842
    %v3844 = vrot.slane %v3843, 1
    %v3845 = vadd.f32 %v3843, %v3844
    %v3846 = vadd.f32 %v3550, %v3582
    %v3847 = vadd.f32 %v3846, %v3614
    %v3848 = vadd.f32 %v3847, %v3646
    %v3849 = vrot.slane %v3848, 4
    %v3850 = vadd.f32 %v3848, %v3849
    %v3851 = vrot.slane %v3850, 2
    %v3852 = vadd.f32 %v3850, %v3851
    %v3853 = vrot.slane %v3852, 1
    %v3854 = vadd.f32 %v3852, %v3853
    %v3855 = vadd.f32 %v3551, %v3583
    %v3856 = vadd.f32 %v3855, %v3615
    %v3857 = vadd.f32 %v3856, %v3647
    %v3858 = vrot.slane %v3857, 4
    %v3859 = vadd.f32 %v3857, %v3858
    %v3860 = vrot.slane %v3859, 2
    %v3861 = vadd.f32 %v3859, %v3860
    %v3862 = vrot.slane %v3861, 1
    %v3863 = vadd.f32 %v3861, %v3862
    %v3864 = vadd.f32 %v3552, %v3584
    %v3865 = vadd.f32 %v3864, %v3616
    %v3866 = vadd.f32 %v3865, %v3648
    %v3867 = vrot.slane %v3866, 4
    %v3868 = vadd.f32 %v3866, %v3867
    %v3869 = vrot.slane %v3868, 2
    %v3870 = vadd.f32 %v3868, %v3869
    %v3871 = vrot.slane %v3870, 1
    %v3872 = vadd.f32 %v3870, %v3871
    %v3873 = vadd.f32 %v3553, %v3585
    %v3874 = vadd.f32 %v3873, %v3617
    %v3875 = vadd.f32 %v3874, %v3649
    %v3876 = vrot.slane %v3875, 4
    %v3877 = vadd.f32 %v3875, %v3876
    %v3878 = vrot.slane %v3877, 2
    %v3879 = vadd.f32 %v3877, %v3878
    %v3880 = vrot.slane %v3879, 1
    %v3881 = vadd.f32 %v3879, %v3880
    %v3882 = vadd.f32 %v3554, %v3586
    %v3883 = vadd.f32 %v3882, %v3618
    %v3884 = vadd.f32 %v3883, %v3650
    %v3885 = vrot.slane %v3884, 4
    %v3886 = vadd.f32 %v3884, %v3885
    %v3887 = vrot.slane %v3886, 2
    %v3888 = vadd.f32 %v3886, %v3887
    %v3889 = vrot.slane %v3888, 1
    %v3890 = vadd.f32 %v3888, %v3889
    %v3891 = vadd.f32 %v3555, %v3587
    %v3892 = vadd.f32 %v3891, %v3619
    %v3893 = vadd.f32 %v3892, %v3651
    %v3894 = vrot.slane %v3893, 4
    %v3895 = vadd.f32 %v3893, %v3894
    %v3896 = vrot.slane %v3895, 2
    %v3897 = vadd.f32 %v3895, %v3896
    %v3898 = vrot.slane %v3897, 1
    %v3899 = vadd.f32 %v3897, %v3898
    %v3900 = vadd.f32 %v3556, %v3588
    %v3901 = vadd.f32 %v3900, %v3620
    %v3902 = vadd.f32 %v3901, %v3652
    %v3903 = vrot.slane %v3902, 4
    %v3904 = vadd.f32 %v3902, %v3903
    %v3905 = vrot.slane %v3904, 2
    %v3906 = vadd.f32 %v3904, %v3905
    %v3907 = vrot.slane %v3906, 1
    %v3908 = vadd.f32 %v3906, %v3907
    %v3909 = vadd.f32 %v3557, %v3589
    %v3910 = vadd.f32 %v3909, %v3621
    %v3911 = vadd.f32 %v3910, %v3653
    %v3912 = vrot.slane %v3911, 4
    %v3913 = vadd.f32 %v3911, %v3912
    %v3914 = vrot.slane %v3913, 2
    %v3915 = vadd.f32 %v3913, %v3914
    %v3916 = vrot.slane %v3915, 1
    %v3917 = vadd.f32 %v3915, %v3916
    %v3918 = vadd.f32 %v3558, %v3590
    %v3919 = vadd.f32 %v3918, %v3622
    %v3920 = vadd.f32 %v3919, %v3654
    %v3921 = vrot.slane %v3920, 4
    %v3922 = vadd.f32 %v3920, %v3921
    %v3923 = vrot.slane %v3922, 2
    %v3924 = vadd.f32 %v3922, %v3923
    %v3925 = vrot.slane %v3924, 1
    %v3926 = vadd.f32 %v3924, %v3925
    %v3927 = vadd.f32 %v3559, %v3591
    %v3928 = vadd.f32 %v3927, %v3623
    %v3929 = vadd.f32 %v3928, %v3655
    %v3930 = vrot.slane %v3929, 4
    %v3931 = vadd.f32 %v3929, %v3930
    %v3932 = vrot.slane %v3931, 2
    %v3933 = vadd.f32 %v3931, %v3932
    %v3934 = vrot.slane %v3933, 1
    %v3935 = vadd.f32 %v3933, %v3934
    %v3936 = vadd.f32 %v3560, %v3592
    %v3937 = vadd.f32 %v3936, %v3624
    %v3938 = vadd.f32 %v3937, %v3656
    %v3939 = vrot.slane %v3938, 4
    %v3940 = vadd.f32 %v3938, %v3939
    %v3941 = vrot.slane %v3940, 2
    %v3942 = vadd.f32 %v3940, %v3941
    %v3943 = vrot.slane %v3942, 1
    %v3944 = vadd.f32 %v3942, %v3943
    %v3945 = vld [vmem:[#allocation2] sm:$0x1]
    %3947 = vset.pattern.permute.xlu0 0
    %3948 = vperm.xlu0 %3947, %v3945
    %v3949 = vpop.permute.xlu0 %3948
    %v3951 = vlaneseq
    %v3952 = vshrl.u32 %v3951, 7
    %v3953 = vsub.s32 0, %v3952
    %v3954 = vrot.slane %v3949, %v3953
    %v3955 = vadd.f32 %v3665, %v3954
    %v3956 = vadd.f32 %v3674, %v3954
    %v3957 = vadd.f32 %v3683, %v3954
    %v3958 = vadd.f32 %v3692, %v3954
    %v3959 = vadd.f32 %v3701, %v3954
    %v3960 = vadd.f32 %v3710, %v3954
    %v3961 = vadd.f32 %v3719, %v3954
    %v3962 = vadd.f32 %v3728, %v3954
    %v3963 = vadd.f32 %v3737, %v3954
    %v3964 = vadd.f32 %v3746, %v3954
    %v3965 = vadd.f32 %v3755, %v3954
    %v3966 = vadd.f32 %v3764, %v3954
    %v3967 = vadd.f32 %v3773, %v3954
    %v3968 = vadd.f32 %v3782, %v3954
    %v3969 = vadd.f32 %v3791, %v3954
    %v3970 = vadd.f32 %v3800, %v3954
    %v3971 = vadd.f32 %v3809, %v3954
    %v3972 = vadd.f32 %v3818, %v3954
    %v3973 = vadd.f32 %v3827, %v3954
    %v3974 = vadd.f32 %v3836, %v3954
    %v3975 = vadd.f32 %v3845, %v3954
    %v3976 = vadd.f32 %v3854, %v3954
    %v3977 = vadd.f32 %v3863, %v3954
    %v3978 = vadd.f32 %v3872, %v3954
    %v3979 = vadd.f32 %v3881, %v3954
    %v3980 = vadd.f32 %v3890, %v3954
    %v3981 = vadd.f32 %v3899, %v3954
    %v3982 = vadd.f32 %v3908, %v3954
    %v3983 = vadd.f32 %v3917, %v3954
    %v3984 = vadd.f32 %v3926, %v3954
    %v3985 = vadd.f32 %v3935, %v3954
    %v3986 = vadd.f32 %v3944, %v3954
    %v4019 = vcombine.low %v3955, %v3956
    %v4020 = vcombine.low %v3957, %v3958
    %v4021 = vcombine.low %v3959, %v3960
    %v4022 = vcombine.low %v3961, %v3962
    %v4024 = vunpack.c.l.s4 1966171168
    %v4025 = vunpack.c.0.s8 %v4024
    %v4026 = vlaneseq
    %v4027 = vshrl.u32 %v4026, 7
    %v4028 = vsub.s32 %v4025, %v4027
    %v4029 = vrot.slane %v4019, %v4028
    %v4031 = vunpack.c.l.s4 1966171168
    %v4032 = vunpack.c.0.s8 %v4031
    %v4033 = vlaneseq
    %v4034 = vshrl.u32 %v4033, 7
    %v4035 = vsub.s32 %v4032, %v4034
    %v4036 = vrot.slane %v4020, %v4035
    %v4038 = vunpack.c.l.s4 1966171168
    %v4039 = vunpack.c.0.s8 %v4038
    %v4040 = vlaneseq
    %v4041 = vshrl.u32 %v4040, 7
    %v4042 = vsub.s32 %v4039, %v4041
    %v4043 = vrot.slane %v4021, %v4042
    %v4045 = vunpack.c.l.s4 1966171168
    %v4046 = vunpack.c.0.s8 %v4045
    %v4047 = vlaneseq
    %v4048 = vshrl.u32 %v4047, 7
    %v4049 = vsub.s32 %v4046, %v4048
    %v4050 = vrot.slane %v4022, %v4049
    %v4051 = vcombine.low %v4029, %v4036
    %v4052 = vcombine.low %v4043, %v4050
    %v4054 = vunpack.c.l.s4 1966171168
    %v4055 = vunpack.c.0.s8 %v4054
    %v4056 = vlaneseq
    %v4057 = vshrl.u32 %v4056, 7
    %v4058 = vsub.s32 %v4055, %v4057
    %v4059 = vrot.slane %v4051, %v4058
    %v4061 = vunpack.c.l.s4 1966171168
    %v4062 = vunpack.c.0.s8 %v4061
    %v4063 = vlaneseq
    %v4064 = vshrl.u32 %v4063, 7
    %v4065 = vsub.s32 %v4062, %v4064
    %v4066 = vrot.slane %v4052, %v4065
    %v4067 = vcombine.low %v4059, %v4066
    %v4068 = vcombine.low %v3963, %v3964
    %v4069 = vcombine.low %v3965, %v3966
    %v4070 = vcombine.low %v3967, %v3968
    %v4071 = vcombine.low %v3969, %v3970
    %v4073 = vunpack.c.l.s4 1966171168
    %v4074 = vunpack.c.0.s8 %v4073
    %v4075 = vlaneseq
    %v4076 = vshrl.u32 %v4075, 7
    %v4077 = vsub.s32 %v4074, %v4076
    %v4078 = vrot.slane %v4068, %v4077
    %v4080 = vunpack.c.l.s4 1966171168
    %v4081 = vunpack.c.0.s8 %v4080
    %v4082 = vlaneseq
    %v4083 = vshrl.u32 %v4082, 7
    %v4084 = vsub.s32 %v4081, %v4083
    %v4085 = vrot.slane %v4069, %v4084
    %v4087 = vunpack.c.l.s4 1966171168
    %v4088 = vunpack.c.0.s8 %v4087
    %v4089 = vlaneseq
    %v4090 = vshrl.u32 %v4089, 7
    %v4091 = vsub.s32 %v4088, %v4090
    %v4092 = vrot.slane %v4070, %v4091
    %v4094 = vunpack.c.l.s4 1966171168
    %v4095 = vunpack.c.0.s8 %v4094
    %v4096 = vlaneseq
    %v4097 = vshrl.u32 %v4096, 7
    %v4098 = vsub.s32 %v4095, %v4097
    %v4099 = vrot.slane %v4071, %v4098
    %v4100 = vcombine.low %v4078, %v4085
    %v4101 = vcombine.low %v4092, %v4099
    %v4103 = vunpack.c.l.s4 1966171168
    %v4104 = vunpack.c.0.s8 %v4103
    %v4105 = vlaneseq
    %v4106 = vshrl.u32 %v4105, 7
    %v4107 = vsub.s32 %v4104, %v4106
    %v4108 = vrot.slane %v4100, %v4107
    %v4110 = vunpack.c.l.s4 1966171168
    %v4111 = vunpack.c.0.s8 %v4110
    %v4112 = vlaneseq
    %v4113 = vshrl.u32 %v4112, 7
    %v4114 = vsub.s32 %v4111, %v4113
    %v4115 = vrot.slane %v4101, %v4114
    %v4116 = vcombine.low %v4108, %v4115
    %v4117 = vcombine.low %v3971, %v3972
    %v4118 = vcombine.low %v3973, %v3974
    %v4119 = vcombine.low %v3975, %v3976
    %v4120 = vcombine.low %v3977, %v3978
    %v4122 = vunpack.c.l.s4 1966171168
    %v4123 = vunpack.c.0.s8 %v4122
    %v4124 = vlaneseq
    %v4125 = vshrl.u32 %v4124, 7
    %v4126 = vsub.s32 %v4123, %v4125
    %v4127 = vrot.slane %v4117, %v4126
    %v4129 = vunpack.c.l.s4 1966171168
    %v4130 = vunpack.c.0.s8 %v4129
    %v4131 = vlaneseq
    %v4132 = vshrl.u32 %v4131, 7
    %v4133 = vsub.s32 %v4130, %v4132
    %v4134 = vrot.slane %v4118, %v4133
    %v4136 = vunpack.c.l.s4 1966171168
    %v4137 = vunpack.c.0.s8 %v4136
    %v4138 = vlaneseq
    %v4139 = vshrl.u32 %v4138, 7
    %v4140 = vsub.s32 %v4137, %v4139
    %v4141 = vrot.slane %v4119, %v4140
    %v4143 = vunpack.c.l.s4 1966171168
    %v4144 = vunpack.c.0.s8 %v4143
    %v4145 = vlaneseq
    %v4146 = vshrl.u32 %v4145, 7
    %v4147 = vsub.s32 %v4144, %v4146
    %v4148 = vrot.slane %v4120, %v4147
    %v4149 = vcombine.low %v4127, %v4134
    %v4150 = vcombine.low %v4141, %v4148
    %v4152 = vunpack.c.l.s4 1966171168
    %v4153 = vunpack.c.0.s8 %v4152
    %v4154 = vlaneseq
    %v4155 = vshrl.u32 %v4154, 7
    %v4156 = vsub.s32 %v4153, %v4155
    %v4157 = vrot.slane %v4149, %v4156
    %v4159 = vunpack.c.l.s4 1966171168
    %v4160 = vunpack.c.0.s8 %v4159
    %v4161 = vlaneseq
    %v4162 = vshrl.u32 %v4161, 7
    %v4163 = vsub.s32 %v4160, %v4162
    %v4164 = vrot.slane %v4150, %v4163
    %v4165 = vcombine.low %v4157, %v4164
    %v4166 = vcombine.low %v3979, %v3980
    %v4167 = vcombine.low %v3981, %v3982
    %v4168 = vcombine.low %v3983, %v3984
    %v4169 = vcombine.low %v3985, %v3986
    %v4171 = vunpack.c.l.s4 1966171168
    %v4172 = vunpack.c.0.s8 %v4171
    %v4173 = vlaneseq
    %v4174 = vshrl.u32 %v4173, 7
    %v4175 = vsub.s32 %v4172, %v4174
    %v4176 = vrot.slane %v4166, %v4175
    %v4178 = vunpack.c.l.s4 1966171168
    %v4179 = vunpack.c.0.s8 %v4178
    %v4180 = vlaneseq
    %v4181 = vshrl.u32 %v4180, 7
    %v4182 = vsub.s32 %v4179, %v4181
    %v4183 = vrot.slane %v4167, %v4182
    %v4185 = vunpack.c.l.s4 1966171168
    %v4186 = vunpack.c.0.s8 %v4185
    %v4187 = vlaneseq
    %v4188 = vshrl.u32 %v4187, 7
    %v4189 = vsub.s32 %v4186, %v4188
    %v4190 = vrot.slane %v4168, %v4189
    %v4192 = vunpack.c.l.s4 1966171168
    %v4193 = vunpack.c.0.s8 %v4192
    %v4194 = vlaneseq
    %v4195 = vshrl.u32 %v4194, 7
    %v4196 = vsub.s32 %v4193, %v4195
    %v4197 = vrot.slane %v4169, %v4196
    %v4198 = vcombine.low %v4176, %v4183
    %v4199 = vcombine.low %v4190, %v4197
    %v4201 = vunpack.c.l.s4 1966171168
    %v4202 = vunpack.c.0.s8 %v4201
    %v4203 = vlaneseq
    %v4204 = vshrl.u32 %v4203, 7
    %v4205 = vsub.s32 %v4202, %v4204
    %v4206 = vrot.slane %v4198, %v4205
    %v4208 = vunpack.c.l.s4 1966171168
    %v4209 = vunpack.c.0.s8 %v4208
    %v4210 = vlaneseq
    %v4211 = vshrl.u32 %v4210, 7
    %v4212 = vsub.s32 %v4209, %v4211
    %v4213 = vrot.slane %v4199, %v4212
    %v4214 = vcombine.low %v4206, %v4213
    %4219 = vst [vmem:[#allocation3] sm:$0xff] %v4067
    %4220 = vst [vmem:[#allocation3 + $0x8] sm:$0xff] %v4116
    %4221 = vst [vmem:[#allocation3 + $0x10] sm:$0xff] %v4165
    %4222 = vst [vmem:[#allocation3 + $0x18] sm:$0xff] %v4214
    // Predicated region
    $region30: #{tpu_custom_call.1} parent=1 // pred_check
      _
    $region31: #{tpu_custom_call.1} parent=1 // pred_check_branch
      %4224 = sbr.rel (0) target = $region33
    $region32: #{tpu_custom_call.1} parent=1 // pred_region
      %s4226 = ssub.s32 512, 512
      %4227 = vsyncadd [#allocation4], %s4226
      %s4229 = sshll.u32 [#allocation3], 4
      %s4230 = int_to_ptr.vmem [resolvable:$true] %s4229
      %4232 = dma.vmem_to_hbm [thread:$0]  %s4230, 512, %s7, [#allocation4]
    $region33: #{tpu_custom_call.1} parent=1 // pred_fallthru
      _
    // Predicated region
    $region34: #{tpu_custom_call.1} parent=1 // pred_check
      _
    $region35: #{tpu_custom_call.1} parent=1 // pred_check_branch
      %4234 = sbr.rel (0) target = $region37
    $region36: #{tpu_custom_call.1} parent=1 // pred_region
      %4235 = dma.done [#allocation4], 512
    $region37: #{tpu_custom_call.1} parent=1 // pred_fallthru
      _
    %4236 = vsyncpa [#allocation4], 1

</llo_original>
